<compile_context>
chip_gen: v7x
topology: tpu7x:2x2x1
jax: 0.10.0
libtpu: 0.0.40
codegen_flags: <defaults>
</compile_context>

<pallas_src>
import math
import functools

import jax
import jax.numpy as jnp
from jax import lax
from jax.experimental import pallas as pl

# ----------------------------- config -----------------------------
D_MODEL = 32
D_FF = 64
NUM_HEADS = 4
NUM_LAYERS = 2
MAX_TIME = 8          # sequence length L
P_DIM = 32
BATCH = 2
EPS = 1e-6
NEG_INF = -1e9        # masked_fill value used by the PyTorch module


# ----------------------------- helpers -----------------------------
def _layer_norm(x, gamma, beta):
    # nn.LayerNorm semantics: biased variance over last dim.
    mean = jnp.mean(x, axis=-1, keepdims=True)
    var = jnp.mean(jnp.square(x - mean), axis=-1, keepdims=True)
    return (x - mean) * lax.rsqrt(var + EPS) * gamma + beta


def positional_encoding(max_len, p_dim):
    # pe[pos, i] = sin(pos / 10000^(2i/p_dim)) if i even else cos(...)
    pos = jnp.arange(max_len, dtype=jnp.float32)[:, None]       # (L, 1)
    i = jnp.arange(p_dim, dtype=jnp.float32)[None, :]            # (1, P)
    angle = pos / jnp.power(10000.0, 2.0 * i / p_dim)
    even = (jnp.arange(p_dim)[None, :] % 2) == 0
    return jnp.where(even, jnp.sin(angle), jnp.cos(angle))       # (L, P)


# ----------------------------- fused kernel -----------------------------
def fused_context_encoder_kernel(
    x_ref, bias_ref, linw_ref, pe_ref,
    wq_ref, bq_ref, wk_ref, bk_ref, wv_ref, bv_ref, wo_ref, bo_ref,
    g1_ref, be1_ref, g2_ref, be2_ref,
    w1_ref, bf1_ref, w2_ref, bf2_ref,
    lng_ref, lnb_ref,
    o_ref, *, num_heads, num_layers,
):
    # Input projection: x @ W_x + (PE @ W_pe + b)   (PE part folded in wrapper)
    x = jnp.dot(x_ref[...], linw_ref[...], preferred_element_type=jnp.float32) + pe_ref[...]
    bias = bias_ref[...]                # (N, N) additive bias: block-diag(batch) + key padding
    D = x.shape[-1]
    dk = D // num_heads
    scale = 1.0 / math.sqrt(dk)

    for l in range(num_layers):         # static unroll, all weights resident in VMEM
        # ---- multi-head self-attention sub-layer (pre-LN, residual) ----
        x1 = _layer_norm(x, g1_ref[l], be1_ref[l])
        q = jnp.dot(x1, wq_ref[l], preferred_element_type=jnp.float32) + bq_ref[l]
        k = jnp.dot(x1, wk_ref[l], preferred_element_type=jnp.float32) + bk_ref[l]
        v = jnp.dot(x1, wv_ref[l], preferred_element_type=jnp.float32) + bv_ref[l]
        wo = wo_ref[l]
        acc = jnp.zeros_like(x)
        for h in range(num_heads):      # static unroll; per-head accumulation (no lane concat)
            sl = slice(h * dk, (h + 1) * dk)
            qh, kh, vh = q[:, sl], k[:, sl], v[:, sl]
            # scores = qh @ kh^T without explicit transpose
            scores = lax.dot_general(
                qh, kh, (((1,), (1,)), ((), ())),
                preferred_element_type=jnp.float32) * scale
            scores = scores + bias
            smax = jnp.max(scores, axis=-1, keepdims=True)
            p = jnp.exp(scores - smax)
            p = p * pl.reciprocal(jnp.sum(p, axis=-1, keepdims=True), approx=True)
            hv = jnp.dot(p, vh, preferred_element_type=jnp.float32)          # (N, dk)
            acc = acc + jnp.dot(hv, wo[sl, :], preferred_element_type=jnp.float32)
        x = x + acc + bo_ref[l]         # dropout == identity (eval mode)

        # ---- position-wise feed-forward sub-layer (pre-LN, residual) ----
        x2 = _layer_norm(x, g2_ref[l], be2_ref[l])
        h1 = jnp.maximum(
            jnp.dot(x2, w1_ref[l], preferred_element_type=jnp.float32) + bf1_ref[l], 0.0)
        x = x + jnp.dot(h1, w2_ref[l], preferred_element_type=jnp.float32) + bf2_ref[l]

    # final LayerNormalization
    o_ref[...] = _layer_norm(x, lng_ref[...], lnb_ref[...])


# ----------------------------- wrapper -----------------------------
def context_encoder_forward(x, e_mask, params):
    B, L, D = x.shape
    N = B * L

    # Fold the PE concat into the input linear: concat(x, pe) @ W + b == x@W[:D] + (pe@W[D:] + b)
    pe = positional_encoding(MAX_TIME, P_DIM)[:L]
    pe_proj = pe @ params["lin_w"][D:, :] + params["lin_b"]       # (L, D)
    pe_tiled = jnp.tile(pe_proj, (B, 1))                          # (N, D)
    lin_wx = params["lin_w"][:D, :]                               # (D, D)

    # Additive attention bias: block-diagonal over batch + key-padding mask.
    row_b = jnp.repeat(jnp.arange(B), L)                          # (N,)
    key_keep = e_mask[:, 0, :].reshape(N) > 0.0                   # (N,)
    keep = (row_b[:, None] == row_b[None, :]) & key_keep[None, :]
    bias = jnp.where(keep, 0.0, NEG_INF).astype(jnp.float32)      # (N, N)

    stk = lambda name: jnp.stack([lp[name] for lp in params["layers"]])

    out = pl.pallas_call(
        functools.partial(fused_context_encoder_kernel,
                          num_heads=NUM_HEADS, num_layers=NUM_LAYERS),
        out_shape=jax.ShapeDtypeStruct((N, D), jnp.float32),
    )(
        x.reshape(N, D), bias, lin_wx, pe_tiled,
        stk("wq"), stk("bq"), stk("wk"), stk("bk"),
        stk("wv"), stk("bv"), stk("wo"), stk("bo"),
        stk("g1"), stk("be1"), stk("g2"), stk("be2"),
        stk("w1"), stk("bf1"), stk("w2"), stk("bf2"),
        params["ln_g"], params["ln_b"],
    )
    return out.reshape(B, L, D)


# ----------------------------- params -----------------------------
def init_params(key):
    keys = iter(jax.random.split(key, 128))

    def dense(kin, kout):
        w = jax.random.normal(next(keys), (kin, kout), jnp.float32) * 0.05
        b = jax.random.normal(next(keys), (1, kout), jnp.float32) * 0.05
        return w, b

    lin_w, lin_b = dense(D_MODEL + P_DIM, D_MODEL)
    layers = []
    for _ in range(NUM_LAYERS):
        wq, bq = dense(D_MODEL, D_MODEL)
        wk, bk = dense(D_MODEL, D_MODEL)
        wv, bv = dense(D_MODEL, D_MODEL)
        wo, bo = dense(D_MODEL, D_MODEL)
        w1, bf1 = dense(D_MODEL, D_FF)
        w2, bf2 = dense(D_FF, D_MODEL)
        layers.append(dict(
            wq=wq, bq=bq, wk=wk, bk=bk, wv=wv, bv=bv, wo=wo, bo=bo,
            g1=jnp.ones((1, D_MODEL), jnp.float32), be1=jnp.zeros((1, D_MODEL), jnp.float32),
            g2=jnp.ones((1, D_MODEL), jnp.float32), be2=jnp.zeros((1, D_MODEL), jnp.float32),
            w1=w1, bf1=bf1, w2=w2, bf2=bf2,
        ))
    return dict(
        lin_w=lin_w, lin_b=lin_b, layers=layers,
        ln_g=jnp.ones((1, D_MODEL), jnp.float32), ln_b=jnp.zeros((1, D_MODEL), jnp.float32),
    )


# ----------------------------- plain-JAX reference -----------------------------
def reference_forward(x, e_mask, params):
    B, L, D = x.shape
    pe = positional_encoding(MAX_TIME, P_DIM)[:L]
    x = jnp.concatenate([x, jnp.broadcast_to(pe[None], (B, L, P_DIM))], -1)
    x = x @ params["lin_w"] + params["lin_b"][0]
    dk = D // NUM_HEADS
    for p in params["layers"]:
        x1 = _layer_norm(x, p["g1"][0], p["be1"][0])
        q = (x1 @ p["wq"] + p["bq"][0]).reshape(B, L, NUM_HEADS, dk).transpose(0, 2, 1, 3)
        k = (x1 @ p["wk"] + p["bk"][0]).reshape(B, L, NUM_HEADS, dk).transpose(0, 2, 1, 3)
        v = (x1 @ p["wv"] + p["bv"][0]).reshape(B, L, NUM_HEADS, dk).transpose(0, 2, 1, 3)
        scores = jnp.einsum("bhqd,bhkd->bhqk", q, k) / math.sqrt(dk)
        scores = jnp.where(e_mask[:, None, :, :] > 0.0, scores, NEG_INF)
        attn = jax.nn.softmax(scores, axis=-1)
        o = jnp.einsum("bhqk,bhkd->bhqd", attn, v).transpose(0, 2, 1, 3).reshape(B, L, D)
        x = x + (o @ p["wo"] + p["bo"][0])
        x2 = _layer_norm(x, p["g2"][0], p["be2"][0])
        x = x + (jax.nn.relu(x2 @ p["w1"] + p["bf1"][0]) @ p["w2"] + p["bf2"][0])
    return _layer_norm(x, params["ln_g"][0], params["ln_b"][0])


# ----------------------------- main -----------------------------
if __name__ == "__main__":
    key = jax.random.PRNGKey(0)
    k_x, k_p = jax.random.split(key)

    x = jax.random.normal(k_x, (BATCH, MAX_TIME, D_MODEL), jnp.float32)
    lens = jnp.array([MAX_TIME, MAX_TIME - 2])
    e_mask = (jnp.arange(MAX_TIME)[None, :] < lens[:, None]).astype(jnp.float32)[:, None, :]  # (B,1,L)

    params = init_params(k_p)

    out = context_encoder_forward(x, e_mask, params)
    out = jax.block_until_ready(out)

    ref = reference_forward(x, e_mask, params)
    assert out.shape == (BATCH, MAX_TIME, D_MODEL)
    assert jnp.allclose(out, ref, atol=2e-2, rtol=2e-2), "Pallas output mismatch vs JAX reference"

    print("KERNEL_OK")
</pallas_src>

<mosaic_0001>
module attributes {stable_mosaic.version = 11 : i64} {
  func.func @fused_context_encoder_kernel(%arg0: memref<16x32xf32, #tpu.memory_space<vmem>>, %arg1: memref<16x16xf32, #tpu.memory_space<vmem>>, %arg2: memref<32x32xf32, #tpu.memory_space<vmem>>, %arg3: memref<16x32xf32, #tpu.memory_space<vmem>>, %arg4: memref<2x32x32xf32, #tpu.memory_space<vmem>>, %arg5: memref<2x1x32xf32, #tpu.memory_space<vmem>>, %arg6: memref<2x32x32xf32, #tpu.memory_space<vmem>>, %arg7: memref<2x1x32xf32, #tpu.memory_space<vmem>>, %arg8: memref<2x32x32xf32, #tpu.memory_space<vmem>>, %arg9: memref<2x1x32xf32, #tpu.memory_space<vmem>>, %arg10: memref<2x32x32xf32, #tpu.memory_space<vmem>>, %arg11: memref<2x1x32xf32, #tpu.memory_space<vmem>>, %arg12: memref<2x1x32xf32, #tpu.memory_space<vmem>>, %arg13: memref<2x1x32xf32, #tpu.memory_space<vmem>>, %arg14: memref<2x1x32xf32, #tpu.memory_space<vmem>>, %arg15: memref<2x1x32xf32, #tpu.memory_space<vmem>>, %arg16: memref<2x32x64xf32, #tpu.memory_space<vmem>>, %arg17: memref<2x1x64xf32, #tpu.memory_space<vmem>>, %arg18: memref<2x64x32xf32, #tpu.memory_space<vmem>>, %arg19: memref<2x1x32xf32, #tpu.memory_space<vmem>>, %arg20: memref<1x32xf32, #tpu.memory_space<vmem>>, %arg21: memref<1x32xf32, #tpu.memory_space<vmem>>, %arg22: memref<16x32xf32, #tpu.memory_space<vmem>>) attributes {dimension_semantics = [], scalar_prefetch = 0 : i64, scratch_operands = 0 : i64, tpu.core_type = #tpu.core_type<tc>} {
    %c0 = arith.constant 0 : index
    %c0_0 = arith.constant 0 : index
    %0 = vector.load %arg0[%c0, %c0_0] : memref<16x32xf32, #tpu.memory_space<vmem>>, vector<16x32xf32>
    %c0_1 = arith.constant 0 : index
    %c0_2 = arith.constant 0 : index
    %1 = vector.load %arg2[%c0_1, %c0_2] : memref<32x32xf32, #tpu.memory_space<vmem>>, vector<32x32xf32>
    %cst = arith.constant dense<0.000000e+00> : vector<16x32xf32>
    %2 = tpu.matmul %0, %1, %cst {dimension_numbers = #tpu.dot_dimension_numbers<[1], [0], [0], [1], [0, 0, 1, 1], [], []>} : vector<16x32xf32>, vector<32x32xf32>, vector<16x32xf32> -> vector<16x32xf32>
    %c0_3 = arith.constant 0 : index
    %c0_4 = arith.constant 0 : index
    %3 = vector.load %arg3[%c0_3, %c0_4] : memref<16x32xf32, #tpu.memory_space<vmem>>, vector<16x32xf32>
    %4 = arith.addf %2, %3 : vector<16x32xf32>
    %c0_5 = arith.constant 0 : index
    %c0_6 = arith.constant 0 : index
    %5 = vector.load %arg1[%c0_5, %c0_6] : memref<16x16xf32, #tpu.memory_space<vmem>>, vector<16x16xf32>
    %c0_7 = arith.constant 0 : index
    %c0_8 = arith.constant 0 : index
    %c0_9 = arith.constant 0 : index
    %6 = vector.load %arg12[%c0_7, %c0_8, %c0_9] : memref<2x1x32xf32, #tpu.memory_space<vmem>>, vector<1x1x32xf32>
    %7 = vector.shape_cast %6 : vector<1x1x32xf32> to vector<1x32xf32>
    %c0_10 = arith.constant 0 : index
    %c0_11 = arith.constant 0 : index
    %c0_12 = arith.constant 0 : index
    %8 = vector.load %arg13[%c0_10, %c0_11, %c0_12] : memref<2x1x32xf32, #tpu.memory_space<vmem>>, vector<1x1x32xf32>
    %9 = vector.shape_cast %8 : vector<1x1x32xf32> to vector<1x32xf32>
    %cst_13 = arith.constant dense<0.000000e+00> : vector<16xf32>
    %10 = vector.multi_reduction <add>, %4, %cst_13 [1] : vector<16x32xf32> to vector<16xf32>
    %11 = vector.shape_cast %10 : vector<16xf32> to vector<16x1xf32>
    %cst_14 = arith.constant 3.200000e+01 : f32
    %12 = vector.broadcast %cst_14 : f32 to vector<16x1xf32>
    %13 = arith.divf %11, %12 : vector<16x1xf32>
    %14 = vector.broadcast %13 : vector<16x1xf32> to vector<16x32xf32>
    %15 = arith.subf %4, %14 : vector<16x32xf32>
    %16 = arith.mulf %15, %15 : vector<16x32xf32>
    %cst_15 = arith.constant dense<0.000000e+00> : vector<16xf32>
    %17 = vector.multi_reduction <add>, %16, %cst_15 [1] : vector<16x32xf32> to vector<16xf32>
    %18 = vector.shape_cast %17 : vector<16xf32> to vector<16x1xf32>
    %cst_16 = arith.constant 3.200000e+01 : f32
    %19 = vector.broadcast %cst_16 : f32 to vector<16x1xf32>
    %20 = arith.divf %18, %19 : vector<16x1xf32>
    %21 = vector.broadcast %13 : vector<16x1xf32> to vector<16x32xf32>
    %22 = arith.subf %4, %21 : vector<16x32xf32>
    %cst_17 = arith.constant 9.99999997E-7 : f32
    %23 = vector.broadcast %cst_17 : f32 to vector<16x1xf32>
    %24 = arith.addf %20, %23 : vector<16x1xf32>
    %25 = math.rsqrt %24 : vector<16x1xf32>
    %26 = vector.broadcast %25 : vector<16x1xf32> to vector<16x32xf32>
    %27 = arith.mulf %22, %26 : vector<16x32xf32>
    %28 = vector.broadcast %7 : vector<1x32xf32> to vector<16x32xf32>
    %29 = arith.mulf %27, %28 : vector<16x32xf32>
    %30 = vector.broadcast %9 : vector<1x32xf32> to vector<16x32xf32>
    %31 = arith.addf %29, %30 : vector<16x32xf32>
    %c0_18 = arith.constant 0 : index
    %c0_19 = arith.constant 0 : index
    %c0_20 = arith.constant 0 : index
    %32 = vector.load %arg4[%c0_18, %c0_19, %c0_20] : memref<2x32x32xf32, #tpu.memory_space<vmem>>, vector<1x32x32xf32>
    %33 = vector.shape_cast %32 : vector<1x32x32xf32> to vector<32x32xf32>
    %cst_21 = arith.constant dense<0.000000e+00> : vector<16x32xf32>
    %34 = tpu.matmul %31, %33, %cst_21 {dimension_numbers = #tpu.dot_dimension_numbers<[1], [0], [0], [1], [0, 0, 1, 1], [], []>} : vector<16x32xf32>, vector<32x32xf32>, vector<16x32xf32> -> vector<16x32xf32>
    %c0_22 = arith.constant 0 : index
    %c0_23 = arith.constant 0 : index
    %c0_24 = arith.constant 0 : index
    %35 = vector.load %arg5[%c0_22, %c0_23, %c0_24] : memref<2x1x32xf32, #tpu.memory_space<vmem>>, vector<1x1x32xf32>
    %36 = vector.shape_cast %35 : vector<1x1x32xf32> to vector<1x32xf32>
    %37 = vector.broadcast %36 : vector<1x32xf32> to vector<16x32xf32>
    %38 = arith.addf %34, %37 : vector<16x32xf32>
    %c0_25 = arith.constant 0 : index
    %c0_26 = arith.constant 0 : index
    %c0_27 = arith.constant 0 : index
    %39 = vector.load %arg6[%c0_25, %c0_26, %c0_27] : memref<2x32x32xf32, #tpu.memory_space<vmem>>, vector<1x32x32xf32>
    %40 = vector.shape_cast %39 : vector<1x32x32xf32> to vector<32x32xf32>
    %cst_28 = arith.constant dense<0.000000e+00> : vector<16x32xf32>
    %41 = tpu.matmul %31, %40, %cst_28 {dimension_numbers = #tpu.dot_dimension_numbers<[1], [0], [0], [1], [0, 0, 1, 1], [], []>} : vector<16x32xf32>, vector<32x32xf32>, vector<16x32xf32> -> vector<16x32xf32>
    %c0_29 = arith.constant 0 : index
    %c0_30 = arith.constant 0 : index
    %c0_31 = arith.constant 0 : index
    %42 = vector.load %arg7[%c0_29, %c0_30, %c0_31] : memref<2x1x32xf32, #tpu.memory_space<vmem>>, vector<1x1x32xf32>
    %43 = vector.shape_cast %42 : vector<1x1x32xf32> to vector<1x32xf32>
    %44 = vector.broadcast %43 : vector<1x32xf32> to vector<16x32xf32>
    %45 = arith.addf %41, %44 : vector<16x32xf32>
    %c0_32 = arith.constant 0 : index
    %c0_33 = arith.constant 0 : index
    %c0_34 = arith.constant 0 : index
    %46 = vector.load %arg8[%c0_32, %c0_33, %c0_34] : memref<2x32x32xf32, #tpu.memory_space<vmem>>, vector<1x32x32xf32>
    %47 = vector.shape_cast %46 : vector<1x32x32xf32> to vector<32x32xf32>
    %cst_35 = arith.constant dense<0.000000e+00> : vector<16x32xf32>
    %48 = tpu.matmul %31, %47, %cst_35 {dimension_numbers = #tpu.dot_dimension_numbers<[1], [0], [0], [1], [0, 0, 1, 1], [], []>} : vector<16x32xf32>, vector<32x32xf32>, vector<16x32xf32> -> vector<16x32xf32>
    %c0_36 = arith.constant 0 : index
    %c0_37 = arith.constant 0 : index
    %c0_38 = arith.constant 0 : index
    %49 = vector.load %arg9[%c0_36, %c0_37, %c0_38] : memref<2x1x32xf32, #tpu.memory_space<vmem>>, vector<1x1x32xf32>
    %50 = vector.shape_cast %49 : vector<1x1x32xf32> to vector<1x32xf32>
    %51 = vector.broadcast %50 : vector<1x32xf32> to vector<16x32xf32>
    %52 = arith.addf %48, %51 : vector<16x32xf32>
    %c0_39 = arith.constant 0 : index
    %c0_40 = arith.constant 0 : index
    %c0_41 = arith.constant 0 : index
    %53 = vector.load %arg10[%c0_39, %c0_40, %c0_41] : memref<2x32x32xf32, #tpu.memory_space<vmem>>, vector<1x32x32xf32>
    %54 = vector.shape_cast %53 : vector<1x32x32xf32> to vector<32x32xf32>
    %cst_42 = arith.constant 0.000000e+00 : f32
    %55 = vector.broadcast %cst_42 : f32 to vector<16x32xf32>
    %56 = vector.extract_strided_slice %38 {offsets = [0, 0], sizes = [16, 8], strides = [1, 1]} : vector<16x32xf32> to vector<16x8xf32>
    %57 = vector.extract_strided_slice %45 {offsets = [0, 0], sizes = [16, 8], strides = [1, 1]} : vector<16x32xf32> to vector<16x8xf32>
    %58 = vector.extract_strided_slice %52 {offsets = [0, 0], sizes = [16, 8], strides = [1, 1]} : vector<16x32xf32> to vector<16x8xf32>
    %cst_43 = arith.constant dense<0.000000e+00> : vector<16x16xf32>
    %59 = tpu.matmul %56, %57, %cst_43 {dimension_numbers = #tpu.dot_dimension_numbers<[1], [1], [0], [0], [0, 0, 1, 0], [], []>} : vector<16x8xf32>, vector<16x8xf32>, vector<16x16xf32> -> vector<16x16xf32>
    %cst_44 = arith.constant 0.353553385 : f32
    %60 = vector.broadcast %cst_44 : f32 to vector<16x16xf32>
    %61 = arith.mulf %59, %60 : vector<16x16xf32>
    %62 = arith.addf %61, %5 : vector<16x16xf32>
    %cst_45 = arith.constant dense<0xFF800000> : vector<16xf32>
    %63 = vector.multi_reduction <maximumf>, %62, %cst_45 [1] : vector<16x16xf32> to vector<16xf32>
    %64 = vector.shape_cast %63 : vector<16xf32> to vector<16x1xf32>
    %65 = vector.broadcast %64 : vector<16x1xf32> to vector<16x16xf32>
    %66 = arith.subf %62, %65 : vector<16x16xf32>
    %67 = math.exp %66 : vector<16x16xf32>
    %cst_46 = arith.constant dense<0.000000e+00> : vector<16xf32>
    %68 = vector.multi_reduction <add>, %67, %cst_46 [1] : vector<16x16xf32> to vector<16xf32>
    %69 = vector.shape_cast %68 : vector<16xf32> to vector<16x1xf32>
    %70 = tpu.reciprocal %69 {approx = true} : vector<16x1xf32> -> vector<16x1xf32>
    %71 = vector.broadcast %70 : vector<16x1xf32> to vector<16x16xf32>
    %72 = arith.mulf %67, %71 : vector<16x16xf32>
    %cst_47 = arith.constant dense<0.000000e+00> : vector<16x8xf32>
    %73 = tpu.matmul %72, %58, %cst_47 {dimension_numbers = #tpu.dot_dimension_numbers<[1], [0], [0], [1], [0, 0, 1, 1], [], []>} : vector<16x16xf32>, vector<16x8xf32>, vector<16x8xf32> -> vector<16x8xf32>
    %74 = vector.extract_strided_slice %54 {offsets = [0, 0], sizes = [8, 32], strides = [1, 1]} : vector<32x32xf32> to vector<8x32xf32>
    %cst_48 = arith.constant dense<0.000000e+00> : vector<16x32xf32>
    %75 = tpu.matmul %73, %74, %cst_48 {dimension_numbers = #tpu.dot_dimension_numbers<[1], [0], [0], [1], [0, 0, 1, 1], [], []>} : vector<16x8xf32>, vector<8x32xf32>, vector<16x32xf32> -> vector<16x32xf32>
    %76 = arith.addf %55, %75 : vector<16x32xf32>
    %77 = vector.extract_strided_slice %38 {offsets = [0, 8], sizes = [16, 8], strides = [1, 1]} : vector<16x32xf32> to vector<16x8xf32>
    %78 = vector.extract_strided_slice %45 {offsets = [0, 8], sizes = [16, 8], strides = [1, 1]} : vector<16x32xf32> to vector<16x8xf32>
    %79 = vector.extract_strided_slice %52 {offsets = [0, 8], sizes = [16, 8], strides = [1, 1]} : vector<16x32xf32> to vector<16x8xf32>
    %cst_49 = arith.constant dense<0.000000e+00> : vector<16x16xf32>
    %80 = tpu.matmul %77, %78, %cst_49 {dimension_numbers = #tpu.dot_dimension_numbers<[1], [1], [0], [0], [0, 0, 1, 0], [], []>} : vector<16x8xf32>, vector<16x8xf32>, vector<16x16xf32> -> vector<16x16xf32>
    %cst_50 = arith.constant 0.353553385 : f32
    %81 = vector.broadcast %cst_50 : f32 to vector<16x16xf32>
    %82 = arith.mulf %80, %81 : vector<16x16xf32>
    %83 = arith.addf %82, %5 : vector<16x16xf32>
    %cst_51 = arith.constant dense<0xFF800000> : vector<16xf32>
    %84 = vector.multi_reduction <maximumf>, %83, %cst_51 [1] : vector<16x16xf32> to vector<16xf32>
    %85 = vector.shape_cast %84 : vector<16xf32> to vector<16x1xf32>
    %86 = vector.broadcast %85 : vector<16x1xf32> to vector<16x16xf32>
    %87 = arith.subf %83, %86 : vector<16x16xf32>
    %88 = math.exp %87 : vector<16x16xf32>
    %cst_52 = arith.constant dense<0.000000e+00> : vector<16xf32>
    %89 = vector.multi_reduction <add>, %88, %cst_52 [1] : vector<16x16xf32> to vector<16xf32>
    %90 = vector.shape_cast %89 : vector<16xf32> to vector<16x1xf32>
    %91 = tpu.reciprocal %90 {approx = true} : vector<16x1xf32> -> vector<16x1xf32>
    %92 = vector.broadcast %91 : vector<16x1xf32> to vector<16x16xf32>
    %93 = arith.mulf %88, %92 : vector<16x16xf32>
    %cst_53 = arith.constant dense<0.000000e+00> : vector<16x8xf32>
    %94 = tpu.matmul %93, %79, %cst_53 {dimension_numbers = #tpu.dot_dimension_numbers<[1], [0], [0], [1], [0, 0, 1, 1], [], []>} : vector<16x16xf32>, vector<16x8xf32>, vector<16x8xf32> -> vector<16x8xf32>
    %95 = vector.extract_strided_slice %54 {offsets = [8, 0], sizes = [8, 32], strides = [1, 1]} : vector<32x32xf32> to vector<8x32xf32>
    %cst_54 = arith.constant dense<0.000000e+00> : vector<16x32xf32>
    %96 = tpu.matmul %94, %95, %cst_54 {dimension_numbers = #tpu.dot_dimension_numbers<[1], [0], [0], [1], [0, 0, 1, 1], [], []>} : vector<16x8xf32>, vector<8x32xf32>, vector<16x32xf32> -> vector<16x32xf32>
    %97 = arith.addf %76, %96 : vector<16x32xf32>
    %98 = vector.extract_strided_slice %38 {offsets = [0, 16], sizes = [16, 8], strides = [1, 1]} : vector<16x32xf32> to vector<16x8xf32>
    %99 = vector.extract_strided_slice %45 {offsets = [0, 16], sizes = [16, 8], strides = [1, 1]} : vector<16x32xf32> to vector<16x8xf32>
    %100 = vector.extract_strided_slice %52 {offsets = [0, 16], sizes = [16, 8], strides = [1, 1]} : vector<16x32xf32> to vector<16x8xf32>
    %cst_55 = arith.constant dense<0.000000e+00> : vector<16x16xf32>
    %101 = tpu.matmul %98, %99, %cst_55 {dimension_numbers = #tpu.dot_dimension_numbers<[1], [1], [0], [0], [0, 0, 1, 0], [], []>} : vector<16x8xf32>, vector<16x8xf32>, vector<16x16xf32> -> vector<16x16xf32>
    %cst_56 = arith.constant 0.353553385 : f32
    %102 = vector.broadcast %cst_56 : f32 to vector<16x16xf32>
    %103 = arith.mulf %101, %102 : vector<16x16xf32>
    %104 = arith.addf %103, %5 : vector<16x16xf32>
    %cst_57 = arith.constant dense<0xFF800000> : vector<16xf32>
    %105 = vector.multi_reduction <maximumf>, %104, %cst_57 [1] : vector<16x16xf32> to vector<16xf32>
    %106 = vector.shape_cast %105 : vector<16xf32> to vector<16x1xf32>
    %107 = vector.broadcast %106 : vector<16x1xf32> to vector<16x16xf32>
    %108 = arith.subf %104, %107 : vector<16x16xf32>
    %109 = math.exp %108 : vector<16x16xf32>
    %cst_58 = arith.constant dense<0.000000e+00> : vector<16xf32>
    %110 = vector.multi_reduction <add>, %109, %cst_58 [1] : vector<16x16xf32> to vector<16xf32>
    %111 = vector.shape_cast %110 : vector<16xf32> to vector<16x1xf32>
    %112 = tpu.reciprocal %111 {approx = true} : vector<16x1xf32> -> vector<16x1xf32>
    %113 = vector.broadcast %112 : vector<16x1xf32> to vector<16x16xf32>
    %114 = arith.mulf %109, %113 : vector<16x16xf32>
    %cst_59 = arith.constant dense<0.000000e+00> : vector<16x8xf32>
    %115 = tpu.matmul %114, %100, %cst_59 {dimension_numbers = #tpu.dot_dimension_numbers<[1], [0], [0], [1], [0, 0, 1, 1], [], []>} : vector<16x16xf32>, vector<16x8xf32>, vector<16x8xf32> -> vector<16x8xf32>
    %116 = vector.extract_strided_slice %54 {offsets = [16, 0], sizes = [8, 32], strides = [1, 1]} : vector<32x32xf32> to vector<8x32xf32>
    %cst_60 = arith.constant dense<0.000000e+00> : vector<16x32xf32>
    %117 = tpu.matmul %115, %116, %cst_60 {dimension_numbers = #tpu.dot_dimension_numbers<[1], [0], [0], [1], [0, 0, 1, 1], [], []>} : vector<16x8xf32>, vector<8x32xf32>, vector<16x32xf32> -> vector<16x32xf32>
    %118 = arith.addf %97, %117 : vector<16x32xf32>
    %119 = vector.extract_strided_slice %38 {offsets = [0, 24], sizes = [16, 8], strides = [1, 1]} : vector<16x32xf32> to vector<16x8xf32>
    %120 = vector.extract_strided_slice %45 {offsets = [0, 24], sizes = [16, 8], strides = [1, 1]} : vector<16x32xf32> to vector<16x8xf32>
    %121 = vector.extract_strided_slice %52 {offsets = [0, 24], sizes = [16, 8], strides = [1, 1]} : vector<16x32xf32> to vector<16x8xf32>
    %cst_61 = arith.constant dense<0.000000e+00> : vector<16x16xf32>
    %122 = tpu.matmul %119, %120, %cst_61 {dimension_numbers = #tpu.dot_dimension_numbers<[1], [1], [0], [0], [0, 0, 1, 0], [], []>} : vector<16x8xf32>, vector<16x8xf32>, vector<16x16xf32> -> vector<16x16xf32>
    %cst_62 = arith.constant 0.353553385 : f32
    %123 = vector.broadcast %cst_62 : f32 to vector<16x16xf32>
    %124 = arith.mulf %122, %123 : vector<16x16xf32>
    %125 = arith.addf %124, %5 : vector<16x16xf32>
    %cst_63 = arith.constant dense<0xFF800000> : vector<16xf32>
    %126 = vector.multi_reduction <maximumf>, %125, %cst_63 [1] : vector<16x16xf32> to vector<16xf32>
    %127 = vector.shape_cast %126 : vector<16xf32> to vector<16x1xf32>
    %128 = vector.broadcast %127 : vector<16x1xf32> to vector<16x16xf32>
    %129 = arith.subf %125, %128 : vector<16x16xf32>
    %130 = math.exp %129 : vector<16x16xf32>
    %cst_64 = arith.constant dense<0.000000e+00> : vector<16xf32>
    %131 = vector.multi_reduction <add>, %130, %cst_64 [1] : vector<16x16xf32> to vector<16xf32>
    %132 = vector.shape_cast %131 : vector<16xf32> to vector<16x1xf32>
    %133 = tpu.reciprocal %132 {approx = true} : vector<16x1xf32> -> vector<16x1xf32>
    %134 = vector.broadcast %133 : vector<16x1xf32> to vector<16x16xf32>
    %135 = arith.mulf %130, %134 : vector<16x16xf32>
    %cst_65 = arith.constant dense<0.000000e+00> : vector<16x8xf32>
    %136 = tpu.matmul %135, %121, %cst_65 {dimension_numbers = #tpu.dot_dimension_numbers<[1], [0], [0], [1], [0, 0, 1, 1], [], []>} : vector<16x16xf32>, vector<16x8xf32>, vector<16x8xf32> -> vector<16x8xf32>
    %137 = vector.extract_strided_slice %54 {offsets = [24, 0], sizes = [8, 32], strides = [1, 1]} : vector<32x32xf32> to vector<8x32xf32>
    %cst_66 = arith.constant dense<0.000000e+00> : vector<16x32xf32>
    %138 = tpu.matmul %136, %137, %cst_66 {dimension_numbers = #tpu.dot_dimension_numbers<[1], [0], [0], [1], [0, 0, 1, 1], [], []>} : vector<16x8xf32>, vector<8x32xf32>, vector<16x32xf32> -> vector<16x32xf32>
    %139 = arith.addf %118, %138 : vector<16x32xf32>
    %140 = arith.addf %4, %139 : vector<16x32xf32>
    %c0_67 = arith.constant 0 : index
    %c0_68 = arith.constant 0 : index
    %c0_69 = arith.constant 0 : index
    %141 = vector.load %arg11[%c0_67, %c0_68, %c0_69] : memref<2x1x32xf32, #tpu.memory_space<vmem>>, vector<1x1x32xf32>
    %142 = vector.shape_cast %141 : vector<1x1x32xf32> to vector<1x32xf32>
    %143 = vector.broadcast %142 : vector<1x32xf32> to vector<16x32xf32>
    %144 = arith.addf %140, %143 : vector<16x32xf32>
    %c0_70 = arith.constant 0 : index
    %c0_71 = arith.constant 0 : index
    %c0_72 = arith.constant 0 : index
    %145 = vector.load %arg14[%c0_70, %c0_71, %c0_72] : memref<2x1x32xf32, #tpu.memory_space<vmem>>, vector<1x1x32xf32>
    %146 = vector.shape_cast %145 : vector<1x1x32xf32> to vector<1x32xf32>
    %c0_73 = arith.constant 0 : index
    %c0_74 = arith.constant 0 : index
    %c0_75 = arith.constant 0 : index
    %147 = vector.load %arg15[%c0_73, %c0_74, %c0_75] : memref<2x1x32xf32, #tpu.memory_space<vmem>>, vector<1x1x32xf32>
    %148 = vector.shape_cast %147 : vector<1x1x32xf32> to vector<1x32xf32>
    %cst_76 = arith.constant dense<0.000000e+00> : vector<16xf32>
    %149 = vector.multi_reduction <add>, %144, %cst_76 [1] : vector<16x32xf32> to vector<16xf32>
    %150 = vector.shape_cast %149 : vector<16xf32> to vector<16x1xf32>
    %cst_77 = arith.constant 3.200000e+01 : f32
    %151 = vector.broadcast %cst_77 : f32 to vector<16x1xf32>
    %152 = arith.divf %150, %151 : vector<16x1xf32>
    %153 = vector.broadcast %152 : vector<16x1xf32> to vector<16x32xf32>
    %154 = arith.subf %144, %153 : vector<16x32xf32>
    %155 = arith.mulf %154, %154 : vector<16x32xf32>
    %cst_78 = arith.constant dense<0.000000e+00> : vector<16xf32>
    %156 = vector.multi_reduction <add>, %155, %cst_78 [1] : vector<16x32xf32> to vector<16xf32>
    %157 = vector.shape_cast %156 : vector<16xf32> to vector<16x1xf32>
    %cst_79 = arith.constant 3.200000e+01 : f32
    %158 = vector.broadcast %cst_79 : f32 to vector<16x1xf32>
    %159 = arith.divf %157, %158 : vector<16x1xf32>
    %160 = vector.broadcast %152 : vector<16x1xf32> to vector<16x32xf32>
    %161 = arith.subf %144, %160 : vector<16x32xf32>
    %cst_80 = arith.constant 9.99999997E-7 : f32
    %162 = vector.broadcast %cst_80 : f32 to vector<16x1xf32>
    %163 = arith.addf %159, %162 : vector<16x1xf32>
    %164 = math.rsqrt %163 : vector<16x1xf32>
    %165 = vector.broadcast %164 : vector<16x1xf32> to vector<16x32xf32>
    %166 = arith.mulf %161, %165 : vector<16x32xf32>
    %167 = vector.broadcast %146 : vector<1x32xf32> to vector<16x32xf32>
    %168 = arith.mulf %166, %167 : vector<16x32xf32>
    %169 = vector.broadcast %148 : vector<1x32xf32> to vector<16x32xf32>
    %170 = arith.addf %168, %169 : vector<16x32xf32>
    %c0_81 = arith.constant 0 : index
    %c0_82 = arith.constant 0 : index
    %c0_83 = arith.constant 0 : index
    %171 = vector.load %arg16[%c0_81, %c0_82, %c0_83] : memref<2x32x64xf32, #tpu.memory_space<vmem>>, vector<1x32x64xf32>
    %172 = vector.shape_cast %171 : vector<1x32x64xf32> to vector<32x64xf32>
    %cst_84 = arith.constant dense<0.000000e+00> : vector<16x64xf32>
    %173 = tpu.matmul %170, %172, %cst_84 {dimension_numbers = #tpu.dot_dimension_numbers<[1], [0], [0], [1], [0, 0, 1, 1], [], []>} : vector<16x32xf32>, vector<32x64xf32>, vector<16x64xf32> -> vector<16x64xf32>
    %c0_85 = arith.constant 0 : index
    %c0_86 = arith.constant 0 : index
    %c0_87 = arith.constant 0 : index
    %174 = vector.load %arg17[%c0_85, %c0_86, %c0_87] : memref<2x1x64xf32, #tpu.memory_space<vmem>>, vector<1x1x64xf32>
    %175 = vector.shape_cast %174 : vector<1x1x64xf32> to vector<1x64xf32>
    %176 = vector.broadcast %175 : vector<1x64xf32> to vector<16x64xf32>
    %177 = arith.addf %173, %176 : vector<16x64xf32>
    %cst_88 = arith.constant 0.000000e+00 : f32
    %178 = vector.broadcast %cst_88 : f32 to vector<16x64xf32>
    %179 = arith.maximumf %177, %178 : vector<16x64xf32>
    %c0_89 = arith.constant 0 : index
    %c0_90 = arith.constant 0 : index
    %c0_91 = arith.constant 0 : index
    %180 = vector.load %arg18[%c0_89, %c0_90, %c0_91] : memref<2x64x32xf32, #tpu.memory_space<vmem>>, vector<1x64x32xf32>
    %181 = vector.shape_cast %180 : vector<1x64x32xf32> to vector<64x32xf32>
    %cst_92 = arith.constant dense<0.000000e+00> : vector<16x32xf32>
    %182 = tpu.matmul %179, %181, %cst_92 {dimension_numbers = #tpu.dot_dimension_numbers<[1], [0], [0], [1], [0, 0, 1, 1], [], []>} : vector<16x64xf32>, vector<64x32xf32>, vector<16x32xf32> -> vector<16x32xf32>
    %183 = arith.addf %144, %182 : vector<16x32xf32>
    %c0_93 = arith.constant 0 : index
    %c0_94 = arith.constant 0 : index
    %c0_95 = arith.constant 0 : index
    %184 = vector.load %arg19[%c0_93, %c0_94, %c0_95] : memref<2x1x32xf32, #tpu.memory_space<vmem>>, vector<1x1x32xf32>
    %185 = vector.shape_cast %184 : vector<1x1x32xf32> to vector<1x32xf32>
    %186 = vector.broadcast %185 : vector<1x32xf32> to vector<16x32xf32>
    %187 = arith.addf %183, %186 : vector<16x32xf32>
    %c1 = arith.constant 1 : index
    %c0_96 = arith.constant 0 : index
    %c0_97 = arith.constant 0 : index
    %188 = vector.load %arg12[%c1, %c0_96, %c0_97] : memref<2x1x32xf32, #tpu.memory_space<vmem>>, vector<1x1x32xf32>
    %189 = vector.shape_cast %188 : vector<1x1x32xf32> to vector<1x32xf32>
    %c1_98 = arith.constant 1 : index
    %c0_99 = arith.constant 0 : index
    %c0_100 = arith.constant 0 : index
    %190 = vector.load %arg13[%c1_98, %c0_99, %c0_100] : memref<2x1x32xf32, #tpu.memory_space<vmem>>, vector<1x1x32xf32>
    %191 = vector.shape_cast %190 : vector<1x1x32xf32> to vector<1x32xf32>
    %cst_101 = arith.constant dense<0.000000e+00> : vector<16xf32>
    %192 = vector.multi_reduction <add>, %187, %cst_101 [1] : vector<16x32xf32> to vector<16xf32>
    %193 = vector.shape_cast %192 : vector<16xf32> to vector<16x1xf32>
    %cst_102 = arith.constant 3.200000e+01 : f32
    %194 = vector.broadcast %cst_102 : f32 to vector<16x1xf32>
    %195 = arith.divf %193, %194 : vector<16x1xf32>
    %196 = vector.broadcast %195 : vector<16x1xf32> to vector<16x32xf32>
    %197 = arith.subf %187, %196 : vector<16x32xf32>
    %198 = arith.mulf %197, %197 : vector<16x32xf32>
    %cst_103 = arith.constant dense<0.000000e+00> : vector<16xf32>
    %199 = vector.multi_reduction <add>, %198, %cst_103 [1] : vector<16x32xf32> to vector<16xf32>
    %200 = vector.shape_cast %199 : vector<16xf32> to vector<16x1xf32>
    %cst_104 = arith.constant 3.200000e+01 : f32
    %201 = vector.broadcast %cst_104 : f32 to vector<16x1xf32>
    %202 = arith.divf %200, %201 : vector<16x1xf32>
    %203 = vector.broadcast %195 : vector<16x1xf32> to vector<16x32xf32>
    %204 = arith.subf %187, %203 : vector<16x32xf32>
    %cst_105 = arith.constant 9.99999997E-7 : f32
    %205 = vector.broadcast %cst_105 : f32 to vector<16x1xf32>
    %206 = arith.addf %202, %205 : vector<16x1xf32>
    %207 = math.rsqrt %206 : vector<16x1xf32>
    %208 = vector.broadcast %207 : vector<16x1xf32> to vector<16x32xf32>
    %209 = arith.mulf %204, %208 : vector<16x32xf32>
    %210 = vector.broadcast %189 : vector<1x32xf32> to vector<16x32xf32>
    %211 = arith.mulf %209, %210 : vector<16x32xf32>
    %212 = vector.broadcast %191 : vector<1x32xf32> to vector<16x32xf32>
    %213 = arith.addf %211, %212 : vector<16x32xf32>
    %c1_106 = arith.constant 1 : index
    %c0_107 = arith.constant 0 : index
    %c0_108 = arith.constant 0 : index
    %214 = vector.load %arg4[%c1_106, %c0_107, %c0_108] : memref<2x32x32xf32, #tpu.memory_space<vmem>>, vector<1x32x32xf32>
    %215 = vector.shape_cast %214 : vector<1x32x32xf32> to vector<32x32xf32>
    %cst_109 = arith.constant dense<0.000000e+00> : vector<16x32xf32>
    %216 = tpu.matmul %213, %215, %cst_109 {dimension_numbers = #tpu.dot_dimension_numbers<[1], [0], [0], [1], [0, 0, 1, 1], [], []>} : vector<16x32xf32>, vector<32x32xf32>, vector<16x32xf32> -> vector<16x32xf32>
    %c1_110 = arith.constant 1 : index
    %c0_111 = arith.constant 0 : index
    %c0_112 = arith.constant 0 : index
    %217 = vector.load %arg5[%c1_110, %c0_111, %c0_112] : memref<2x1x32xf32, #tpu.memory_space<vmem>>, vector<1x1x32xf32>
    %218 = vector.shape_cast %217 : vector<1x1x32xf32> to vector<1x32xf32>
    %219 = vector.broadcast %218 : vector<1x32xf32> to vector<16x32xf32>
    %220 = arith.addf %216, %219 : vector<16x32xf32>
    %c1_113 = arith.constant 1 : index
    %c0_114 = arith.constant 0 : index
    %c0_115 = arith.constant 0 : index
    %221 = vector.load %arg6[%c1_113, %c0_114, %c0_115] : memref<2x32x32xf32, #tpu.memory_space<vmem>>, vector<1x32x32xf32>
    %222 = vector.shape_cast %221 : vector<1x32x32xf32> to vector<32x32xf32>
    %cst_116 = arith.constant dense<0.000000e+00> : vector<16x32xf32>
    %223 = tpu.matmul %213, %222, %cst_116 {dimension_numbers = #tpu.dot_dimension_numbers<[1], [0], [0], [1], [0, 0, 1, 1], [], []>} : vector<16x32xf32>, vector<32x32xf32>, vector<16x32xf32> -> vector<16x32xf32>
    %c1_117 = arith.constant 1 : index
    %c0_118 = arith.constant 0 : index
    %c0_119 = arith.constant 0 : index
    %224 = vector.load %arg7[%c1_117, %c0_118, %c0_119] : memref<2x1x32xf32, #tpu.memory_space<vmem>>, vector<1x1x32xf32>
    %225 = vector.shape_cast %224 : vector<1x1x32xf32> to vector<1x32xf32>
    %226 = vector.broadcast %225 : vector<1x32xf32> to vector<16x32xf32>
    %227 = arith.addf %223, %226 : vector<16x32xf32>
    %c1_120 = arith.constant 1 : index
    %c0_121 = arith.constant 0 : index
    %c0_122 = arith.constant 0 : index
    %228 = vector.load %arg8[%c1_120, %c0_121, %c0_122] : memref<2x32x32xf32, #tpu.memory_space<vmem>>, vector<1x32x32xf32>
    %229 = vector.shape_cast %228 : vector<1x32x32xf32> to vector<32x32xf32>
    %cst_123 = arith.constant dense<0.000000e+00> : vector<16x32xf32>
    %230 = tpu.matmul %213, %229, %cst_123 {dimension_numbers = #tpu.dot_dimension_numbers<[1], [0], [0], [1], [0, 0, 1, 1], [], []>} : vector<16x32xf32>, vector<32x32xf32>, vector<16x32xf32> -> vector<16x32xf32>
    %c1_124 = arith.constant 1 : index
    %c0_125 = arith.constant 0 : index
    %c0_126 = arith.constant 0 : index
    %231 = vector.load %arg9[%c1_124, %c0_125, %c0_126] : memref<2x1x32xf32, #tpu.memory_space<vmem>>, vector<1x1x32xf32>
    %232 = vector.shape_cast %231 : vector<1x1x32xf32> to vector<1x32xf32>
    %233 = vector.broadcast %232 : vector<1x32xf32> to vector<16x32xf32>
    %234 = arith.addf %230, %233 : vector<16x32xf32>
    %c1_127 = arith.constant 1 : index
    %c0_128 = arith.constant 0 : index
    %c0_129 = arith.constant 0 : index
    %235 = vector.load %arg10[%c1_127, %c0_128, %c0_129] : memref<2x32x32xf32, #tpu.memory_space<vmem>>, vector<1x32x32xf32>
    %236 = vector.shape_cast %235 : vector<1x32x32xf32> to vector<32x32xf32>
    %cst_130 = arith.constant 0.000000e+00 : f32
    %237 = vector.broadcast %cst_130 : f32 to vector<16x32xf32>
    %238 = vector.extract_strided_slice %220 {offsets = [0, 0], sizes = [16, 8], strides = [1, 1]} : vector<16x32xf32> to vector<16x8xf32>
    %239 = vector.extract_strided_slice %227 {offsets = [0, 0], sizes = [16, 8], strides = [1, 1]} : vector<16x32xf32> to vector<16x8xf32>
    %240 = vector.extract_strided_slice %234 {offsets = [0, 0], sizes = [16, 8], strides = [1, 1]} : vector<16x32xf32> to vector<16x8xf32>
    %cst_131 = arith.constant dense<0.000000e+00> : vector<16x16xf32>
    %241 = tpu.matmul %238, %239, %cst_131 {dimension_numbers = #tpu.dot_dimension_numbers<[1], [1], [0], [0], [0, 0, 1, 0], [], []>} : vector<16x8xf32>, vector<16x8xf32>, vector<16x16xf32> -> vector<16x16xf32>
    %cst_132 = arith.constant 0.353553385 : f32
    %242 = vector.broadcast %cst_132 : f32 to vector<16x16xf32>
    %243 = arith.mulf %241, %242 : vector<16x16xf32>
    %244 = arith.addf %243, %5 : vector<16x16xf32>
    %cst_133 = arith.constant dense<0xFF800000> : vector<16xf32>
    %245 = vector.multi_reduction <maximumf>, %244, %cst_133 [1] : vector<16x16xf32> to vector<16xf32>
    %246 = vector.shape_cast %245 : vector<16xf32> to vector<16x1xf32>
    %247 = vector.broadcast %246 : vector<16x1xf32> to vector<16x16xf32>
    %248 = arith.subf %244, %247 : vector<16x16xf32>
    %249 = math.exp %248 : vector<16x16xf32>
    %cst_134 = arith.constant dense<0.000000e+00> : vector<16xf32>
    %250 = vector.multi_reduction <add>, %249, %cst_134 [1] : vector<16x16xf32> to vector<16xf32>
    %251 = vector.shape_cast %250 : vector<16xf32> to vector<16x1xf32>
    %252 = tpu.reciprocal %251 {approx = true} : vector<16x1xf32> -> vector<16x1xf32>
    %253 = vector.broadcast %252 : vector<16x1xf32> to vector<16x16xf32>
    %254 = arith.mulf %249, %253 : vector<16x16xf32>
    %cst_135 = arith.constant dense<0.000000e+00> : vector<16x8xf32>
    %255 = tpu.matmul %254, %240, %cst_135 {dimension_numbers = #tpu.dot_dimension_numbers<[1], [0], [0], [1], [0, 0, 1, 1], [], []>} : vector<16x16xf32>, vector<16x8xf32>, vector<16x8xf32> -> vector<16x8xf32>
    %256 = vector.extract_strided_slice %236 {offsets = [0, 0], sizes = [8, 32], strides = [1, 1]} : vector<32x32xf32> to vector<8x32xf32>
    %cst_136 = arith.constant dense<0.000000e+00> : vector<16x32xf32>
    %257 = tpu.matmul %255, %256, %cst_136 {dimension_numbers = #tpu.dot_dimension_numbers<[1], [0], [0], [1], [0, 0, 1, 1], [], []>} : vector<16x8xf32>, vector<8x32xf32>, vector<16x32xf32> -> vector<16x32xf32>
    %258 = arith.addf %237, %257 : vector<16x32xf32>
    %259 = vector.extract_strided_slice %220 {offsets = [0, 8], sizes = [16, 8], strides = [1, 1]} : vector<16x32xf32> to vector<16x8xf32>
    %260 = vector.extract_strided_slice %227 {offsets = [0, 8], sizes = [16, 8], strides = [1, 1]} : vector<16x32xf32> to vector<16x8xf32>
    %261 = vector.extract_strided_slice %234 {offsets = [0, 8], sizes = [16, 8], strides = [1, 1]} : vector<16x32xf32> to vector<16x8xf32>
    %cst_137 = arith.constant dense<0.000000e+00> : vector<16x16xf32>
    %262 = tpu.matmul %259, %260, %cst_137 {dimension_numbers = #tpu.dot_dimension_numbers<[1], [1], [0], [0], [0, 0, 1, 0], [], []>} : vector<16x8xf32>, vector<16x8xf32>, vector<16x16xf32> -> vector<16x16xf32>
    %cst_138 = arith.constant 0.353553385 : f32
    %263 = vector.broadcast %cst_138 : f32 to vector<16x16xf32>
    %264 = arith.mulf %262, %263 : vector<16x16xf32>
    %265 = arith.addf %264, %5 : vector<16x16xf32>
    %cst_139 = arith.constant dense<0xFF800000> : vector<16xf32>
    %266 = vector.multi_reduction <maximumf>, %265, %cst_139 [1] : vector<16x16xf32> to vector<16xf32>
    %267 = vector.shape_cast %266 : vector<16xf32> to vector<16x1xf32>
    %268 = vector.broadcast %267 : vector<16x1xf32> to vector<16x16xf32>
    %269 = arith.subf %265, %268 : vector<16x16xf32>
    %270 = math.exp %269 : vector<16x16xf32>
    %cst_140 = arith.constant dense<0.000000e+00> : vector<16xf32>
    %271 = vector.multi_reduction <add>, %270, %cst_140 [1] : vector<16x16xf32> to vector<16xf32>
    %272 = vector.shape_cast %271 : vector<16xf32> to vector<16x1xf32>
    %273 = tpu.reciprocal %272 {approx = true} : vector<16x1xf32> -> vector<16x1xf32>
    %274 = vector.broadcast %273 : vector<16x1xf32> to vector<16x16xf32>
    %275 = arith.mulf %270, %274 : vector<16x16xf32>
    %cst_141 = arith.constant dense<0.000000e+00> : vector<16x8xf32>
    %276 = tpu.matmul %275, %261, %cst_141 {dimension_numbers = #tpu.dot_dimension_numbers<[1], [0], [0], [1], [0, 0, 1, 1], [], []>} : vector<16x16xf32>, vector<16x8xf32>, vector<16x8xf32> -> vector<16x8xf32>
    %277 = vector.extract_strided_slice %236 {offsets = [8, 0], sizes = [8, 32], strides = [1, 1]} : vector<32x32xf32> to vector<8x32xf32>
    %cst_142 = arith.constant dense<0.000000e+00> : vector<16x32xf32>
    %278 = tpu.matmul %276, %277, %cst_142 {dimension_numbers = #tpu.dot_dimension_numbers<[1], [0], [0], [1], [0, 0, 1, 1], [], []>} : vector<16x8xf32>, vector<8x32xf32>, vector<16x32xf32> -> vector<16x32xf32>
    %279 = arith.addf %258, %278 : vector<16x32xf32>
    %280 = vector.extract_strided_slice %220 {offsets = [0, 16], sizes = [16, 8], strides = [1, 1]} : vector<16x32xf32> to vector<16x8xf32>
    %281 = vector.extract_strided_slice %227 {offsets = [0, 16], sizes = [16, 8], strides = [1, 1]} : vector<16x32xf32> to vector<16x8xf32>
    %282 = vector.extract_strided_slice %234 {offsets = [0, 16], sizes = [16, 8], strides = [1, 1]} : vector<16x32xf32> to vector<16x8xf32>
    %cst_143 = arith.constant dense<0.000000e+00> : vector<16x16xf32>
    %283 = tpu.matmul %280, %281, %cst_143 {dimension_numbers = #tpu.dot_dimension_numbers<[1], [1], [0], [0], [0, 0, 1, 0], [], []>} : vector<16x8xf32>, vector<16x8xf32>, vector<16x16xf32> -> vector<16x16xf32>
    %cst_144 = arith.constant 0.353553385 : f32
    %284 = vector.broadcast %cst_144 : f32 to vector<16x16xf32>
    %285 = arith.mulf %283, %284 : vector<16x16xf32>
    %286 = arith.addf %285, %5 : vector<16x16xf32>
    %cst_145 = arith.constant dense<0xFF800000> : vector<16xf32>
    %287 = vector.multi_reduction <maximumf>, %286, %cst_145 [1] : vector<16x16xf32> to vector<16xf32>
    %288 = vector.shape_cast %287 : vector<16xf32> to vector<16x1xf32>
    %289 = vector.broadcast %288 : vector<16x1xf32> to vector<16x16xf32>
    %290 = arith.subf %286, %289 : vector<16x16xf32>
    %291 = math.exp %290 : vector<16x16xf32>
    %cst_146 = arith.constant dense<0.000000e+00> : vector<16xf32>
    %292 = vector.multi_reduction <add>, %291, %cst_146 [1] : vector<16x16xf32> to vector<16xf32>
    %293 = vector.shape_cast %292 : vector<16xf32> to vector<16x1xf32>
    %294 = tpu.reciprocal %293 {approx = true} : vector<16x1xf32> -> vector<16x1xf32>
    %295 = vector.broadcast %294 : vector<16x1xf32> to vector<16x16xf32>
    %296 = arith.mulf %291, %295 : vector<16x16xf32>
    %cst_147 = arith.constant dense<0.000000e+00> : vector<16x8xf32>
    %297 = tpu.matmul %296, %282, %cst_147 {dimension_numbers = #tpu.dot_dimension_numbers<[1], [0], [0], [1], [0, 0, 1, 1], [], []>} : vector<16x16xf32>, vector<16x8xf32>, vector<16x8xf32> -> vector<16x8xf32>
    %298 = vector.extract_strided_slice %236 {offsets = [16, 0], sizes = [8, 32], strides = [1, 1]} : vector<32x32xf32> to vector<8x32xf32>
    %cst_148 = arith.constant dense<0.000000e+00> : vector<16x32xf32>
    %299 = tpu.matmul %297, %298, %cst_148 {dimension_numbers = #tpu.dot_dimension_numbers<[1], [0], [0], [1], [0, 0, 1, 1], [], []>} : vector<16x8xf32>, vector<8x32xf32>, vector<16x32xf32> -> vector<16x32xf32>
    %300 = arith.addf %279, %299 : vector<16x32xf32>
    %301 = vector.extract_strided_slice %220 {offsets = [0, 24], sizes = [16, 8], strides = [1, 1]} : vector<16x32xf32> to vector<16x8xf32>
    %302 = vector.extract_strided_slice %227 {offsets = [0, 24], sizes = [16, 8], strides = [1, 1]} : vector<16x32xf32> to vector<16x8xf32>
    %303 = vector.extract_strided_slice %234 {offsets = [0, 24], sizes = [16, 8], strides = [1, 1]} : vector<16x32xf32> to vector<16x8xf32>
    %cst_149 = arith.constant dense<0.000000e+00> : vector<16x16xf32>
    %304 = tpu.matmul %301, %302, %cst_149 {dimension_numbers = #tpu.dot_dimension_numbers<[1], [1], [0], [0], [0, 0, 1, 0], [], []>} : vector<16x8xf32>, vector<16x8xf32>, vector<16x16xf32> -> vector<16x16xf32>
    %cst_150 = arith.constant 0.353553385 : f32
    %305 = vector.broadcast %cst_150 : f32 to vector<16x16xf32>
    %306 = arith.mulf %304, %305 : vector<16x16xf32>
    %307 = arith.addf %306, %5 : vector<16x16xf32>
    %cst_151 = arith.constant dense<0xFF800000> : vector<16xf32>
    %308 = vector.multi_reduction <maximumf>, %307, %cst_151 [1] : vector<16x16xf32> to vector<16xf32>
    %309 = vector.shape_cast %308 : vector<16xf32> to vector<16x1xf32>
    %310 = vector.broadcast %309 : vector<16x1xf32> to vector<16x16xf32>
    %311 = arith.subf %307, %310 : vector<16x16xf32>
    %312 = math.exp %311 : vector<16x16xf32>
    %cst_152 = arith.constant dense<0.000000e+00> : vector<16xf32>
    %313 = vector.multi_reduction <add>, %312, %cst_152 [1] : vector<16x16xf32> to vector<16xf32>
    %314 = vector.shape_cast %313 : vector<16xf32> to vector<16x1xf32>
    %315 = tpu.reciprocal %314 {approx = true} : vector<16x1xf32> -> vector<16x1xf32>
    %316 = vector.broadcast %315 : vector<16x1xf32> to vector<16x16xf32>
    %317 = arith.mulf %312, %316 : vector<16x16xf32>
    %cst_153 = arith.constant dense<0.000000e+00> : vector<16x8xf32>
    %318 = tpu.matmul %317, %303, %cst_153 {dimension_numbers = #tpu.dot_dimension_numbers<[1], [0], [0], [1], [0, 0, 1, 1], [], []>} : vector<16x16xf32>, vector<16x8xf32>, vector<16x8xf32> -> vector<16x8xf32>
    %319 = vector.extract_strided_slice %236 {offsets = [24, 0], sizes = [8, 32], strides = [1, 1]} : vector<32x32xf32> to vector<8x32xf32>
    %cst_154 = arith.constant dense<0.000000e+00> : vector<16x32xf32>
    %320 = tpu.matmul %318, %319, %cst_154 {dimension_numbers = #tpu.dot_dimension_numbers<[1], [0], [0], [1], [0, 0, 1, 1], [], []>} : vector<16x8xf32>, vector<8x32xf32>, vector<16x32xf32> -> vector<16x32xf32>
    %321 = arith.addf %300, %320 : vector<16x32xf32>
    %322 = arith.addf %187, %321 : vector<16x32xf32>
    %c1_155 = arith.constant 1 : index
    %c0_156 = arith.constant 0 : index
    %c0_157 = arith.constant 0 : index
    %323 = vector.load %arg11[%c1_155, %c0_156, %c0_157] : memref<2x1x32xf32, #tpu.memory_space<vmem>>, vector<1x1x32xf32>
    %324 = vector.shape_cast %323 : vector<1x1x32xf32> to vector<1x32xf32>
    %325 = vector.broadcast %324 : vector<1x32xf32> to vector<16x32xf32>
    %326 = arith.addf %322, %325 : vector<16x32xf32>
    %c1_158 = arith.constant 1 : index
    %c0_159 = arith.constant 0 : index
    %c0_160 = arith.constant 0 : index
    %327 = vector.load %arg14[%c1_158, %c0_159, %c0_160] : memref<2x1x32xf32, #tpu.memory_space<vmem>>, vector<1x1x32xf32>
    %328 = vector.shape_cast %327 : vector<1x1x32xf32> to vector<1x32xf32>
    %c1_161 = arith.constant 1 : index
    %c0_162 = arith.constant 0 : index
    %c0_163 = arith.constant 0 : index
    %329 = vector.load %arg15[%c1_161, %c0_162, %c0_163] : memref<2x1x32xf32, #tpu.memory_space<vmem>>, vector<1x1x32xf32>
    %330 = vector.shape_cast %329 : vector<1x1x32xf32> to vector<1x32xf32>
    %cst_164 = arith.constant dense<0.000000e+00> : vector<16xf32>
    %331 = vector.multi_reduction <add>, %326, %cst_164 [1] : vector<16x32xf32> to vector<16xf32>
    %332 = vector.shape_cast %331 : vector<16xf32> to vector<16x1xf32>
    %cst_165 = arith.constant 3.200000e+01 : f32
    %333 = vector.broadcast %cst_165 : f32 to vector<16x1xf32>
    %334 = arith.divf %332, %333 : vector<16x1xf32>
    %335 = vector.broadcast %334 : vector<16x1xf32> to vector<16x32xf32>
    %336 = arith.subf %326, %335 : vector<16x32xf32>
    %337 = arith.mulf %336, %336 : vector<16x32xf32>
    %cst_166 = arith.constant dense<0.000000e+00> : vector<16xf32>
    %338 = vector.multi_reduction <add>, %337, %cst_166 [1] : vector<16x32xf32> to vector<16xf32>
    %339 = vector.shape_cast %338 : vector<16xf32> to vector<16x1xf32>
    %cst_167 = arith.constant 3.200000e+01 : f32
    %340 = vector.broadcast %cst_167 : f32 to vector<16x1xf32>
    %341 = arith.divf %339, %340 : vector<16x1xf32>
    %342 = vector.broadcast %334 : vector<16x1xf32> to vector<16x32xf32>
    %343 = arith.subf %326, %342 : vector<16x32xf32>
    %cst_168 = arith.constant 9.99999997E-7 : f32
    %344 = vector.broadcast %cst_168 : f32 to vector<16x1xf32>
    %345 = arith.addf %341, %344 : vector<16x1xf32>
    %346 = math.rsqrt %345 : vector<16x1xf32>
    %347 = vector.broadcast %346 : vector<16x1xf32> to vector<16x32xf32>
    %348 = arith.mulf %343, %347 : vector<16x32xf32>
    %349 = vector.broadcast %328 : vector<1x32xf32> to vector<16x32xf32>
    %350 = arith.mulf %348, %349 : vector<16x32xf32>
    %351 = vector.broadcast %330 : vector<1x32xf32> to vector<16x32xf32>
    %352 = arith.addf %350, %351 : vector<16x32xf32>
    %c1_169 = arith.constant 1 : index
    %c0_170 = arith.constant 0 : index
    %c0_171 = arith.constant 0 : index
    %353 = vector.load %arg16[%c1_169, %c0_170, %c0_171] : memref<2x32x64xf32, #tpu.memory_space<vmem>>, vector<1x32x64xf32>
    %354 = vector.shape_cast %353 : vector<1x32x64xf32> to vector<32x64xf32>
    %cst_172 = arith.constant dense<0.000000e+00> : vector<16x64xf32>
    %355 = tpu.matmul %352, %354, %cst_172 {dimension_numbers = #tpu.dot_dimension_numbers<[1], [0], [0], [1], [0, 0, 1, 1], [], []>} : vector<16x32xf32>, vector<32x64xf32>, vector<16x64xf32> -> vector<16x64xf32>
    %c1_173 = arith.constant 1 : index
    %c0_174 = arith.constant 0 : index
    %c0_175 = arith.constant 0 : index
    %356 = vector.load %arg17[%c1_173, %c0_174, %c0_175] : memref<2x1x64xf32, #tpu.memory_space<vmem>>, vector<1x1x64xf32>
    %357 = vector.shape_cast %356 : vector<1x1x64xf32> to vector<1x64xf32>
    %358 = vector.broadcast %357 : vector<1x64xf32> to vector<16x64xf32>
    %359 = arith.addf %355, %358 : vector<16x64xf32>
    %cst_176 = arith.constant 0.000000e+00 : f32
    %360 = vector.broadcast %cst_176 : f32 to vector<16x64xf32>
    %361 = arith.maximumf %359, %360 : vector<16x64xf32>
    %c1_177 = arith.constant 1 : index
    %c0_178 = arith.constant 0 : index
    %c0_179 = arith.constant 0 : index
    %362 = vector.load %arg18[%c1_177, %c0_178, %c0_179] : memref<2x64x32xf32, #tpu.memory_space<vmem>>, vector<1x64x32xf32>
    %363 = vector.shape_cast %362 : vector<1x64x32xf32> to vector<64x32xf32>
    %cst_180 = arith.constant dense<0.000000e+00> : vector<16x32xf32>
    %364 = tpu.matmul %361, %363, %cst_180 {dimension_numbers = #tpu.dot_dimension_numbers<[1], [0], [0], [1], [0, 0, 1, 1], [], []>} : vector<16x64xf32>, vector<64x32xf32>, vector<16x32xf32> -> vector<16x32xf32>
    %365 = arith.addf %326, %364 : vector<16x32xf32>
    %c1_181 = arith.constant 1 : index
    %c0_182 = arith.constant 0 : index
    %c0_183 = arith.constant 0 : index
    %366 = vector.load %arg19[%c1_181, %c0_182, %c0_183] : memref<2x1x32xf32, #tpu.memory_space<vmem>>, vector<1x1x32xf32>
    %367 = vector.shape_cast %366 : vector<1x1x32xf32> to vector<1x32xf32>
    %368 = vector.broadcast %367 : vector<1x32xf32> to vector<16x32xf32>
    %369 = arith.addf %365, %368 : vector<16x32xf32>
    %c0_184 = arith.constant 0 : index
    %c0_185 = arith.constant 0 : index
    %370 = vector.load %arg20[%c0_184, %c0_185] : memref<1x32xf32, #tpu.memory_space<vmem>>, vector<1x32xf32>
    %c0_186 = arith.constant 0 : index
    %c0_187 = arith.constant 0 : index
    %371 = vector.load %arg21[%c0_186, %c0_187] : memref<1x32xf32, #tpu.memory_space<vmem>>, vector<1x32xf32>
    %cst_188 = arith.constant dense<0.000000e+00> : vector<16xf32>
    %372 = vector.multi_reduction <add>, %369, %cst_188 [1] : vector<16x32xf32> to vector<16xf32>
    %373 = vector.shape_cast %372 : vector<16xf32> to vector<16x1xf32>
    %cst_189 = arith.constant 3.200000e+01 : f32
    %374 = vector.broadcast %cst_189 : f32 to vector<16x1xf32>
    %375 = arith.divf %373, %374 : vector<16x1xf32>
    %376 = vector.broadcast %375 : vector<16x1xf32> to vector<16x32xf32>
    %377 = arith.subf %369, %376 : vector<16x32xf32>
    %378 = arith.mulf %377, %377 : vector<16x32xf32>
    %cst_190 = arith.constant dense<0.000000e+00> : vector<16xf32>
    %379 = vector.multi_reduction <add>, %378, %cst_190 [1] : vector<16x32xf32> to vector<16xf32>
    %380 = vector.shape_cast %379 : vector<16xf32> to vector<16x1xf32>
    %cst_191 = arith.constant 3.200000e+01 : f32
    %381 = vector.broadcast %cst_191 : f32 to vector<16x1xf32>
    %382 = arith.divf %380, %381 : vector<16x1xf32>
    %383 = vector.broadcast %375 : vector<16x1xf32> to vector<16x32xf32>
    %384 = arith.subf %369, %383 : vector<16x32xf32>
    %cst_192 = arith.constant 9.99999997E-7 : f32
    %385 = vector.broadcast %cst_192 : f32 to vector<16x1xf32>
    %386 = arith.addf %382, %385 : vector<16x1xf32>
    %387 = math.rsqrt %386 : vector<16x1xf32>
    %388 = vector.broadcast %387 : vector<16x1xf32> to vector<16x32xf32>
    %389 = arith.mulf %384, %388 : vector<16x32xf32>
    %390 = vector.broadcast %370 : vector<1x32xf32> to vector<16x32xf32>
    %391 = arith.mulf %389, %390 : vector<16x32xf32>
    %392 = vector.broadcast %371 : vector<1x32xf32> to vector<16x32xf32>
    %393 = arith.addf %391, %392 : vector<16x32xf32>
    %c0_193 = arith.constant 0 : index
    %c0_194 = arith.constant 0 : index
    %394 = vector.load %arg22[%c0_193, %c0_194] : memref<16x32xf32, #tpu.memory_space<vmem>>, vector<16x32xf32>
    tpu.vector_store %arg22[%c0_193, %c0_194], %393 {strides = array<i32>} : memref<16x32xf32, #tpu.memory_space<vmem>>, vector<16x32xf32>,
    return
  }
}

</mosaic_0001>

<llo_original>
// kernel: tpu_custom_call.1
$region0: #{tpu_custom_call.1}
  #allocation0 [shape = 'u32[]', space=smem, size = 0x4, offset = 0x4, fixed_abs, tag = 'smem constant byte address 0x4 - core index']
  #allocation1 [shape = 'u32[144,128]{1,0:T(1,128)}', space=vmem, size = 0x12000, scoped, tag = 'internal scratch']
  %s0 = inlined_call_operand.hbm [shape: f32[16,32], index: 0, kind: input, shape index: {}]
  %s1 = inlined_call_operand.hbm [shape: f32[16,16], index: 1, kind: input, shape index: {}]
  %s2 = inlined_call_operand.hbm [shape: f32[32,32], index: 2, kind: input, shape index: {}]
  %s3 = inlined_call_operand.hbm [shape: f32[16,32], index: 3, kind: input, shape index: {}]
  %s4 = inlined_call_operand.vmem [shape: f32[2,32,32], index: 4, kind: input, shape index: {}]
  %s5 = inlined_call_operand.vmem [shape: f32[2,1,32], index: 5, kind: input, shape index: {}]
  %s6 = inlined_call_operand.vmem [shape: f32[2,32,32], index: 6, kind: input, shape index: {}]
  %s7 = inlined_call_operand.vmem [shape: f32[2,1,32], index: 7, kind: input, shape index: {}]
  %s8 = inlined_call_operand.vmem [shape: f32[2,32,32], index: 8, kind: input, shape index: {}]
  %s9 = inlined_call_operand.hbm [shape: f32[2,1,32], index: 9, kind: input, shape index: {}]
  %s10 = inlined_call_operand.hbm [shape: f32[2,32,32], index: 10, kind: input, shape index: {}]
  %s11 = inlined_call_operand.hbm [shape: f32[2,1,32], index: 11, kind: input, shape index: {}]
  %s12 = inlined_call_operand.hbm [shape: f32[2,1,32], index: 12, kind: input, shape index: {}]
  %s13 = inlined_call_operand.hbm [shape: f32[2,1,32], index: 13, kind: input, shape index: {}]
  %s14 = inlined_call_operand.hbm [shape: f32[2,1,32], index: 14, kind: input, shape index: {}]
  %s15 = inlined_call_operand.hbm [shape: f32[2,1,32], index: 15, kind: input, shape index: {}]
  %s16 = inlined_call_operand.hbm [shape: f32[2,32,64], index: 16, kind: input, shape index: {}]
  %s17 = inlined_call_operand.hbm [shape: f32[2,1,64], index: 17, kind: input, shape index: {}]
  %s18 = inlined_call_operand.vmem [shape: f32[2,64,32], index: 18, kind: input, shape index: {}]
  %s19 = inlined_call_operand.vmem [shape: f32[2,1,32], index: 19, kind: input, shape index: {}]
  %s20 = inlined_call_operand.vmem [shape: f32[1,32], index: 20, kind: input, shape index: {}]
  %s21 = inlined_call_operand.vmem [shape: f32[1,32], index: 21, kind: input, shape index: {}]
  %s22 = inlined_call_operand.hbm [shape: f32[16,32], index: 22, kind: output, shape index: {}]
  %s23 = sld [smem:[#allocation0]]
  $region150: #{tpu_custom_call.1} parent=0
    _
  %s25 = ssub.s32 1, %s23
  %s26 = scalar_select 0, %s25, %s23
  $region1: #{tpu_custom_call.1} parent=0
    #allocation2 [shape = 'u8[8192]{0}', space=vmem, size = 0x2000, scoped, tag = 'input window, operand 0, single buffered']
    #allocation3 [shape = 's32[1]{0}', space=sflag, size = 0x4, scoped, tag = 'scoped memory for tpu_custom_call.1']
    #allocation4 [shape = 's32[1]{0}', space=sflag, size = 0x4, scoped, tag = 'scoped memory for tpu_custom_call.1']
    #allocation5 [shape = 'u8[8192]{0}', space=vmem, size = 0x2000, scoped, tag = 'input window, operand 1, single buffered']
    #allocation6 [shape = 's32[1]{0}', space=sflag, size = 0x4, scoped, tag = 'scoped memory for tpu_custom_call.1']
    #allocation7 [shape = 'u8[16384]{0}', space=vmem, size = 0x4000, scoped, tag = 'input window, operand 2, single buffered']
    #allocation8 [shape = 'u8[8192]{0}', space=vmem, size = 0x2000, scoped, tag = 'input window, operand 3, single buffered']
    #allocation9 [shape = 's32[1]{0}', space=sflag, size = 0x4, scoped, tag = 'scoped memory for tpu_custom_call.1']
    #allocation10 [shape = 'u8[1024]{0}', space=vmem, size = 0x400, scoped, tag = 'input window, operand 9, single buffered']
    #allocation11 [shape = 'u8[32768]{0}', space=vmem, size = 0x8000, scoped, tag = 'input window, operand 10, single buffered']
    #allocation12 [shape = 's32[1]{0}', space=sflag, size = 0x4, scoped, tag = 'scoped memory for tpu_custom_call.1']
    #allocation13 [shape = 'u8[1024]{0}', space=vmem, size = 0x400, scoped, tag = 'input window, operand 11, single buffered']
    #allocation14 [shape = 'u8[1024]{0}', space=vmem, size = 0x400, scoped, tag = 'input window, operand 12, single buffered']
    #allocation15 [shape = 's32[1]{0}', space=sflag, size = 0x4, scoped, tag = 'scoped memory for tpu_custom_call.1']
    #allocation16 [shape = 'u8[1024]{0}', space=vmem, size = 0x400, scoped, tag = 'input window, operand 13, single buffered']
    #allocation17 [shape = 'u8[1024]{0}', space=vmem, size = 0x400, scoped, tag = 'input window, operand 14, single buffered']
    #allocation18 [shape = 's32[1]{0}', space=sflag, size = 0x4, scoped, tag = 'scoped memory for tpu_custom_call.1']
    #allocation19 [shape = 'u8[1024]{0}', space=vmem, size = 0x400, scoped, tag = 'input window, operand 15, single buffered']
    #allocation20 [shape = 'u8[32768]{0}', space=vmem, size = 0x8000, scoped, tag = 'input window, operand 16, single buffered']
    #allocation21 [shape = 's32[1]{0}', space=sflag, size = 0x4, scoped, tag = 'scoped memory for tpu_custom_call.1']
    #allocation22 [shape = 'u8[1024]{0}', space=vmem, size = 0x400, scoped, tag = 'input window, operand 17, single buffered']
    #allocation23 [shape = 'u8[8192]{0}', space=vmem, size = 0x2000, scoped, tag = 'output window, operand 0, single buffered']
    %27 = vsyncpa [#allocation3], 0
    %28 = vsyncpa [#allocation6], 0
    %29 = vsyncpa [#allocation9], 0
    %30 = vsyncpa [#allocation12], 0
    %31 = vsyncpa [#allocation15], 0
    %32 = vsyncpa [#allocation18], 0
    %33 = vsyncpa [#allocation21], 0
    %34 = vsyncpa [#allocation4], 0
    // Predicated region
    $region2: #{tpu_custom_call.1} parent=1 // pred_check
      _
    $region3: #{tpu_custom_call.1} parent=1 // pred_check_branch
      %36 = sbr.rel (0) target = $region5
    $region4: #{tpu_custom_call.1} parent=1 // pred_region
      %s38 = ssub.s32 256, 256
      %39 = vsyncadd [#allocation3], %s38
      %s40 = sshll.u32 [#allocation2], 4
      %s41 = int_to_ptr.vmem [resolvable:$true] %s40
      %46 = dma.hbm_to_vmem [thread:$0]  %s0, 256, %s41, [#allocation3], 128, 128, 8
    $region5: #{tpu_custom_call.1} parent=1 // pred_fallthru
      _
    // Predicated region
    $region6: #{tpu_custom_call.1} parent=1 // pred_check
      _
    $region7: #{tpu_custom_call.1} parent=1 // pred_check_branch
      %48 = sbr.rel (0) target = $region9
    $region8: #{tpu_custom_call.1} parent=1 // pred_region
      %s50 = ssub.s32 256, 256
      %51 = vsyncadd [#allocation6], %s50
      %s52 = sshll.u32 [#allocation5], 4
      %s53 = int_to_ptr.vmem [resolvable:$true] %s52
      %58 = dma.hbm_to_vmem [thread:$0]  %s1, 256, %s53, [#allocation6], 128, 128, 8
    $region9: #{tpu_custom_call.1} parent=1 // pred_fallthru
      _
    // Predicated region
    $region10: #{tpu_custom_call.1} parent=1 // pred_check
      _
    $region11: #{tpu_custom_call.1} parent=1 // pred_check_branch
      %60 = sbr.rel (0) target = $region13
    $region12: #{tpu_custom_call.1} parent=1 // pred_region
      %s62 = ssub.s32 512, 512
      %63 = vsyncadd [#allocation6], %s62
      %s64 = sshll.u32 [#allocation7], 4
      %s65 = int_to_ptr.vmem [resolvable:$true] %s64
      %70 = dma.hbm_to_vmem [thread:$0]  %s2, 512, %s65, [#allocation6], 128, 128, 8
    $region13: #{tpu_custom_call.1} parent=1 // pred_fallthru
      _
    // Predicated region
    $region14: #{tpu_custom_call.1} parent=1 // pred_check
      _
    $region15: #{tpu_custom_call.1} parent=1 // pred_check_branch
      %72 = sbr.rel (0) target = $region17
    $region16: #{tpu_custom_call.1} parent=1 // pred_region
      %s74 = ssub.s32 256, 256
      %75 = vsyncadd [#allocation9], %s74
      %s76 = sshll.u32 [#allocation8], 4
      %s77 = int_to_ptr.vmem [resolvable:$true] %s76
      %82 = dma.hbm_to_vmem [thread:$0]  %s3, 256, %s77, [#allocation9], 128, 128, 8
    $region17: #{tpu_custom_call.1} parent=1 // pred_fallthru
      _
    // Predicated region
    $region18: #{tpu_custom_call.1} parent=1 // pred_check
      _
    $region19: #{tpu_custom_call.1} parent=1 // pred_check_branch
      %84 = sbr.rel (0) target = $region21
    $region20: #{tpu_custom_call.1} parent=1 // pred_region
      _
    $region21: #{tpu_custom_call.1} parent=1 // pred_fallthru
      _
    // Predicated region
    $region22: #{tpu_custom_call.1} parent=1 // pred_check
      _
    $region23: #{tpu_custom_call.1} parent=1 // pred_check_branch
      %86 = sbr.rel (0) target = $region25
    $region24: #{tpu_custom_call.1} parent=1 // pred_region
      _
    $region25: #{tpu_custom_call.1} parent=1 // pred_fallthru
      _
    // Predicated region
    $region26: #{tpu_custom_call.1} parent=1 // pred_check
      _
    $region27: #{tpu_custom_call.1} parent=1 // pred_check_branch
      %88 = sbr.rel (0) target = $region29
    $region28: #{tpu_custom_call.1} parent=1 // pred_region
      _
    $region29: #{tpu_custom_call.1} parent=1 // pred_fallthru
      _
    // Predicated region
    $region30: #{tpu_custom_call.1} parent=1 // pred_check
      _
    $region31: #{tpu_custom_call.1} parent=1 // pred_check_branch
      %90 = sbr.rel (0) target = $region33
    $region32: #{tpu_custom_call.1} parent=1 // pred_region
      _
    $region33: #{tpu_custom_call.1} parent=1 // pred_fallthru
      _
    // Predicated region
    $region34: #{tpu_custom_call.1} parent=1 // pred_check
      _
    $region35: #{tpu_custom_call.1} parent=1 // pred_check_branch
      %92 = sbr.rel (0) target = $region37
    $region36: #{tpu_custom_call.1} parent=1 // pred_region
      _
    $region37: #{tpu_custom_call.1} parent=1 // pred_fallthru
      _
    // Predicated region
    $region38: #{tpu_custom_call.1} parent=1 // pred_check
      _
    $region39: #{tpu_custom_call.1} parent=1 // pred_check_branch
      %94 = sbr.rel (0) target = $region41
    $region40: #{tpu_custom_call.1} parent=1 // pred_region
      %s96 = ssub.s32 32, 32
      %97 = vsyncadd [#allocation9], %s96
      %s98 = sshll.u32 [#allocation10], 4
      %s99 = int_to_ptr.vmem [resolvable:$true] %s98
      %104 = dma.hbm_to_vmem [thread:$0]  %s9, 32, %s99, [#allocation9], 16, 16, 1
    $region41: #{tpu_custom_call.1} parent=1 // pred_fallthru
      _
    // Predicated region
    $region42: #{tpu_custom_call.1} parent=1 // pred_check
      _
    $region43: #{tpu_custom_call.1} parent=1 // pred_check_branch
      %106 = sbr.rel (0) target = $region45
    $region44: #{tpu_custom_call.1} parent=1 // pred_region
      %s108 = ssub.s32 1024, 1024
      %109 = vsyncadd [#allocation12], %s108
      %s110 = sshll.u32 [#allocation11], 4
      %s111 = int_to_ptr.vmem [resolvable:$true] %s110
      %116 = dma.hbm_to_vmem [thread:$0]  %s10, 1024, %s111, [#allocation12], 128, 128, 8
    $region45: #{tpu_custom_call.1} parent=1 // pred_fallthru
      _
    // Predicated region
    $region46: #{tpu_custom_call.1} parent=1 // pred_check
      _
    $region47: #{tpu_custom_call.1} parent=1 // pred_check_branch
      %118 = sbr.rel (0) target = $region49
    $region48: #{tpu_custom_call.1} parent=1 // pred_region
      %s120 = ssub.s32 32, 32
      %121 = vsyncadd [#allocation12], %s120
      %s122 = sshll.u32 [#allocation13], 4
      %s123 = int_to_ptr.vmem [resolvable:$true] %s122
      %128 = dma.hbm_to_vmem [thread:$0]  %s11, 32, %s123, [#allocation12], 16, 16, 1
    $region49: #{tpu_custom_call.1} parent=1 // pred_fallthru
      _
    // Predicated region
    $region50: #{tpu_custom_call.1} parent=1 // pred_check
      _
    $region51: #{tpu_custom_call.1} parent=1 // pred_check_branch
      %130 = sbr.rel (0) target = $region53
    $region52: #{tpu_custom_call.1} parent=1 // pred_region
      %s132 = ssub.s32 32, 32
      %133 = vsyncadd [#allocation15], %s132
      %s134 = sshll.u32 [#allocation14], 4
      %s135 = int_to_ptr.vmem [resolvable:$true] %s134
      %140 = dma.hbm_to_vmem [thread:$0]  %s12, 32, %s135, [#allocation15], 16, 16, 1
    $region53: #{tpu_custom_call.1} parent=1 // pred_fallthru
      _
    // Predicated region
    $region54: #{tpu_custom_call.1} parent=1 // pred_check
      _
    $region55: #{tpu_custom_call.1} parent=1 // pred_check_branch
      %142 = sbr.rel (0) target = $region57
    $region56: #{tpu_custom_call.1} parent=1 // pred_region
      %s144 = ssub.s32 32, 32
      %145 = vsyncadd [#allocation15], %s144
      %s146 = sshll.u32 [#allocation16], 4
      %s147 = int_to_ptr.vmem [resolvable:$true] %s146
      %152 = dma.hbm_to_vmem [thread:$0]  %s13, 32, %s147, [#allocation15], 16, 16, 1
    $region57: #{tpu_custom_call.1} parent=1 // pred_fallthru
      _
    // Predicated region
    $region58: #{tpu_custom_call.1} parent=1 // pred_check
      _
    $region59: #{tpu_custom_call.1} parent=1 // pred_check_branch
      %154 = sbr.rel (0) target = $region61
    $region60: #{tpu_custom_call.1} parent=1 // pred_region
      %s156 = ssub.s32 32, 32
      %157 = vsyncadd [#allocation18], %s156
      %s158 = sshll.u32 [#allocation17], 4
      %s159 = int_to_ptr.vmem [resolvable:$true] %s158
      %164 = dma.hbm_to_vmem [thread:$0]  %s14, 32, %s159, [#allocation18], 16, 16, 1
    $region61: #{tpu_custom_call.1} parent=1 // pred_fallthru
      _
    // Predicated region
    $region62: #{tpu_custom_call.1} parent=1 // pred_check
      _
    $region63: #{tpu_custom_call.1} parent=1 // pred_check_branch
      %166 = sbr.rel (0) target = $region65
    $region64: #{tpu_custom_call.1} parent=1 // pred_region
      %s168 = ssub.s32 32, 32
      %169 = vsyncadd [#allocation18], %s168
      %s170 = sshll.u32 [#allocation19], 4
      %s171 = int_to_ptr.vmem [resolvable:$true] %s170
      %176 = dma.hbm_to_vmem [thread:$0]  %s15, 32, %s171, [#allocation18], 16, 16, 1
    $region65: #{tpu_custom_call.1} parent=1 // pred_fallthru
      _
    // Predicated region
    $region66: #{tpu_custom_call.1} parent=1 // pred_check
      _
    $region67: #{tpu_custom_call.1} parent=1 // pred_check_branch
      %178 = sbr.rel (0) target = $region69
    $region68: #{tpu_custom_call.1} parent=1 // pred_region
      %s180 = ssub.s32 1024, 1024
      %181 = vsyncadd [#allocation21], %s180
      %s182 = sshll.u32 [#allocation20], 4
      %s183 = int_to_ptr.vmem [resolvable:$true] %s182
      %188 = dma.hbm_to_vmem [thread:$0]  %s16, 1024, %s183, [#allocation21], 128, 128, 8
    $region69: #{tpu_custom_call.1} parent=1 // pred_fallthru
      _
    // Predicated region
    $region70: #{tpu_custom_call.1} parent=1 // pred_check
      _
    $region71: #{tpu_custom_call.1} parent=1 // pred_check_branch
      %190 = sbr.rel (0) target = $region73
    $region72: #{tpu_custom_call.1} parent=1 // pred_region
      %s192 = ssub.s32 32, 32
      %193 = vsyncadd [#allocation21], %s192
      %s194 = sshll.u32 [#allocation22], 4
      %s195 = int_to_ptr.vmem [resolvable:$true] %s194
      %200 = dma.hbm_to_vmem [thread:$0]  %s17, 32, %s195, [#allocation21], 16, 16, 1
    $region73: #{tpu_custom_call.1} parent=1 // pred_fallthru
      _
    // Predicated region
    $region74: #{tpu_custom_call.1} parent=1 // pred_check
      _
    $region75: #{tpu_custom_call.1} parent=1 // pred_check_branch
      %202 = sbr.rel (0) target = $region77
    $region76: #{tpu_custom_call.1} parent=1 // pred_region
      _
    $region77: #{tpu_custom_call.1} parent=1 // pred_fallthru
      _
    // Predicated region
    $region78: #{tpu_custom_call.1} parent=1 // pred_check
      _
    $region79: #{tpu_custom_call.1} parent=1 // pred_check_branch
      %204 = sbr.rel (0) target = $region81
    $region80: #{tpu_custom_call.1} parent=1 // pred_region
      _
    $region81: #{tpu_custom_call.1} parent=1 // pred_fallthru
      _
    // Predicated region
    $region82: #{tpu_custom_call.1} parent=1 // pred_check
      _
    $region83: #{tpu_custom_call.1} parent=1 // pred_check_branch
      %206 = sbr.rel (0) target = $region85
    $region84: #{tpu_custom_call.1} parent=1 // pred_region
      _
    $region85: #{tpu_custom_call.1} parent=1 // pred_fallthru
      _
    // Predicated region
    $region86: #{tpu_custom_call.1} parent=1 // pred_check
      _
    $region87: #{tpu_custom_call.1} parent=1 // pred_check_branch
      %208 = sbr.rel (0) target = $region89
    $region88: #{tpu_custom_call.1} parent=1 // pred_region
      _
    $region89: #{tpu_custom_call.1} parent=1 // pred_fallthru
      _
    // Predicated region
    $region90: #{tpu_custom_call.1} parent=1 // pred_check
      _
    $region91: #{tpu_custom_call.1} parent=1 // pred_check_branch
      %210 = sbr.rel (0) target = $region93
    $region92: #{tpu_custom_call.1} parent=1 // pred_region
      %211 = dma.done [#allocation3], 256
    $region93: #{tpu_custom_call.1} parent=1 // pred_fallthru
      _
    // Predicated region
    $region94: #{tpu_custom_call.1} parent=1 // pred_check
      _
    $region95: #{tpu_custom_call.1} parent=1 // pred_check_branch
      %213 = sbr.rel (0) target = $region97
    $region96: #{tpu_custom_call.1} parent=1 // pred_region
      %214 = dma.done [#allocation6], 256
    $region97: #{tpu_custom_call.1} parent=1 // pred_fallthru
      _
    // Predicated region
    $region98: #{tpu_custom_call.1} parent=1 // pred_check
      _
    $region99: #{tpu_custom_call.1} parent=1 // pred_check_branch
      %216 = sbr.rel (0) target = $region101
    $region100: #{tpu_custom_call.1} parent=1 // pred_region
      %217 = dma.done [#allocation6], 512
    $region101: #{tpu_custom_call.1} parent=1 // pred_fallthru
      _
    // Predicated region
    $region102: #{tpu_custom_call.1} parent=1 // pred_check
      _
    $region103: #{tpu_custom_call.1} parent=1 // pred_check_branch
      %219 = sbr.rel (0) target = $region105
    $region104: #{tpu_custom_call.1} parent=1 // pred_region
      %220 = dma.done [#allocation9], 256
    $region105: #{tpu_custom_call.1} parent=1 // pred_fallthru
      _
    // Predicated region
    $region106: #{tpu_custom_call.1} parent=1 // pred_check
      _
    $region107: #{tpu_custom_call.1} parent=1 // pred_check_branch
      %222 = sbr.rel (0) target = $region109
    $region108: #{tpu_custom_call.1} parent=1 // pred_region
      %223 = dma.done [#allocation9], 32
    $region109: #{tpu_custom_call.1} parent=1 // pred_fallthru
      _
    // Predicated region
    $region110: #{tpu_custom_call.1} parent=1 // pred_check
      _
    $region111: #{tpu_custom_call.1} parent=1 // pred_check_branch
      %225 = sbr.rel (0) target = $region113
    $region112: #{tpu_custom_call.1} parent=1 // pred_region
      %226 = dma.done [#allocation12], 1024
    $region113: #{tpu_custom_call.1} parent=1 // pred_fallthru
      _
    // Predicated region
    $region114: #{tpu_custom_call.1} parent=1 // pred_check
      _
    $region115: #{tpu_custom_call.1} parent=1 // pred_check_branch
      %228 = sbr.rel (0) target = $region117
    $region116: #{tpu_custom_call.1} parent=1 // pred_region
      %229 = dma.done [#allocation12], 32
    $region117: #{tpu_custom_call.1} parent=1 // pred_fallthru
      _
    // Predicated region
    $region118: #{tpu_custom_call.1} parent=1 // pred_check
      _
    $region119: #{tpu_custom_call.1} parent=1 // pred_check_branch
      %231 = sbr.rel (0) target = $region121
    $region120: #{tpu_custom_call.1} parent=1 // pred_region
      %232 = dma.done [#allocation15], 32
    $region121: #{tpu_custom_call.1} parent=1 // pred_fallthru
      _
    // Predicated region
    $region122: #{tpu_custom_call.1} parent=1 // pred_check
      _
    $region123: #{tpu_custom_call.1} parent=1 // pred_check_branch
      %234 = sbr.rel (0) target = $region125
    $region124: #{tpu_custom_call.1} parent=1 // pred_region
      %235 = dma.done [#allocation15], 32
    $region125: #{tpu_custom_call.1} parent=1 // pred_fallthru
      _
    // Predicated region
    $region126: #{tpu_custom_call.1} parent=1 // pred_check
      _
    $region127: #{tpu_custom_call.1} parent=1 // pred_check_branch
      %237 = sbr.rel (0) target = $region129
    $region128: #{tpu_custom_call.1} parent=1 // pred_region
      %238 = dma.done [#allocation18], 32
    $region129: #{tpu_custom_call.1} parent=1 // pred_fallthru
      _
    // Predicated region
    $region130: #{tpu_custom_call.1} parent=1 // pred_check
      _
    $region131: #{tpu_custom_call.1} parent=1 // pred_check_branch
      %240 = sbr.rel (0) target = $region133
    $region132: #{tpu_custom_call.1} parent=1 // pred_region
      %241 = dma.done [#allocation18], 32
    $region133: #{tpu_custom_call.1} parent=1 // pred_fallthru
      _
    // Predicated region
    $region134: #{tpu_custom_call.1} parent=1 // pred_check
      _
    $region135: #{tpu_custom_call.1} parent=1 // pred_check_branch
      %243 = sbr.rel (0) target = $region137
    $region136: #{tpu_custom_call.1} parent=1 // pred_region
      %244 = dma.done [#allocation21], 1024
    $region137: #{tpu_custom_call.1} parent=1 // pred_fallthru
      _
    // Predicated region
    $region138: #{tpu_custom_call.1} parent=1 // pred_check
      _
    $region139: #{tpu_custom_call.1} parent=1 // pred_check_branch
      %246 = sbr.rel (0) target = $region141
    $region140: #{tpu_custom_call.1} parent=1 // pred_region
      %247 = dma.done [#allocation21], 32
    $region141: #{tpu_custom_call.1} parent=1 // pred_fallthru
      _
    %v248 = vld [vmem:[#allocation2] sm:$0xff]
    %v249 = vld [vmem:[#allocation2 + $0x8] sm:$0xff]
    %v250 = vld [vmem:[#allocation7] sm:$0xff]
    %v251 = vld [vmem:[#allocation7 + $0x8] sm:$0xff]
    %v252 = vld [vmem:[#allocation7 + $0x10] sm:$0xff]
    %v253 = vld [vmem:[#allocation7 + $0x18] sm:$0xff]
    %v254 = vld [vmem:[#allocation8] sm:$0xff]
    %v255 = vld [vmem:[#allocation8 + $0x8] sm:$0xff]
    %vm256 = vcmask 261120
    %v258 = vsel %vm256, %v248, 0
    %v261 = vsel %vm256, %v249, 0
    %263 = vmatprep.subr.mxu0 0.0
    %264 = vmatpush1.msra.mxu0 %v250
    %265 = vmatprep.subr.mxu0 0.0
    %266 = vmatpush1.msra.mxu0 %v251
    %267 = vmatprep.subr.mxu0 0.0
    %268 = vmatpush1.msra.mxu0 %v252
    %269 = vmatprep.subr.mxu0 0.0
    %270 = vmatpush1.msra.mxu0 %v253
    %271 = vmatprep.subr.mxu0 0.0
    %272 = vmatpush1.msra.mxu0 0.0
    %273 = vmatprep.subr.mxu0 0.0
    %274 = vmatpush1.msra.mxu0 0.0
    %275 = vmatprep.subr.mxu0 0.0
    %276 = vmatpush1.msra.mxu0 0.0
    %277 = vmatprep.subr.mxu0 0.0
    %278 = vmatpush1.msra.mxu0 0.0
    %279 = vmatprep.subr.mxu0 0.0
    %280 = vmatpush1.msra.mxu0 0.0
    %281 = vmatprep.subr.mxu0 0.0
    %282 = vmatpush1.msra.mxu0 0.0
    %283 = vmatprep.subr.mxu0 0.0
    %284 = vmatpush1.msra.mxu0 0.0
    %285 = vmatprep.subr.mxu0 0.0
    %286 = vmatpush1.msra.mxu0 0.0
    %287 = vmatprep.subr.mxu0 0.0
    %288 = vmatpush1.msra.mxu0 0.0
    %289 = vmatprep.subr.mxu0 0.0
    %290 = vmatpush1.msra.mxu0 0.0
    %291 = vmatprep.subr.mxu0 0.0
    %292 = vmatpush1.msra.mxu0 0.0
    %293 = vmatprep.subr.mxu0 0.0
    %294 = vmatpush1.msra.mxu0 0.0
    %295 = vmatprep.subr.mxu0 0.0
    %296 = vmatpush1.msra.mxu0 0.0
    %297 = vmatprep.subr.mxu0 0.0
    %298 = vmatpush1.msra.mxu0 0.0
    %299 = vmatprep.subr.mxu0 0.0
    %300 = vmatpush1.msra.mxu0 0.0
    %301 = vmatprep.subr.mxu0 0.0
    %302 = vmatpush1.msra.mxu0 0.0
    %303 = vmatprep.subr.mxu0 0.0
    %304 = vmatpush1.msra.mxu0 0.0
    %305 = vmatprep.subr.mxu0 0.0
    %306 = vmatpush1.msra.mxu0 0.0
    %307 = vmatprep.subr.mxu0 0.0
    %308 = vmatpush1.msra.mxu0 0.0
    %309 = vmatprep.subr.mxu0 0.0
    %310 = vmatpush1.msra.mxu0 0.0
    %311 = vmatprep.subr.mxu0 0.0
    %312 = vmatpush1.msra.mxu0 0.0
    %313 = vmatprep.subr.mxu0 0.0
    %314 = vmatpush1.msra.mxu0 0.0
    %315 = vmatprep.subr.mxu0 0.0
    %316 = vmatpush1.msra.mxu0 0.0
    %317 = vmatprep.subr.mxu0 0.0
    %318 = vmatpush1.msra.mxu0 0.0
    %319 = vmatprep.subr.mxu0 0.0
    %320 = vmatpush1.msra.mxu0 0.0
    %321 = vmatprep.subr.mxu0 0.0
    %322 = vmatpush1.msra.mxu0 0.0
    %323 = vmatprep.subr.mxu0 0.0
    %324 = vmatpush1.msra.mxu0 0.0
    %325 = vmatprep.subr.mxu0 0.0
    %326 = vmatpush1.msra.mxu0 0.0
    %327 = vmatprep.mubr.f32.mxu0 0.0
    %328 = vmatmul.mubr.f32.gmra.mrb[0].mxu0 %v258
    %v329 = vpop.f32.mrb[0].mxu0
    %v330 = vadd.f32 %v254, %v329
    %v331 = vpop.f32.mrb[0].mxu0
    %332 = vmatprep.mubr.f32.mxu0 0.0
    %333 = vmatmul.mubr.f32.gmra.mrb[0].mxu0 %v261
    %v334 = vpop.f32.mrb[0].mxu0
    %v335 = vadd.f32 %v255, %v334
    %v336 = vpop.f32.mrb[0].mxu0
    %337 = vdwg.mxu0
    %v338 = vld [vmem:[#allocation5] sm:$0xff]
    %v339 = vld [vmem:[#allocation5 + $0x8] sm:$0xff]
    %v340 = vld [vmem:[#allocation14] sm:$0x1]
    %v341 = vld [vmem:[#allocation16] sm:$0x1]
    %v342 = vsel %vm256, %v330, 0.0
    %343 = vadd.xlane.f32.xlu0 %v342
    %v344 = vpop.xlane.xlu0 %343
    %v345 = vsel %vm256, %v335, 0.0
    %346 = vadd.xlane.f32.xlu0 %v345
    %v347 = vpop.xlane.xlu0 %346
    %v348 = vrcp.pop 32.0
    %v349 = vmul.f32 %v344, %v348
    %v350 = vmul.f32 %v347, %v348
    %v351 = vsub.f32 %v330, %v349
    %v352 = vsub.f32 %v335, %v350
    %v353 = vmul.f32 %v351, %v351
    %v354 = vmul.f32 %v352, %v352
    %v355 = vsel %vm256, %v353, 0.0
    %356 = vadd.xlane.f32.xlu0 %v355
    %v357 = vpop.xlane.xlu0 %356
    %v358 = vsel %vm256, %v354, 0.0
    %359 = vadd.xlane.f32.xlu0 %v358
    %v360 = vpop.xlane.xlu0 %359
    %v361 = vmul.f32 %v357, %v348
    %v362 = vmul.f32 %v360, %v348
    %v363 = vadd.f32 %v361, 1e-06
    %v364 = vadd.f32 %v362, 1e-06
    %v365 = vrsqrt.pop %v363
    %v366 = vrsqrt.pop %v364
    %v367 = vmul.f32 %v351, %v365
    %v368 = vmul.f32 %v352, %v366
    %v370 = vlaneseq
    %v371 = vshrl.u32 %v370, 7
    %v372 = vsub.s32 0, %v371
    %v373 = vrot.slane %v340, %v372
    %v375 = vmul.f32 %v367, %v373
    %v376 = vmul.f32 %v368, %v373
    %v378 = vlaneseq
    %v379 = vshrl.u32 %v378, 7
    %v380 = vsub.s32 0, %v379
    %v381 = vrot.slane %v341, %v380
    %v383 = vadd.f32 %v375, %v381
    %v384 = vadd.f32 %v376, %v381
    %v385 = vld [vmem:[%s4] sm:$0xff]
    %v386 = vld [vmem:[%s4 + $0x8] sm:$0xff]
    %v387 = vld [vmem:[%s4 + $0x10] sm:$0xff]
    %v388 = vld [vmem:[%s4 + $0x18] sm:$0xff]
    %v389 = vld [vmem:[%s5] sm:$0x1]
    %v391 = vlaneseq
    %v392 = vshrl.u32 %v391, 7
    %v393 = vsub.s32 0, %v392
    %v394 = vrot.slane %v389, %v393
    %v397 = vsel %vm256, %v383, 0
    %v400 = vsel %vm256, %v384, 0
    %402 = vmatprep.subr.mxu0 0.0
    %403 = vmatpush1.msra.mxu0 %v385
    %404 = vmatprep.subr.mxu0 0.0
    %405 = vmatpush1.msra.mxu0 %v386
    %406 = vmatprep.subr.mxu0 0.0
    %407 = vmatpush1.msra.mxu0 %v387
    %408 = vmatprep.subr.mxu0 0.0
    %409 = vmatpush1.msra.mxu0 %v388
    %410 = vmatprep.subr.mxu0 0.0
    %411 = vmatpush1.msra.mxu0 0.0
    %412 = vmatprep.subr.mxu0 0.0
    %413 = vmatpush1.msra.mxu0 0.0
    %414 = vmatprep.subr.mxu0 0.0
    %415 = vmatpush1.msra.mxu0 0.0
    %416 = vmatprep.subr.mxu0 0.0
    %417 = vmatpush1.msra.mxu0 0.0
    %418 = vmatprep.subr.mxu0 0.0
    %419 = vmatpush1.msra.mxu0 0.0
    %420 = vmatprep.subr.mxu0 0.0
    %421 = vmatpush1.msra.mxu0 0.0
    %422 = vmatprep.subr.mxu0 0.0
    %423 = vmatpush1.msra.mxu0 0.0
    %424 = vmatprep.subr.mxu0 0.0
    %425 = vmatpush1.msra.mxu0 0.0
    %426 = vmatprep.subr.mxu0 0.0
    %427 = vmatpush1.msra.mxu0 0.0
    %428 = vmatprep.subr.mxu0 0.0
    %429 = vmatpush1.msra.mxu0 0.0
    %430 = vmatprep.subr.mxu0 0.0
    %431 = vmatpush1.msra.mxu0 0.0
    %432 = vmatprep.subr.mxu0 0.0
    %433 = vmatpush1.msra.mxu0 0.0
    %434 = vmatprep.subr.mxu0 0.0
    %435 = vmatpush1.msra.mxu0 0.0
    %436 = vmatprep.subr.mxu0 0.0
    %437 = vmatpush1.msra.mxu0 0.0
    %438 = vmatprep.subr.mxu0 0.0
    %439 = vmatpush1.msra.mxu0 0.0
    %440 = vmatprep.subr.mxu0 0.0
    %441 = vmatpush1.msra.mxu0 0.0
    %442 = vmatprep.subr.mxu0 0.0
    %443 = vmatpush1.msra.mxu0 0.0
    %444 = vmatprep.subr.mxu0 0.0
    %445 = vmatpush1.msra.mxu0 0.0
    %446 = vmatprep.subr.mxu0 0.0
    %447 = vmatpush1.msra.mxu0 0.0
    %448 = vmatprep.subr.mxu0 0.0
    %449 = vmatpush1.msra.mxu0 0.0
    %450 = vmatprep.subr.mxu0 0.0
    %451 = vmatpush1.msra.mxu0 0.0
    %452 = vmatprep.subr.mxu0 0.0
    %453 = vmatpush1.msra.mxu0 0.0
    %454 = vmatprep.subr.mxu0 0.0
    %455 = vmatpush1.msra.mxu0 0.0
    %456 = vmatprep.subr.mxu0 0.0
    %457 = vmatpush1.msra.mxu0 0.0
    %458 = vmatprep.subr.mxu0 0.0
    %459 = vmatpush1.msra.mxu0 0.0
    %460 = vmatprep.subr.mxu0 0.0
    %461 = vmatpush1.msra.mxu0 0.0
    %462 = vmatprep.subr.mxu0 0.0
    %463 = vmatpush1.msra.mxu0 0.0
    %464 = vmatprep.subr.mxu0 0.0
    %465 = vmatpush1.msra.mxu0 0.0
    %466 = vmatprep.mubr.f32.mxu0 0.0
    %467 = vmatmul.mubr.f32.gmra.mrb[0].mxu0 %v397
    %v468 = vpop.f32.mrb[0].mxu0
    %v469 = vadd.f32 %v394, %v468
    %v470 = vpop.f32.mrb[0].mxu0
    %471 = vmatprep.mubr.f32.mxu0 0.0
    %472 = vmatmul.mubr.f32.gmra.mrb[0].mxu0 %v400
    %v473 = vpop.f32.mrb[0].mxu0
    %v474 = vadd.f32 %v394, %v473
    %v475 = vpop.f32.mrb[0].mxu0
    %476 = vdwg.mxu0
    %v477 = vld [vmem:[%s6] sm:$0xff]
    %v478 = vld [vmem:[%s6 + $0x8] sm:$0xff]
    %v479 = vld [vmem:[%s6 + $0x10] sm:$0xff]
    %v480 = vld [vmem:[%s6 + $0x18] sm:$0xff]
    %v481 = vld [vmem:[%s7] sm:$0x1]
    %v483 = vlaneseq
    %v484 = vshrl.u32 %v483, 7
    %v485 = vsub.s32 0, %v484
    %v486 = vrot.slane %v481, %v485
    %488 = vmatprep.subr.mxu0 0.0
    %489 = vmatpush1.msra.mxu0 %v477
    %490 = vmatprep.subr.mxu0 0.0
    %491 = vmatpush1.msra.mxu0 %v478
    %492 = vmatprep.subr.mxu0 0.0
    %493 = vmatpush1.msra.mxu0 %v479
    %494 = vmatprep.subr.mxu0 0.0
    %495 = vmatpush1.msra.mxu0 %v480
    %496 = vmatprep.subr.mxu0 0.0
    %497 = vmatpush1.msra.mxu0 0.0
    %498 = vmatprep.subr.mxu0 0.0
    %499 = vmatpush1.msra.mxu0 0.0
    %500 = vmatprep.subr.mxu0 0.0
    %501 = vmatpush1.msra.mxu0 0.0
    %502 = vmatprep.subr.mxu0 0.0
    %503 = vmatpush1.msra.mxu0 0.0
    %504 = vmatprep.subr.mxu0 0.0
    %505 = vmatpush1.msra.mxu0 0.0
    %506 = vmatprep.subr.mxu0 0.0
    %507 = vmatpush1.msra.mxu0 0.0
    %508 = vmatprep.subr.mxu0 0.0
    %509 = vmatpush1.msra.mxu0 0.0
    %510 = vmatprep.subr.mxu0 0.0
    %511 = vmatpush1.msra.mxu0 0.0
    %512 = vmatprep.subr.mxu0 0.0
    %513 = vmatpush1.msra.mxu0 0.0
    %514 = vmatprep.subr.mxu0 0.0
    %515 = vmatpush1.msra.mxu0 0.0
    %516 = vmatprep.subr.mxu0 0.0
    %517 = vmatpush1.msra.mxu0 0.0
    %518 = vmatprep.subr.mxu0 0.0
    %519 = vmatpush1.msra.mxu0 0.0
    %520 = vmatprep.subr.mxu0 0.0
    %521 = vmatpush1.msra.mxu0 0.0
    %522 = vmatprep.subr.mxu0 0.0
    %523 = vmatpush1.msra.mxu0 0.0
    %524 = vmatprep.subr.mxu0 0.0
    %525 = vmatpush1.msra.mxu0 0.0
    %526 = vmatprep.subr.mxu0 0.0
    %527 = vmatpush1.msra.mxu0 0.0
    %528 = vmatprep.subr.mxu0 0.0
    %529 = vmatpush1.msra.mxu0 0.0
    %530 = vmatprep.subr.mxu0 0.0
    %531 = vmatpush1.msra.mxu0 0.0
    %532 = vmatprep.subr.mxu0 0.0
    %533 = vmatpush1.msra.mxu0 0.0
    %534 = vmatprep.subr.mxu0 0.0
    %535 = vmatpush1.msra.mxu0 0.0
    %536 = vmatprep.subr.mxu0 0.0
    %537 = vmatpush1.msra.mxu0 0.0
    %538 = vmatprep.subr.mxu0 0.0
    %539 = vmatpush1.msra.mxu0 0.0
    %540 = vmatprep.subr.mxu0 0.0
    %541 = vmatpush1.msra.mxu0 0.0
    %542 = vmatprep.subr.mxu0 0.0
    %543 = vmatpush1.msra.mxu0 0.0
    %544 = vmatprep.subr.mxu0 0.0
    %545 = vmatpush1.msra.mxu0 0.0
    %546 = vmatprep.subr.mxu0 0.0
    %547 = vmatpush1.msra.mxu0 0.0
    %548 = vmatprep.subr.mxu0 0.0
    %549 = vmatpush1.msra.mxu0 0.0
    %550 = vmatprep.subr.mxu0 0.0
    %551 = vmatpush1.msra.mxu0 0.0
    %552 = vmatprep.mubr.f32.mxu0 0.0
    %553 = vmatmul.mubr.f32.gmra.mrb[0].mxu0 %v397
    %v554 = vpop.f32.mrb[0].mxu0
    %v555 = vadd.f32 %v486, %v554
    %v556 = vpop.f32.mrb[0].mxu0
    %557 = vmatprep.mubr.f32.mxu0 0.0
    %558 = vmatmul.mubr.f32.gmra.mrb[0].mxu0 %v400
    %v559 = vpop.f32.mrb[0].mxu0
    %v560 = vadd.f32 %v486, %v559
    %v561 = vpop.f32.mrb[0].mxu0
    %562 = vdwg.mxu0
    %v563 = vld [vmem:[%s8] sm:$0xff]
    %v564 = vld [vmem:[%s8 + $0x8] sm:$0xff]
    %v565 = vld [vmem:[%s8 + $0x10] sm:$0xff]
    %v566 = vld [vmem:[%s8 + $0x18] sm:$0xff]
    %v567 = vld [vmem:[#allocation10] sm:$0x1]
    %v569 = vlaneseq
    %v570 = vshrl.u32 %v569, 7
    %v571 = vsub.s32 0, %v570
    %v572 = vrot.slane %v567, %v571
    %574 = vmatprep.subr.mxu0 0.0
    %575 = vmatpush1.msra.mxu0 %v563
    %576 = vmatprep.subr.mxu0 0.0
    %577 = vmatpush1.msra.mxu0 %v564
    %578 = vmatprep.subr.mxu0 0.0
    %579 = vmatpush1.msra.mxu0 %v565
    %580 = vmatprep.subr.mxu0 0.0
    %581 = vmatpush1.msra.mxu0 %v566
    %582 = vmatprep.subr.mxu0 0.0
    %583 = vmatpush1.msra.mxu0 0.0
    %584 = vmatprep.subr.mxu0 0.0
    %585 = vmatpush1.msra.mxu0 0.0
    %586 = vmatprep.subr.mxu0 0.0
    %587 = vmatpush1.msra.mxu0 0.0
    %588 = vmatprep.subr.mxu0 0.0
    %589 = vmatpush1.msra.mxu0 0.0
    %590 = vmatprep.subr.mxu0 0.0
    %591 = vmatpush1.msra.mxu0 0.0
    %592 = vmatprep.subr.mxu0 0.0
    %593 = vmatpush1.msra.mxu0 0.0
    %594 = vmatprep.subr.mxu0 0.0
    %595 = vmatpush1.msra.mxu0 0.0
    %596 = vmatprep.subr.mxu0 0.0
    %597 = vmatpush1.msra.mxu0 0.0
    %598 = vmatprep.subr.mxu0 0.0
    %599 = vmatpush1.msra.mxu0 0.0
    %600 = vmatprep.subr.mxu0 0.0
    %601 = vmatpush1.msra.mxu0 0.0
    %602 = vmatprep.subr.mxu0 0.0
    %603 = vmatpush1.msra.mxu0 0.0
    %604 = vmatprep.subr.mxu0 0.0
    %605 = vmatpush1.msra.mxu0 0.0
    %606 = vmatprep.subr.mxu0 0.0
    %607 = vmatpush1.msra.mxu0 0.0
    %608 = vmatprep.subr.mxu0 0.0
    %609 = vmatpush1.msra.mxu0 0.0
    %610 = vmatprep.subr.mxu0 0.0
    %611 = vmatpush1.msra.mxu0 0.0
    %612 = vmatprep.subr.mxu0 0.0
    %613 = vmatpush1.msra.mxu0 0.0
    %614 = vmatprep.subr.mxu0 0.0
    %615 = vmatpush1.msra.mxu0 0.0
    %616 = vmatprep.subr.mxu0 0.0
    %617 = vmatpush1.msra.mxu0 0.0
    %618 = vmatprep.subr.mxu0 0.0
    %619 = vmatpush1.msra.mxu0 0.0
    %620 = vmatprep.subr.mxu0 0.0
    %621 = vmatpush1.msra.mxu0 0.0
    %622 = vmatprep.subr.mxu0 0.0
    %623 = vmatpush1.msra.mxu0 0.0
    %624 = vmatprep.subr.mxu0 0.0
    %625 = vmatpush1.msra.mxu0 0.0
    %626 = vmatprep.subr.mxu0 0.0
    %627 = vmatpush1.msra.mxu0 0.0
    %628 = vmatprep.subr.mxu0 0.0
    %629 = vmatpush1.msra.mxu0 0.0
    %630 = vmatprep.subr.mxu0 0.0
    %631 = vmatpush1.msra.mxu0 0.0
    %632 = vmatprep.subr.mxu0 0.0
    %633 = vmatpush1.msra.mxu0 0.0
    %634 = vmatprep.subr.mxu0 0.0
    %635 = vmatpush1.msra.mxu0 0.0
    %636 = vmatprep.subr.mxu0 0.0
    %637 = vmatpush1.msra.mxu0 0.0
    %638 = vmatprep.mubr.f32.mxu0 0.0
    %639 = vmatmul.mubr.f32.gmra.mrb[0].mxu0 %v397
    %v640 = vpop.f32.mrb[0].mxu0
    %v641 = vadd.f32 %v572, %v640
    %v642 = vpop.f32.mrb[0].mxu0
    %643 = vmatprep.mubr.f32.mxu0 0.0
    %644 = vmatmul.mubr.f32.gmra.mrb[0].mxu0 %v400
    %v645 = vpop.f32.mrb[0].mxu0
    %v646 = vadd.f32 %v572, %v645
    %v647 = vpop.f32.mrb[0].mxu0
    %648 = vdwg.mxu0
    %v649 = vld [vmem:[#allocation11] sm:$0xff]
    %v650 = vld [vmem:[#allocation11 + $0x8] sm:$0xff]
    %v651 = vld [vmem:[#allocation11 + $0x10] sm:$0xff]
    %v652 = vld [vmem:[#allocation11 + $0x18] sm:$0xff]
    %vm653 = vcmask 64512
    %v655 = vsel %vm653, %v469, 0
    %v658 = vsel %vm653, %v474, 0
    %v661 = vsel %vm653, %v555, 0
    %v664 = vsel %vm653, %v560, 0
    %666 = vmatprep.subr.mxu0 0.0
    %667 = vmatpush1.xpose.msra.mxu0 %v661
    %668 = vmatprep.subr.mxu0 0.0
    %669 = vmatpush1.xpose.msra.mxu0 %v664
    %670 = vmatprep.subr.mxu0 0.0
    %671 = vmatpush1.xpose.msra.mxu0 0.0
    %672 = vmatprep.subr.mxu0 0.0
    %673 = vmatpush1.xpose.msra.mxu0 0.0
    %674 = vmatprep.subr.mxu0 0.0
    %675 = vmatpush1.xpose.msra.mxu0 0.0
    %676 = vmatprep.subr.mxu0 0.0
    %677 = vmatpush1.xpose.msra.mxu0 0.0
    %678 = vmatprep.subr.mxu0 0.0
    %679 = vmatpush1.xpose.msra.mxu0 0.0
    %680 = vmatprep.subr.mxu0 0.0
    %681 = vmatpush1.xpose.msra.mxu0 0.0
    %682 = vmatprep.subr.mxu0 0.0
    %683 = vmatpush1.xpose.msra.mxu0 0.0
    %684 = vmatprep.subr.mxu0 0.0
    %685 = vmatpush1.xpose.msra.mxu0 0.0
    %686 = vmatprep.subr.mxu0 0.0
    %687 = vmatpush1.xpose.msra.mxu0 0.0
    %688 = vmatprep.subr.mxu0 0.0
    %689 = vmatpush1.xpose.msra.mxu0 0.0
    %690 = vmatprep.subr.mxu0 0.0
    %691 = vmatpush1.xpose.msra.mxu0 0.0
    %692 = vmatprep.subr.mxu0 0.0
    %693 = vmatpush1.xpose.msra.mxu0 0.0
    %694 = vmatprep.subr.mxu0 0.0
    %695 = vmatpush1.xpose.msra.mxu0 0.0
    %696 = vmatprep.subr.mxu0 0.0
    %697 = vmatpush1.xpose.msra.mxu0 0.0
    %698 = vmatprep.subr.mxu0 0.0
    %699 = vmatpush1.xpose.msra.mxu0 0.0
    %700 = vmatprep.subr.mxu0 0.0
    %701 = vmatpush1.xpose.msra.mxu0 0.0
    %702 = vmatprep.subr.mxu0 0.0
    %703 = vmatpush1.xpose.msra.mxu0 0.0
    %704 = vmatprep.subr.mxu0 0.0
    %705 = vmatpush1.xpose.msra.mxu0 0.0
    %706 = vmatprep.subr.mxu0 0.0
    %707 = vmatpush1.xpose.msra.mxu0 0.0
    %708 = vmatprep.subr.mxu0 0.0
    %709 = vmatpush1.xpose.msra.mxu0 0.0
    %710 = vmatprep.subr.mxu0 0.0
    %711 = vmatpush1.xpose.msra.mxu0 0.0
    %712 = vmatprep.subr.mxu0 0.0
    %713 = vmatpush1.xpose.msra.mxu0 0.0
    %714 = vmatprep.subr.mxu0 0.0
    %715 = vmatpush1.xpose.msra.mxu0 0.0
    %716 = vmatprep.subr.mxu0 0.0
    %717 = vmatpush1.xpose.msra.mxu0 0.0
    %718 = vmatprep.subr.mxu0 0.0
    %719 = vmatpush1.xpose.msra.mxu0 0.0
    %720 = vmatprep.subr.mxu0 0.0
    %721 = vmatpush1.xpose.msra.mxu0 0.0
    %722 = vmatprep.subr.mxu0 0.0
    %723 = vmatpush1.xpose.msra.mxu0 0.0
    %724 = vmatprep.subr.mxu0 0.0
    %725 = vmatpush1.xpose.msra.mxu0 0.0
    %726 = vmatprep.subr.mxu0 0.0
    %727 = vmatpush1.xpose.msra.mxu0 0.0
    %728 = vmatprep.subr.mxu0 0.0
    %729 = vmatpush1.xpose.msra.mxu0 0.0
    %730 = vmatprep.mubr.f32.mxu0 0.0
    %731 = vmatmul.mubr.f32.gmra.mrb[0].mxu0 %v655
    %v732 = vpop.f32.mrb[0].mxu0
    %v733 = vadd.f32 0.0, %v732
    %v734 = vpop.f32.mrb[0].mxu0
    %735 = vmatprep.mubr.f32.mxu0 0.0
    %736 = vmatmul.mubr.f32.gmra.mrb[0].mxu0 %v658
    %v737 = vpop.f32.mrb[0].mxu0
    %v738 = vadd.f32 0.0, %v737
    %v739 = vpop.f32.mrb[0].mxu0
    %740 = vdwg.mxu0
    %v741 = vmul.f32 %v733, 0.35355338
    %v742 = vmul.f32 %v738, 0.35355338
    %v743 = vadd.f32 %v741, %v338
    %v744 = vadd.f32 %v742, %v339
    %vm745 = vcmask 130048
    %v746 = vsel %vm745, %v743, -inf
    %747 = vmax.xlane.f32.xlu0 %v746
    %v748 = vpop.xlane.xlu0 %747
    %v749 = vsel %vm745, %v744, -inf
    %750 = vmax.xlane.f32.xlu0 %v749
    %v751 = vpop.xlane.xlu0 %750
    %v752 = vsub.f32 %v743, %v748
    %v753 = vsub.f32 %v744, %v751
    %v754 = vmul.f32 %v752, 1.442695
    %v755 = vpow.pop %v754
    %v756 = vmul.f32 %v753, 1.442695
    %v757 = vpow.pop %v756
    %v758 = vsel %vm745, %v755, 0.0
    %759 = vadd.xlane.f32.xlu0 %v758
    %v760 = vpop.xlane.xlu0 %759
    %v761 = vsel %vm745, %v757, 0.0
    %762 = vadd.xlane.f32.xlu0 %v761
    %v763 = vpop.xlane.xlu0 %762
    %v764 = vrcp.pop %v760
    %v765 = vrcp.pop %v763
    %v766 = vmul.f32 %v755, %v764
    %v767 = vmul.f32 %v757, %v765
    %v769 = vsel %vm745, %v766, 0
    %v772 = vsel %vm745, %v767, 0
    %774 = vmatprep.subr.mxu0 0.0
    %775 = vmatpush1.msra.mxu0 %v641
    %776 = vmatprep.subr.mxu0 0.0
    %777 = vmatpush1.msra.mxu0 %v646
    %778 = vmatprep.subr.mxu0 0.0
    %779 = vmatpush1.msra.mxu0 0.0
    %780 = vmatprep.subr.mxu0 0.0
    %781 = vmatpush1.msra.mxu0 0.0
    %782 = vmatprep.subr.mxu0 0.0
    %783 = vmatpush1.msra.mxu0 0.0
    %784 = vmatprep.subr.mxu0 0.0
    %785 = vmatpush1.msra.mxu0 0.0
    %786 = vmatprep.subr.mxu0 0.0
    %787 = vmatpush1.msra.mxu0 0.0
    %788 = vmatprep.subr.mxu0 0.0
    %789 = vmatpush1.msra.mxu0 0.0
    %790 = vmatprep.subr.mxu0 0.0
    %791 = vmatpush1.msra.mxu0 0.0
    %792 = vmatprep.subr.mxu0 0.0
    %793 = vmatpush1.msra.mxu0 0.0
    %794 = vmatprep.subr.mxu0 0.0
    %795 = vmatpush1.msra.mxu0 0.0
    %796 = vmatprep.subr.mxu0 0.0
    %797 = vmatpush1.msra.mxu0 0.0
    %798 = vmatprep.subr.mxu0 0.0
    %799 = vmatpush1.msra.mxu0 0.0
    %800 = vmatprep.subr.mxu0 0.0
    %801 = vmatpush1.msra.mxu0 0.0
    %802 = vmatprep.subr.mxu0 0.0
    %803 = vmatpush1.msra.mxu0 0.0
    %804 = vmatprep.subr.mxu0 0.0
    %805 = vmatpush1.msra.mxu0 0.0
    %806 = vmatprep.subr.mxu0 0.0
    %807 = vmatpush1.msra.mxu0 0.0
    %808 = vmatprep.subr.mxu0 0.0
    %809 = vmatpush1.msra.mxu0 0.0
    %810 = vmatprep.subr.mxu0 0.0
    %811 = vmatpush1.msra.mxu0 0.0
    %812 = vmatprep.subr.mxu0 0.0
    %813 = vmatpush1.msra.mxu0 0.0
    %814 = vmatprep.subr.mxu0 0.0
    %815 = vmatpush1.msra.mxu0 0.0
    %816 = vmatprep.subr.mxu0 0.0
    %817 = vmatpush1.msra.mxu0 0.0
    %818 = vmatprep.subr.mxu0 0.0
    %819 = vmatpush1.msra.mxu0 0.0
    %820 = vmatprep.subr.mxu0 0.0
    %821 = vmatpush1.msra.mxu0 0.0
    %822 = vmatprep.subr.mxu0 0.0
    %823 = vmatpush1.msra.mxu0 0.0
    %824 = vmatprep.subr.mxu0 0.0
    %825 = vmatpush1.msra.mxu0 0.0
    %826 = vmatprep.subr.mxu0 0.0
    %827 = vmatpush1.msra.mxu0 0.0
    %828 = vmatprep.subr.mxu0 0.0
    %829 = vmatpush1.msra.mxu0 0.0
    %830 = vmatprep.subr.mxu0 0.0
    %831 = vmatpush1.msra.mxu0 0.0
    %832 = vmatprep.subr.mxu0 0.0
    %833 = vmatpush1.msra.mxu0 0.0
    %834 = vmatprep.subr.mxu0 0.0
    %835 = vmatpush1.msra.mxu0 0.0
    %836 = vmatprep.subr.mxu0 0.0
    %837 = vmatpush1.msra.mxu0 0.0
    %838 = vmatprep.mubr.f32.mxu0 0.0
    %839 = vmatmul.mubr.f32.gmra.mrb[0].mxu0 %v769
    %v840 = vpop.f32.mrb[0].mxu0
    %v841 = vadd.f32 0.0, %v840
    %v842 = vpop.f32.mrb[0].mxu0
    %843 = vmatprep.mubr.f32.mxu0 0.0
    %844 = vmatmul.mubr.f32.gmra.mrb[0].mxu0 %v772
    %v845 = vpop.f32.mrb[0].mxu0
    %v846 = vadd.f32 0.0, %v845
    %v847 = vpop.f32.mrb[0].mxu0
    %848 = vdwg.mxu0
    %849 = vrot.lane.b32.xlu0 %v469, 120
    %v850 = vpop.permute.xlu0 %849
    %851 = vrot.lane.b32.xlu0 %v474, 120
    %v852 = vpop.permute.xlu0 %851
    %853 = vrot.lane.b32.xlu0 %v555, 120
    %v854 = vpop.permute.xlu0 %853
    %855 = vrot.lane.b32.xlu0 %v560, 120
    %v856 = vpop.permute.xlu0 %855
    %v857 = vsel %vm653, %v850, 0
    %v859 = vsel %vm653, %v852, 0
    %v861 = vsel %vm653, %v854, 0
    %v863 = vsel %vm653, %v856, 0
    %865 = vmatprep.subr.mxu0 0.0
    %866 = vmatpush1.xpose.msra.mxu0 %v861
    %867 = vmatprep.subr.mxu0 0.0
    %868 = vmatpush1.xpose.msra.mxu0 %v863
    %869 = vmatprep.subr.mxu0 0.0
    %870 = vmatpush1.xpose.msra.mxu0 0.0
    %871 = vmatprep.subr.mxu0 0.0
    %872 = vmatpush1.xpose.msra.mxu0 0.0
    %873 = vmatprep.subr.mxu0 0.0
    %874 = vmatpush1.xpose.msra.mxu0 0.0
    %875 = vmatprep.subr.mxu0 0.0
    %876 = vmatpush1.xpose.msra.mxu0 0.0
    %877 = vmatprep.subr.mxu0 0.0
    %878 = vmatpush1.xpose.msra.mxu0 0.0
    %879 = vmatprep.subr.mxu0 0.0
    %880 = vmatpush1.xpose.msra.mxu0 0.0
    %881 = vmatprep.subr.mxu0 0.0
    %882 = vmatpush1.xpose.msra.mxu0 0.0
    %883 = vmatprep.subr.mxu0 0.0
    %884 = vmatpush1.xpose.msra.mxu0 0.0
    %885 = vmatprep.subr.mxu0 0.0
    %886 = vmatpush1.xpose.msra.mxu0 0.0
    %887 = vmatprep.subr.mxu0 0.0
    %888 = vmatpush1.xpose.msra.mxu0 0.0
    %889 = vmatprep.subr.mxu0 0.0
    %890 = vmatpush1.xpose.msra.mxu0 0.0
    %891 = vmatprep.subr.mxu0 0.0
    %892 = vmatpush1.xpose.msra.mxu0 0.0
    %893 = vmatprep.subr.mxu0 0.0
    %894 = vmatpush1.xpose.msra.mxu0 0.0
    %895 = vmatprep.subr.mxu0 0.0
    %896 = vmatpush1.xpose.msra.mxu0 0.0
    %897 = vmatprep.subr.mxu0 0.0
    %898 = vmatpush1.xpose.msra.mxu0 0.0
    %899 = vmatprep.subr.mxu0 0.0
    %900 = vmatpush1.xpose.msra.mxu0 0.0
    %901 = vmatprep.subr.mxu0 0.0
    %902 = vmatpush1.xpose.msra.mxu0 0.0
    %903 = vmatprep.subr.mxu0 0.0
    %904 = vmatpush1.xpose.msra.mxu0 0.0
    %905 = vmatprep.subr.mxu0 0.0
    %906 = vmatpush1.xpose.msra.mxu0 0.0
    %907 = vmatprep.subr.mxu0 0.0
    %908 = vmatpush1.xpose.msra.mxu0 0.0
    %909 = vmatprep.subr.mxu0 0.0
    %910 = vmatpush1.xpose.msra.mxu0 0.0
    %911 = vmatprep.subr.mxu0 0.0
    %912 = vmatpush1.xpose.msra.mxu0 0.0
    %913 = vmatprep.subr.mxu0 0.0
    %914 = vmatpush1.xpose.msra.mxu0 0.0
    %915 = vmatprep.subr.mxu0 0.0
    %916 = vmatpush1.xpose.msra.mxu0 0.0
    %917 = vmatprep.subr.mxu0 0.0
    %918 = vmatpush1.xpose.msra.mxu0 0.0
    %919 = vmatprep.subr.mxu0 0.0
    %920 = vmatpush1.xpose.msra.mxu0 0.0
    %921 = vmatprep.subr.mxu0 0.0
    %922 = vmatpush1.xpose.msra.mxu0 0.0
    %923 = vmatprep.subr.mxu0 0.0
    %924 = vmatpush1.xpose.msra.mxu0 0.0
    %925 = vmatprep.subr.mxu0 0.0
    %926 = vmatpush1.xpose.msra.mxu0 0.0
    %927 = vmatprep.subr.mxu0 0.0
    %928 = vmatpush1.xpose.msra.mxu0 0.0
    %929 = vmatprep.mubr.f32.mxu0 0.0
    %930 = vmatmul.mubr.f32.gmra.mrb[0].mxu0 %v857
    %v931 = vpop.f32.mrb[0].mxu0
    %v932 = vadd.f32 0.0, %v931
    %v933 = vpop.f32.mrb[0].mxu0
    %934 = vmatprep.mubr.f32.mxu0 0.0
    %935 = vmatmul.mubr.f32.gmra.mrb[0].mxu0 %v859
    %v936 = vpop.f32.mrb[0].mxu0
    %v937 = vadd.f32 0.0, %v936
    %v938 = vpop.f32.mrb[0].mxu0
    %939 = vdwg.mxu0
    %v940 = vmul.f32 %v932, 0.35355338
    %v941 = vmul.f32 %v937, 0.35355338
    %v942 = vadd.f32 %v940, %v338
    %v943 = vadd.f32 %v941, %v339
    %v944 = vsel %vm745, %v942, -inf
    %945 = vmax.xlane.f32.xlu0 %v944
    %v946 = vpop.xlane.xlu0 %945
    %v947 = vsel %vm745, %v943, -inf
    %948 = vmax.xlane.f32.xlu0 %v947
    %v949 = vpop.xlane.xlu0 %948
    %v950 = vsub.f32 %v942, %v946
    %v951 = vsub.f32 %v943, %v949
    %v952 = vmul.f32 %v950, 1.442695
    %v953 = vpow.pop %v952
    %v954 = vmul.f32 %v951, 1.442695
    %v955 = vpow.pop %v954
    %v956 = vsel %vm745, %v953, 0.0
    %957 = vadd.xlane.f32.xlu0 %v956
    %v958 = vpop.xlane.xlu0 %957
    %v959 = vsel %vm745, %v955, 0.0
    %960 = vadd.xlane.f32.xlu0 %v959
    %v961 = vpop.xlane.xlu0 %960
    %v962 = vrcp.pop %v958
    %v963 = vrcp.pop %v961
    %v964 = vmul.f32 %v953, %v962
    %v965 = vmul.f32 %v955, %v963
    %968 = vrot.lane.b32.xlu0 %v641, 120
    %v969 = vpop.permute.xlu0 %968
    %970 = vrot.lane.b32.xlu0 %v646, 120
    %v971 = vpop.permute.xlu0 %970
    %v975 = vsel %vm745, %v964, 0
    %v978 = vsel %vm745, %v965, 0
    %980 = vmatprep.subr.mxu0 0.0
    %981 = vmatpush1.msra.mxu0 %v969
    %982 = vmatprep.subr.mxu0 0.0
    %983 = vmatpush1.msra.mxu0 %v971
    %984 = vmatprep.subr.mxu0 0.0
    %985 = vmatpush1.msra.mxu0 0.0
    %986 = vmatprep.subr.mxu0 0.0
    %987 = vmatpush1.msra.mxu0 0.0
    %988 = vmatprep.subr.mxu0 0.0
    %989 = vmatpush1.msra.mxu0 0.0
    %990 = vmatprep.subr.mxu0 0.0
    %991 = vmatpush1.msra.mxu0 0.0
    %992 = vmatprep.subr.mxu0 0.0
    %993 = vmatpush1.msra.mxu0 0.0
    %994 = vmatprep.subr.mxu0 0.0
    %995 = vmatpush1.msra.mxu0 0.0
    %996 = vmatprep.subr.mxu0 0.0
    %997 = vmatpush1.msra.mxu0 0.0
    %998 = vmatprep.subr.mxu0 0.0
    %999 = vmatpush1.msra.mxu0 0.0
    %1000 = vmatprep.subr.mxu0 0.0
    %1001 = vmatpush1.msra.mxu0 0.0
    %1002 = vmatprep.subr.mxu0 0.0
    %1003 = vmatpush1.msra.mxu0 0.0
    %1004 = vmatprep.subr.mxu0 0.0
    %1005 = vmatpush1.msra.mxu0 0.0
    %1006 = vmatprep.subr.mxu0 0.0
    %1007 = vmatpush1.msra.mxu0 0.0
    %1008 = vmatprep.subr.mxu0 0.0
    %1009 = vmatpush1.msra.mxu0 0.0
    %1010 = vmatprep.subr.mxu0 0.0
    %1011 = vmatpush1.msra.mxu0 0.0
    %1012 = vmatprep.subr.mxu0 0.0
    %1013 = vmatpush1.msra.mxu0 0.0
    %1014 = vmatprep.subr.mxu0 0.0
    %1015 = vmatpush1.msra.mxu0 0.0
    %1016 = vmatprep.subr.mxu0 0.0
    %1017 = vmatpush1.msra.mxu0 0.0
    %1018 = vmatprep.subr.mxu0 0.0
    %1019 = vmatpush1.msra.mxu0 0.0
    %1020 = vmatprep.subr.mxu0 0.0
    %1021 = vmatpush1.msra.mxu0 0.0
    %1022 = vmatprep.subr.mxu0 0.0
    %1023 = vmatpush1.msra.mxu0 0.0
    %1024 = vmatprep.subr.mxu0 0.0
    %1025 = vmatpush1.msra.mxu0 0.0
    %1026 = vmatprep.subr.mxu0 0.0
    %1027 = vmatpush1.msra.mxu0 0.0
    %1028 = vmatprep.subr.mxu0 0.0
    %1029 = vmatpush1.msra.mxu0 0.0
    %1030 = vmatprep.subr.mxu0 0.0
    %1031 = vmatpush1.msra.mxu0 0.0
    %1032 = vmatprep.subr.mxu0 0.0
    %1033 = vmatpush1.msra.mxu0 0.0
    %1034 = vmatprep.subr.mxu0 0.0
    %1035 = vmatpush1.msra.mxu0 0.0
    %1036 = vmatprep.subr.mxu0 0.0
    %1037 = vmatpush1.msra.mxu0 0.0
    %1038 = vmatprep.subr.mxu0 0.0
    %1039 = vmatpush1.msra.mxu0 0.0
    %1040 = vmatprep.subr.mxu0 0.0
    %1041 = vmatpush1.msra.mxu0 0.0
    %1042 = vmatprep.subr.mxu0 0.0
    %1043 = vmatpush1.msra.mxu0 0.0
    %1044 = vmatprep.mubr.f32.mxu0 0.0
    %1045 = vmatmul.mubr.f32.gmra.mrb[0].mxu0 %v975
    %v1046 = vpop.f32.mrb[0].mxu0
    %v1047 = vadd.f32 0.0, %v1046
    %v1048 = vpop.f32.mrb[0].mxu0
    %1049 = vmatprep.mubr.f32.mxu0 0.0
    %1050 = vmatmul.mubr.f32.gmra.mrb[0].mxu0 %v978
    %v1051 = vpop.f32.mrb[0].mxu0
    %v1052 = vadd.f32 0.0, %v1051
    %v1053 = vpop.f32.mrb[0].mxu0
    %1054 = vdwg.mxu0
    %v1056 = vsel %vm653, %v1047, 0
    %v1059 = vsel %vm653, %v1052, 0
    %1061 = vmatprep.subr.mxu0 0.0
    %1062 = vmatpush1.msra.mxu0 %v650
    %1063 = vmatprep.subr.mxu0 0.0
    %1064 = vmatpush1.msra.mxu0 0.0
    %1065 = vmatprep.subr.mxu0 0.0
    %1066 = vmatpush1.msra.mxu0 0.0
    %1067 = vmatprep.subr.mxu0 0.0
    %1068 = vmatpush1.msra.mxu0 0.0
    %1069 = vmatprep.subr.mxu0 0.0
    %1070 = vmatpush1.msra.mxu0 0.0
    %1071 = vmatprep.subr.mxu0 0.0
    %1072 = vmatpush1.msra.mxu0 0.0
    %1073 = vmatprep.subr.mxu0 0.0
    %1074 = vmatpush1.msra.mxu0 0.0
    %1075 = vmatprep.subr.mxu0 0.0
    %1076 = vmatpush1.msra.mxu0 0.0
    %1077 = vmatprep.subr.mxu0 0.0
    %1078 = vmatpush1.msra.mxu0 0.0
    %1079 = vmatprep.subr.mxu0 0.0
    %1080 = vmatpush1.msra.mxu0 0.0
    %1081 = vmatprep.subr.mxu0 0.0
    %1082 = vmatpush1.msra.mxu0 0.0
    %1083 = vmatprep.subr.mxu0 0.0
    %1084 = vmatpush1.msra.mxu0 0.0
    %1085 = vmatprep.subr.mxu0 0.0
    %1086 = vmatpush1.msra.mxu0 0.0
    %1087 = vmatprep.subr.mxu0 0.0
    %1088 = vmatpush1.msra.mxu0 0.0
    %1089 = vmatprep.subr.mxu0 0.0
    %1090 = vmatpush1.msra.mxu0 0.0
    %1091 = vmatprep.subr.mxu0 0.0
    %1092 = vmatpush1.msra.mxu0 0.0
    %1093 = vmatprep.subr.mxu0 0.0
    %1094 = vmatpush1.msra.mxu0 0.0
    %1095 = vmatprep.subr.mxu0 0.0
    %1096 = vmatpush1.msra.mxu0 0.0
    %1097 = vmatprep.subr.mxu0 0.0
    %1098 = vmatpush1.msra.mxu0 0.0
    %1099 = vmatprep.subr.mxu0 0.0
    %1100 = vmatpush1.msra.mxu0 0.0
    %1101 = vmatprep.subr.mxu0 0.0
    %1102 = vmatpush1.msra.mxu0 0.0
    %1103 = vmatprep.subr.mxu0 0.0
    %1104 = vmatpush1.msra.mxu0 0.0
    %1105 = vmatprep.subr.mxu0 0.0
    %1106 = vmatpush1.msra.mxu0 0.0
    %1107 = vmatprep.subr.mxu0 0.0
    %1108 = vmatpush1.msra.mxu0 0.0
    %1109 = vmatprep.subr.mxu0 0.0
    %1110 = vmatpush1.msra.mxu0 0.0
    %1111 = vmatprep.subr.mxu0 0.0
    %1112 = vmatpush1.msra.mxu0 0.0
    %1113 = vmatprep.subr.mxu0 0.0
    %1114 = vmatpush1.msra.mxu0 0.0
    %1115 = vmatprep.subr.mxu0 0.0
    %1116 = vmatpush1.msra.mxu0 0.0
    %1117 = vmatprep.subr.mxu0 0.0
    %1118 = vmatpush1.msra.mxu0 0.0
    %1119 = vmatprep.subr.mxu0 0.0
    %1120 = vmatpush1.msra.mxu0 0.0
    %1121 = vmatprep.subr.mxu0 0.0
    %1122 = vmatpush1.msra.mxu0 0.0
    %1123 = vmatprep.subr.mxu0 0.0
    %1124 = vmatpush1.msra.mxu0 0.0
    %1125 = vmatprep.mubr.f32.mxu0 0.0
    %1126 = vmatmul.mubr.f32.gmra.mrb[0].mxu0 %v1056
    %v1127 = vpop.f32.mrb[0].mxu0
    %v1128 = vadd.f32 0.0, %v1127
    %v1129 = vpop.f32.mrb[0].mxu0
    %1130 = vmatprep.mubr.f32.mxu0 0.0
    %1131 = vmatmul.mubr.f32.gmra.mrb[0].mxu0 %v1059
    %v1132 = vpop.f32.mrb[0].mxu0
    %v1133 = vadd.f32 0.0, %v1132
    %v1134 = vpop.f32.mrb[0].mxu0
    %1135 = vdwg.mxu0
    %v1137 = vsel %vm653, %v841, 0
    %v1140 = vsel %vm653, %v846, 0
    %1142 = vmatprep.subr.mxu0 0.0
    %1143 = vmatpush1.msra.mxu0 %v649
    %1144 = vmatprep.subr.mxu0 0.0
    %1145 = vmatpush1.msra.mxu0 0.0
    %1146 = vmatprep.subr.mxu0 0.0
    %1147 = vmatpush1.msra.mxu0 0.0
    %1148 = vmatprep.subr.mxu0 0.0
    %1149 = vmatpush1.msra.mxu0 0.0
    %1150 = vmatprep.subr.mxu0 0.0
    %1151 = vmatpush1.msra.mxu0 0.0
    %1152 = vmatprep.subr.mxu0 0.0
    %1153 = vmatpush1.msra.mxu0 0.0
    %1154 = vmatprep.subr.mxu0 0.0
    %1155 = vmatpush1.msra.mxu0 0.0
    %1156 = vmatprep.subr.mxu0 0.0
    %1157 = vmatpush1.msra.mxu0 0.0
    %1158 = vmatprep.subr.mxu0 0.0
    %1159 = vmatpush1.msra.mxu0 0.0
    %1160 = vmatprep.subr.mxu0 0.0
    %1161 = vmatpush1.msra.mxu0 0.0
    %1162 = vmatprep.subr.mxu0 0.0
    %1163 = vmatpush1.msra.mxu0 0.0
    %1164 = vmatprep.subr.mxu0 0.0
    %1165 = vmatpush1.msra.mxu0 0.0
    %1166 = vmatprep.subr.mxu0 0.0
    %1167 = vmatpush1.msra.mxu0 0.0
    %1168 = vmatprep.subr.mxu0 0.0
    %1169 = vmatpush1.msra.mxu0 0.0
    %1170 = vmatprep.subr.mxu0 0.0
    %1171 = vmatpush1.msra.mxu0 0.0
    %1172 = vmatprep.subr.mxu0 0.0
    %1173 = vmatpush1.msra.mxu0 0.0
    %1174 = vmatprep.subr.mxu0 0.0
    %1175 = vmatpush1.msra.mxu0 0.0
    %1176 = vmatprep.subr.mxu0 0.0
    %1177 = vmatpush1.msra.mxu0 0.0
    %1178 = vmatprep.subr.mxu0 0.0
    %1179 = vmatpush1.msra.mxu0 0.0
    %1180 = vmatprep.subr.mxu0 0.0
    %1181 = vmatpush1.msra.mxu0 0.0
    %1182 = vmatprep.subr.mxu0 0.0
    %1183 = vmatpush1.msra.mxu0 0.0
    %1184 = vmatprep.subr.mxu0 0.0
    %1185 = vmatpush1.msra.mxu0 0.0
    %1186 = vmatprep.subr.mxu0 0.0
    %1187 = vmatpush1.msra.mxu0 0.0
    %1188 = vmatprep.subr.mxu0 0.0
    %1189 = vmatpush1.msra.mxu0 0.0
    %1190 = vmatprep.subr.mxu0 0.0
    %1191 = vmatpush1.msra.mxu0 0.0
    %1192 = vmatprep.subr.mxu0 0.0
    %1193 = vmatpush1.msra.mxu0 0.0
    %1194 = vmatprep.subr.mxu0 0.0
    %1195 = vmatpush1.msra.mxu0 0.0
    %1196 = vmatprep.subr.mxu0 0.0
    %1197 = vmatpush1.msra.mxu0 0.0
    %1198 = vmatprep.subr.mxu0 0.0
    %1199 = vmatpush1.msra.mxu0 0.0
    %1200 = vmatprep.subr.mxu0 0.0
    %1201 = vmatpush1.msra.mxu0 0.0
    %1202 = vmatprep.subr.mxu0 0.0
    %1203 = vmatpush1.msra.mxu0 0.0
    %1204 = vmatprep.subr.mxu0 0.0
    %1205 = vmatpush1.msra.mxu0 0.0
    %1206 = vmatprep.mubr.f32.mxu0 0.0
    %1207 = vmatmul.mubr.f32.gmra.mrb[0].mxu0 %v1137
    %v1208 = vpop.f32.mrb[0].mxu0
    %v1209 = vadd.f32 %v1128, %v1208
    %v1210 = vpop.f32.mrb[0].mxu0
    %1211 = vmatprep.mubr.f32.mxu0 0.0
    %1212 = vmatmul.mubr.f32.gmra.mrb[0].mxu0 %v1140
    %v1213 = vpop.f32.mrb[0].mxu0
    %v1214 = vadd.f32 %v1133, %v1213
    %v1215 = vpop.f32.mrb[0].mxu0
    %1216 = vdwg.mxu0
    %1217 = vrot.lane.b32.xlu0 %v469, 112
    %v1218 = vpop.permute.xlu0 %1217
    %1219 = vrot.lane.b32.xlu0 %v474, 112
    %v1220 = vpop.permute.xlu0 %1219
    %1221 = vrot.lane.b32.xlu0 %v555, 112
    %v1222 = vpop.permute.xlu0 %1221
    %1223 = vrot.lane.b32.xlu0 %v560, 112
    %v1224 = vpop.permute.xlu0 %1223
    %v1225 = vsel %vm653, %v1218, 0
    %v1227 = vsel %vm653, %v1220, 0
    %v1229 = vsel %vm653, %v1222, 0
    %v1231 = vsel %vm653, %v1224, 0
    %1233 = vmatprep.subr.mxu0 0.0
    %1234 = vmatpush1.xpose.msra.mxu0 %v1229
    %1235 = vmatprep.subr.mxu0 0.0
    %1236 = vmatpush1.xpose.msra.mxu0 %v1231
    %1237 = vmatprep.subr.mxu0 0.0
    %1238 = vmatpush1.xpose.msra.mxu0 0.0
    %1239 = vmatprep.subr.mxu0 0.0
    %1240 = vmatpush1.xpose.msra.mxu0 0.0
    %1241 = vmatprep.subr.mxu0 0.0
    %1242 = vmatpush1.xpose.msra.mxu0 0.0
    %1243 = vmatprep.subr.mxu0 0.0
    %1244 = vmatpush1.xpose.msra.mxu0 0.0
    %1245 = vmatprep.subr.mxu0 0.0
    %1246 = vmatpush1.xpose.msra.mxu0 0.0
    %1247 = vmatprep.subr.mxu0 0.0
    %1248 = vmatpush1.xpose.msra.mxu0 0.0
    %1249 = vmatprep.subr.mxu0 0.0
    %1250 = vmatpush1.xpose.msra.mxu0 0.0
    %1251 = vmatprep.subr.mxu0 0.0
    %1252 = vmatpush1.xpose.msra.mxu0 0.0
    %1253 = vmatprep.subr.mxu0 0.0
    %1254 = vmatpush1.xpose.msra.mxu0 0.0
    %1255 = vmatprep.subr.mxu0 0.0
    %1256 = vmatpush1.xpose.msra.mxu0 0.0
    %1257 = vmatprep.subr.mxu0 0.0
    %1258 = vmatpush1.xpose.msra.mxu0 0.0
    %1259 = vmatprep.subr.mxu0 0.0
    %1260 = vmatpush1.xpose.msra.mxu0 0.0
    %1261 = vmatprep.subr.mxu0 0.0
    %1262 = vmatpush1.xpose.msra.mxu0 0.0
    %1263 = vmatprep.subr.mxu0 0.0
    %1264 = vmatpush1.xpose.msra.mxu0 0.0
    %1265 = vmatprep.subr.mxu0 0.0
    %1266 = vmatpush1.xpose.msra.mxu0 0.0
    %1267 = vmatprep.subr.mxu0 0.0
    %1268 = vmatpush1.xpose.msra.mxu0 0.0
    %1269 = vmatprep.subr.mxu0 0.0
    %1270 = vmatpush1.xpose.msra.mxu0 0.0
    %1271 = vmatprep.subr.mxu0 0.0
    %1272 = vmatpush1.xpose.msra.mxu0 0.0
    %1273 = vmatprep.subr.mxu0 0.0
    %1274 = vmatpush1.xpose.msra.mxu0 0.0
    %1275 = vmatprep.subr.mxu0 0.0
    %1276 = vmatpush1.xpose.msra.mxu0 0.0
    %1277 = vmatprep.subr.mxu0 0.0
    %1278 = vmatpush1.xpose.msra.mxu0 0.0
    %1279 = vmatprep.subr.mxu0 0.0
    %1280 = vmatpush1.xpose.msra.mxu0 0.0
    %1281 = vmatprep.subr.mxu0 0.0
    %1282 = vmatpush1.xpose.msra.mxu0 0.0
    %1283 = vmatprep.subr.mxu0 0.0
    %1284 = vmatpush1.xpose.msra.mxu0 0.0
    %1285 = vmatprep.subr.mxu0 0.0
    %1286 = vmatpush1.xpose.msra.mxu0 0.0
    %1287 = vmatprep.subr.mxu0 0.0
    %1288 = vmatpush1.xpose.msra.mxu0 0.0
    %1289 = vmatprep.subr.mxu0 0.0
    %1290 = vmatpush1.xpose.msra.mxu0 0.0
    %1291 = vmatprep.subr.mxu0 0.0
    %1292 = vmatpush1.xpose.msra.mxu0 0.0
    %1293 = vmatprep.subr.mxu0 0.0
    %1294 = vmatpush1.xpose.msra.mxu0 0.0
    %1295 = vmatprep.subr.mxu0 0.0
    %1296 = vmatpush1.xpose.msra.mxu0 0.0
    %1297 = vmatprep.mubr.f32.mxu0 0.0
    %1298 = vmatmul.mubr.f32.gmra.mrb[0].mxu0 %v1225
    %v1299 = vpop.f32.mrb[0].mxu0
    %v1300 = vadd.f32 0.0, %v1299
    %v1301 = vpop.f32.mrb[0].mxu0
    %1302 = vmatprep.mubr.f32.mxu0 0.0
    %1303 = vmatmul.mubr.f32.gmra.mrb[0].mxu0 %v1227
    %v1304 = vpop.f32.mrb[0].mxu0
    %v1305 = vadd.f32 0.0, %v1304
    %v1306 = vpop.f32.mrb[0].mxu0
    %1307 = vdwg.mxu0
    %v1308 = vmul.f32 %v1300, 0.35355338
    %v1309 = vmul.f32 %v1305, 0.35355338
    %v1310 = vadd.f32 %v1308, %v338
    %v1311 = vadd.f32 %v1309, %v339
    %v1312 = vsel %vm745, %v1310, -inf
    %1313 = vmax.xlane.f32.xlu0 %v1312
    %v1314 = vpop.xlane.xlu0 %1313
    %v1315 = vsel %vm745, %v1311, -inf
    %1316 = vmax.xlane.f32.xlu0 %v1315
    %v1317 = vpop.xlane.xlu0 %1316
    %v1318 = vsub.f32 %v1310, %v1314
    %v1319 = vsub.f32 %v1311, %v1317
    %v1320 = vmul.f32 %v1318, 1.442695
    %v1321 = vpow.pop %v1320
    %v1322 = vmul.f32 %v1319, 1.442695
    %v1323 = vpow.pop %v1322
    %v1324 = vsel %vm745, %v1321, 0.0
    %1325 = vadd.xlane.f32.xlu0 %v1324
    %v1326 = vpop.xlane.xlu0 %1325
    %v1327 = vsel %vm745, %v1323, 0.0
    %1328 = vadd.xlane.f32.xlu0 %v1327
    %v1329 = vpop.xlane.xlu0 %1328
    %v1330 = vrcp.pop %v1326
    %v1331 = vrcp.pop %v1329
    %v1332 = vmul.f32 %v1321, %v1330
    %v1333 = vmul.f32 %v1323, %v1331
    %1334 = vrot.lane.b32.xlu0 %v641, 112
    %v1335 = vpop.permute.xlu0 %1334
    %1336 = vrot.lane.b32.xlu0 %v646, 112
    %v1337 = vpop.permute.xlu0 %1336
    %v1341 = vsel %vm745, %v1332, 0
    %v1344 = vsel %vm745, %v1333, 0
    %1346 = vmatprep.subr.mxu0 0.0
    %1347 = vmatpush1.msra.mxu0 %v1335
    %1348 = vmatprep.subr.mxu0 0.0
    %1349 = vmatpush1.msra.mxu0 %v1337
    %1350 = vmatprep.subr.mxu0 0.0
    %1351 = vmatpush1.msra.mxu0 0.0
    %1352 = vmatprep.subr.mxu0 0.0
    %1353 = vmatpush1.msra.mxu0 0.0
    %1354 = vmatprep.subr.mxu0 0.0
    %1355 = vmatpush1.msra.mxu0 0.0
    %1356 = vmatprep.subr.mxu0 0.0
    %1357 = vmatpush1.msra.mxu0 0.0
    %1358 = vmatprep.subr.mxu0 0.0
    %1359 = vmatpush1.msra.mxu0 0.0
    %1360 = vmatprep.subr.mxu0 0.0
    %1361 = vmatpush1.msra.mxu0 0.0
    %1362 = vmatprep.subr.mxu0 0.0
    %1363 = vmatpush1.msra.mxu0 0.0
    %1364 = vmatprep.subr.mxu0 0.0
    %1365 = vmatpush1.msra.mxu0 0.0
    %1366 = vmatprep.subr.mxu0 0.0
    %1367 = vmatpush1.msra.mxu0 0.0
    %1368 = vmatprep.subr.mxu0 0.0
    %1369 = vmatpush1.msra.mxu0 0.0
    %1370 = vmatprep.subr.mxu0 0.0
    %1371 = vmatpush1.msra.mxu0 0.0
    %1372 = vmatprep.subr.mxu0 0.0
    %1373 = vmatpush1.msra.mxu0 0.0
    %1374 = vmatprep.subr.mxu0 0.0
    %1375 = vmatpush1.msra.mxu0 0.0
    %1376 = vmatprep.subr.mxu0 0.0
    %1377 = vmatpush1.msra.mxu0 0.0
    %1378 = vmatprep.subr.mxu0 0.0
    %1379 = vmatpush1.msra.mxu0 0.0
    %1380 = vmatprep.subr.mxu0 0.0
    %1381 = vmatpush1.msra.mxu0 0.0
    %1382 = vmatprep.subr.mxu0 0.0
    %1383 = vmatpush1.msra.mxu0 0.0
    %1384 = vmatprep.subr.mxu0 0.0
    %1385 = vmatpush1.msra.mxu0 0.0
    %1386 = vmatprep.subr.mxu0 0.0
    %1387 = vmatpush1.msra.mxu0 0.0
    %1388 = vmatprep.subr.mxu0 0.0
    %1389 = vmatpush1.msra.mxu0 0.0
    %1390 = vmatprep.subr.mxu0 0.0
    %1391 = vmatpush1.msra.mxu0 0.0
    %1392 = vmatprep.subr.mxu0 0.0
    %1393 = vmatpush1.msra.mxu0 0.0
    %1394 = vmatprep.subr.mxu0 0.0
    %1395 = vmatpush1.msra.mxu0 0.0
    %1396 = vmatprep.subr.mxu0 0.0
    %1397 = vmatpush1.msra.mxu0 0.0
    %1398 = vmatprep.subr.mxu0 0.0
    %1399 = vmatpush1.msra.mxu0 0.0
    %1400 = vmatprep.subr.mxu0 0.0
    %1401 = vmatpush1.msra.mxu0 0.0
    %1402 = vmatprep.subr.mxu0 0.0
    %1403 = vmatpush1.msra.mxu0 0.0
    %1404 = vmatprep.subr.mxu0 0.0
    %1405 = vmatpush1.msra.mxu0 0.0
    %1406 = vmatprep.subr.mxu0 0.0
    %1407 = vmatpush1.msra.mxu0 0.0
    %1408 = vmatprep.subr.mxu0 0.0
    %1409 = vmatpush1.msra.mxu0 0.0
    %1410 = vmatprep.mubr.f32.mxu0 0.0
    %1411 = vmatmul.mubr.f32.gmra.mrb[0].mxu0 %v1341
    %v1412 = vpop.f32.mrb[0].mxu0
    %v1413 = vadd.f32 0.0, %v1412
    %v1414 = vpop.f32.mrb[0].mxu0
    %1415 = vmatprep.mubr.f32.mxu0 0.0
    %1416 = vmatmul.mubr.f32.gmra.mrb[0].mxu0 %v1344
    %v1417 = vpop.f32.mrb[0].mxu0
    %v1418 = vadd.f32 0.0, %v1417
    %v1419 = vpop.f32.mrb[0].mxu0
    %1420 = vdwg.mxu0
    %v1422 = vsel %vm653, %v1413, 0
    %v1425 = vsel %vm653, %v1418, 0
    %1427 = vmatprep.subr.mxu0 0.0
    %1428 = vmatpush1.msra.mxu0 %v651
    %1429 = vmatprep.subr.mxu0 0.0
    %1430 = vmatpush1.msra.mxu0 0.0
    %1431 = vmatprep.subr.mxu0 0.0
    %1432 = vmatpush1.msra.mxu0 0.0
    %1433 = vmatprep.subr.mxu0 0.0
    %1434 = vmatpush1.msra.mxu0 0.0
    %1435 = vmatprep.subr.mxu0 0.0
    %1436 = vmatpush1.msra.mxu0 0.0
    %1437 = vmatprep.subr.mxu0 0.0
    %1438 = vmatpush1.msra.mxu0 0.0
    %1439 = vmatprep.subr.mxu0 0.0
    %1440 = vmatpush1.msra.mxu0 0.0
    %1441 = vmatprep.subr.mxu0 0.0
    %1442 = vmatpush1.msra.mxu0 0.0
    %1443 = vmatprep.subr.mxu0 0.0
    %1444 = vmatpush1.msra.mxu0 0.0
    %1445 = vmatprep.subr.mxu0 0.0
    %1446 = vmatpush1.msra.mxu0 0.0
    %1447 = vmatprep.subr.mxu0 0.0
    %1448 = vmatpush1.msra.mxu0 0.0
    %1449 = vmatprep.subr.mxu0 0.0
    %1450 = vmatpush1.msra.mxu0 0.0
    %1451 = vmatprep.subr.mxu0 0.0
    %1452 = vmatpush1.msra.mxu0 0.0
    %1453 = vmatprep.subr.mxu0 0.0
    %1454 = vmatpush1.msra.mxu0 0.0
    %1455 = vmatprep.subr.mxu0 0.0
    %1456 = vmatpush1.msra.mxu0 0.0
    %1457 = vmatprep.subr.mxu0 0.0
    %1458 = vmatpush1.msra.mxu0 0.0
    %1459 = vmatprep.subr.mxu0 0.0
    %1460 = vmatpush1.msra.mxu0 0.0
    %1461 = vmatprep.subr.mxu0 0.0
    %1462 = vmatpush1.msra.mxu0 0.0
    %1463 = vmatprep.subr.mxu0 0.0
    %1464 = vmatpush1.msra.mxu0 0.0
    %1465 = vmatprep.subr.mxu0 0.0
    %1466 = vmatpush1.msra.mxu0 0.0
    %1467 = vmatprep.subr.mxu0 0.0
    %1468 = vmatpush1.msra.mxu0 0.0
    %1469 = vmatprep.subr.mxu0 0.0
    %1470 = vmatpush1.msra.mxu0 0.0
    %1471 = vmatprep.subr.mxu0 0.0
    %1472 = vmatpush1.msra.mxu0 0.0
    %1473 = vmatprep.subr.mxu0 0.0
    %1474 = vmatpush1.msra.mxu0 0.0
    %1475 = vmatprep.subr.mxu0 0.0
    %1476 = vmatpush1.msra.mxu0 0.0
    %1477 = vmatprep.subr.mxu0 0.0
    %1478 = vmatpush1.msra.mxu0 0.0
    %1479 = vmatprep.subr.mxu0 0.0
    %1480 = vmatpush1.msra.mxu0 0.0
    %1481 = vmatprep.subr.mxu0 0.0
    %1482 = vmatpush1.msra.mxu0 0.0
    %1483 = vmatprep.subr.mxu0 0.0
    %1484 = vmatpush1.msra.mxu0 0.0
    %1485 = vmatprep.subr.mxu0 0.0
    %1486 = vmatpush1.msra.mxu0 0.0
    %1487 = vmatprep.subr.mxu0 0.0
    %1488 = vmatpush1.msra.mxu0 0.0
    %1489 = vmatprep.subr.mxu0 0.0
    %1490 = vmatpush1.msra.mxu0 0.0
    %1491 = vmatprep.mubr.f32.mxu0 0.0
    %1492 = vmatmul.mubr.f32.gmra.mrb[0].mxu0 %v1422
    %v1493 = vpop.f32.mrb[0].mxu0
    %v1494 = vadd.f32 0.0, %v1493
    %v1495 = vpop.f32.mrb[0].mxu0
    %1496 = vmatprep.mubr.f32.mxu0 0.0
    %1497 = vmatmul.mubr.f32.gmra.mrb[0].mxu0 %v1425
    %v1498 = vpop.f32.mrb[0].mxu0
    %v1499 = vadd.f32 0.0, %v1498
    %v1500 = vpop.f32.mrb[0].mxu0
    %1501 = vdwg.mxu0
    %v1502 = vadd.f32 %v1209, %v1494
    %v1503 = vadd.f32 %v1214, %v1499
    %1504 = vrot.lane.b32.xlu0 %v469, 104
    %v1505 = vpop.permute.xlu0 %1504
    %1506 = vrot.lane.b32.xlu0 %v474, 104
    %v1507 = vpop.permute.xlu0 %1506
    %1508 = vrot.lane.b32.xlu0 %v555, 104
    %v1509 = vpop.permute.xlu0 %1508
    %1510 = vrot.lane.b32.xlu0 %v560, 104
    %v1511 = vpop.permute.xlu0 %1510
    %v1512 = vsel %vm653, %v1505, 0
    %v1514 = vsel %vm653, %v1507, 0
    %v1516 = vsel %vm653, %v1509, 0
    %v1518 = vsel %vm653, %v1511, 0
    %1520 = vmatprep.subr.mxu0 0.0
    %1521 = vmatpush1.xpose.msra.mxu0 %v1516
    %1522 = vmatprep.subr.mxu0 0.0
    %1523 = vmatpush1.xpose.msra.mxu0 %v1518
    %1524 = vmatprep.subr.mxu0 0.0
    %1525 = vmatpush1.xpose.msra.mxu0 0.0
    %1526 = vmatprep.subr.mxu0 0.0
    %1527 = vmatpush1.xpose.msra.mxu0 0.0
    %1528 = vmatprep.subr.mxu0 0.0
    %1529 = vmatpush1.xpose.msra.mxu0 0.0
    %1530 = vmatprep.subr.mxu0 0.0
    %1531 = vmatpush1.xpose.msra.mxu0 0.0
    %1532 = vmatprep.subr.mxu0 0.0
    %1533 = vmatpush1.xpose.msra.mxu0 0.0
    %1534 = vmatprep.subr.mxu0 0.0
    %1535 = vmatpush1.xpose.msra.mxu0 0.0
    %1536 = vmatprep.subr.mxu0 0.0
    %1537 = vmatpush1.xpose.msra.mxu0 0.0
    %1538 = vmatprep.subr.mxu0 0.0
    %1539 = vmatpush1.xpose.msra.mxu0 0.0
    %1540 = vmatprep.subr.mxu0 0.0
    %1541 = vmatpush1.xpose.msra.mxu0 0.0
    %1542 = vmatprep.subr.mxu0 0.0
    %1543 = vmatpush1.xpose.msra.mxu0 0.0
    %1544 = vmatprep.subr.mxu0 0.0
    %1545 = vmatpush1.xpose.msra.mxu0 0.0
    %1546 = vmatprep.subr.mxu0 0.0
    %1547 = vmatpush1.xpose.msra.mxu0 0.0
    %1548 = vmatprep.subr.mxu0 0.0
    %1549 = vmatpush1.xpose.msra.mxu0 0.0
    %1550 = vmatprep.subr.mxu0 0.0
    %1551 = vmatpush1.xpose.msra.mxu0 0.0
    %1552 = vmatprep.subr.mxu0 0.0
    %1553 = vmatpush1.xpose.msra.mxu0 0.0
    %1554 = vmatprep.subr.mxu0 0.0
    %1555 = vmatpush1.xpose.msra.mxu0 0.0
    %1556 = vmatprep.subr.mxu0 0.0
    %1557 = vmatpush1.xpose.msra.mxu0 0.0
    %1558 = vmatprep.subr.mxu0 0.0
    %1559 = vmatpush1.xpose.msra.mxu0 0.0
    %1560 = vmatprep.subr.mxu0 0.0
    %1561 = vmatpush1.xpose.msra.mxu0 0.0
    %1562 = vmatprep.subr.mxu0 0.0
    %1563 = vmatpush1.xpose.msra.mxu0 0.0
    %1564 = vmatprep.subr.mxu0 0.0
    %1565 = vmatpush1.xpose.msra.mxu0 0.0
    %1566 = vmatprep.subr.mxu0 0.0
    %1567 = vmatpush1.xpose.msra.mxu0 0.0
    %1568 = vmatprep.subr.mxu0 0.0
    %1569 = vmatpush1.xpose.msra.mxu0 0.0
    %1570 = vmatprep.subr.mxu0 0.0
    %1571 = vmatpush1.xpose.msra.mxu0 0.0
    %1572 = vmatprep.subr.mxu0 0.0
    %1573 = vmatpush1.xpose.msra.mxu0 0.0
    %1574 = vmatprep.subr.mxu0 0.0
    %1575 = vmatpush1.xpose.msra.mxu0 0.0
    %1576 = vmatprep.subr.mxu0 0.0
    %1577 = vmatpush1.xpose.msra.mxu0 0.0
    %1578 = vmatprep.subr.mxu0 0.0
    %1579 = vmatpush1.xpose.msra.mxu0 0.0
    %1580 = vmatprep.subr.mxu0 0.0
    %1581 = vmatpush1.xpose.msra.mxu0 0.0
    %1582 = vmatprep.subr.mxu0 0.0
    %1583 = vmatpush1.xpose.msra.mxu0 0.0
    %1584 = vmatprep.mubr.f32.mxu0 0.0
    %1585 = vmatmul.mubr.f32.gmra.mrb[0].mxu0 %v1512
    %v1586 = vpop.f32.mrb[0].mxu0
    %v1587 = vadd.f32 0.0, %v1586
    %v1588 = vpop.f32.mrb[0].mxu0
    %1589 = vmatprep.mubr.f32.mxu0 0.0
    %1590 = vmatmul.mubr.f32.gmra.mrb[0].mxu0 %v1514
    %v1591 = vpop.f32.mrb[0].mxu0
    %v1592 = vadd.f32 0.0, %v1591
    %v1593 = vpop.f32.mrb[0].mxu0
    %1594 = vdwg.mxu0
    %v1595 = vmul.f32 %v1587, 0.35355338
    %v1596 = vmul.f32 %v1592, 0.35355338
    %v1597 = vadd.f32 %v1595, %v338
    %v1598 = vadd.f32 %v1596, %v339
    %v1599 = vsel %vm745, %v1597, -inf
    %1600 = vmax.xlane.f32.xlu0 %v1599
    %v1601 = vpop.xlane.xlu0 %1600
    %v1602 = vsel %vm745, %v1598, -inf
    %1603 = vmax.xlane.f32.xlu0 %v1602
    %v1604 = vpop.xlane.xlu0 %1603
    %v1605 = vsub.f32 %v1597, %v1601
    %v1606 = vsub.f32 %v1598, %v1604
    %v1607 = vmul.f32 %v1605, 1.442695
    %v1608 = vpow.pop %v1607
    %v1609 = vmul.f32 %v1606, 1.442695
    %v1610 = vpow.pop %v1609
    %v1611 = vsel %vm745, %v1608, 0.0
    %1612 = vadd.xlane.f32.xlu0 %v1611
    %v1613 = vpop.xlane.xlu0 %1612
    %v1614 = vsel %vm745, %v1610, 0.0
    %1615 = vadd.xlane.f32.xlu0 %v1614
    %v1616 = vpop.xlane.xlu0 %1615
    %v1617 = vrcp.pop %v1613
    %v1618 = vrcp.pop %v1616
    %v1619 = vmul.f32 %v1608, %v1617
    %v1620 = vmul.f32 %v1610, %v1618
    %1621 = vrot.lane.b32.xlu0 %v641, 104
    %v1622 = vpop.permute.xlu0 %1621
    %1623 = vrot.lane.b32.xlu0 %v646, 104
    %v1624 = vpop.permute.xlu0 %1623
    %v1628 = vsel %vm745, %v1619, 0
    %v1631 = vsel %vm745, %v1620, 0
    %1633 = vmatprep.subr.mxu0 0.0
    %1634 = vmatpush1.msra.mxu0 %v1622
    %1635 = vmatprep.subr.mxu0 0.0
    %1636 = vmatpush1.msra.mxu0 %v1624
    %1637 = vmatprep.subr.mxu0 0.0
    %1638 = vmatpush1.msra.mxu0 0.0
    %1639 = vmatprep.subr.mxu0 0.0
    %1640 = vmatpush1.msra.mxu0 0.0
    %1641 = vmatprep.subr.mxu0 0.0
    %1642 = vmatpush1.msra.mxu0 0.0
    %1643 = vmatprep.subr.mxu0 0.0
    %1644 = vmatpush1.msra.mxu0 0.0
    %1645 = vmatprep.subr.mxu0 0.0
    %1646 = vmatpush1.msra.mxu0 0.0
    %1647 = vmatprep.subr.mxu0 0.0
    %1648 = vmatpush1.msra.mxu0 0.0
    %1649 = vmatprep.subr.mxu0 0.0
    %1650 = vmatpush1.msra.mxu0 0.0
    %1651 = vmatprep.subr.mxu0 0.0
    %1652 = vmatpush1.msra.mxu0 0.0
    %1653 = vmatprep.subr.mxu0 0.0
    %1654 = vmatpush1.msra.mxu0 0.0
    %1655 = vmatprep.subr.mxu0 0.0
    %1656 = vmatpush1.msra.mxu0 0.0
    %1657 = vmatprep.subr.mxu0 0.0
    %1658 = vmatpush1.msra.mxu0 0.0
    %1659 = vmatprep.subr.mxu0 0.0
    %1660 = vmatpush1.msra.mxu0 0.0
    %1661 = vmatprep.subr.mxu0 0.0
    %1662 = vmatpush1.msra.mxu0 0.0
    %1663 = vmatprep.subr.mxu0 0.0
    %1664 = vmatpush1.msra.mxu0 0.0
    %1665 = vmatprep.subr.mxu0 0.0
    %1666 = vmatpush1.msra.mxu0 0.0
    %1667 = vmatprep.subr.mxu0 0.0
    %1668 = vmatpush1.msra.mxu0 0.0
    %1669 = vmatprep.subr.mxu0 0.0
    %1670 = vmatpush1.msra.mxu0 0.0
    %1671 = vmatprep.subr.mxu0 0.0
    %1672 = vmatpush1.msra.mxu0 0.0
    %1673 = vmatprep.subr.mxu0 0.0
    %1674 = vmatpush1.msra.mxu0 0.0
    %1675 = vmatprep.subr.mxu0 0.0
    %1676 = vmatpush1.msra.mxu0 0.0
    %1677 = vmatprep.subr.mxu0 0.0
    %1678 = vmatpush1.msra.mxu0 0.0
    %1679 = vmatprep.subr.mxu0 0.0
    %1680 = vmatpush1.msra.mxu0 0.0
    %1681 = vmatprep.subr.mxu0 0.0
    %1682 = vmatpush1.msra.mxu0 0.0
    %1683 = vmatprep.subr.mxu0 0.0
    %1684 = vmatpush1.msra.mxu0 0.0
    %1685 = vmatprep.subr.mxu0 0.0
    %1686 = vmatpush1.msra.mxu0 0.0
    %1687 = vmatprep.subr.mxu0 0.0
    %1688 = vmatpush1.msra.mxu0 0.0
    %1689 = vmatprep.subr.mxu0 0.0
    %1690 = vmatpush1.msra.mxu0 0.0
    %1691 = vmatprep.subr.mxu0 0.0
    %1692 = vmatpush1.msra.mxu0 0.0
    %1693 = vmatprep.subr.mxu0 0.0
    %1694 = vmatpush1.msra.mxu0 0.0
    %1695 = vmatprep.subr.mxu0 0.0
    %1696 = vmatpush1.msra.mxu0 0.0
    %1697 = vmatprep.mubr.f32.mxu0 0.0
    %1698 = vmatmul.mubr.f32.gmra.mrb[0].mxu0 %v1628
    %v1699 = vpop.f32.mrb[0].mxu0
    %v1700 = vadd.f32 0.0, %v1699
    %v1701 = vpop.f32.mrb[0].mxu0
    %1702 = vmatprep.mubr.f32.mxu0 0.0
    %1703 = vmatmul.mubr.f32.gmra.mrb[0].mxu0 %v1631
    %v1704 = vpop.f32.mrb[0].mxu0
    %v1705 = vadd.f32 0.0, %v1704
    %v1706 = vpop.f32.mrb[0].mxu0
    %1707 = vdwg.mxu0
    %v1709 = vsel %vm653, %v1700, 0
    %v1712 = vsel %vm653, %v1705, 0
    %1714 = vmatprep.subr.mxu0 0.0
    %1715 = vmatpush1.msra.mxu0 %v652
    %1716 = vmatprep.subr.mxu0 0.0
    %1717 = vmatpush1.msra.mxu0 0.0
    %1718 = vmatprep.subr.mxu0 0.0
    %1719 = vmatpush1.msra.mxu0 0.0
    %1720 = vmatprep.subr.mxu0 0.0
    %1721 = vmatpush1.msra.mxu0 0.0
    %1722 = vmatprep.subr.mxu0 0.0
    %1723 = vmatpush1.msra.mxu0 0.0
    %1724 = vmatprep.subr.mxu0 0.0
    %1725 = vmatpush1.msra.mxu0 0.0
    %1726 = vmatprep.subr.mxu0 0.0
    %1727 = vmatpush1.msra.mxu0 0.0
    %1728 = vmatprep.subr.mxu0 0.0
    %1729 = vmatpush1.msra.mxu0 0.0
    %1730 = vmatprep.subr.mxu0 0.0
    %1731 = vmatpush1.msra.mxu0 0.0
    %1732 = vmatprep.subr.mxu0 0.0
    %1733 = vmatpush1.msra.mxu0 0.0
    %1734 = vmatprep.subr.mxu0 0.0
    %1735 = vmatpush1.msra.mxu0 0.0
    %1736 = vmatprep.subr.mxu0 0.0
    %1737 = vmatpush1.msra.mxu0 0.0
    %1738 = vmatprep.subr.mxu0 0.0
    %1739 = vmatpush1.msra.mxu0 0.0
    %1740 = vmatprep.subr.mxu0 0.0
    %1741 = vmatpush1.msra.mxu0 0.0
    %1742 = vmatprep.subr.mxu0 0.0
    %1743 = vmatpush1.msra.mxu0 0.0
    %1744 = vmatprep.subr.mxu0 0.0
    %1745 = vmatpush1.msra.mxu0 0.0
    %1746 = vmatprep.subr.mxu0 0.0
    %1747 = vmatpush1.msra.mxu0 0.0
    %1748 = vmatprep.subr.mxu0 0.0
    %1749 = vmatpush1.msra.mxu0 0.0
    %1750 = vmatprep.subr.mxu0 0.0
    %1751 = vmatpush1.msra.mxu0 0.0
    %1752 = vmatprep.subr.mxu0 0.0
    %1753 = vmatpush1.msra.mxu0 0.0
    %1754 = vmatprep.subr.mxu0 0.0
    %1755 = vmatpush1.msra.mxu0 0.0
    %1756 = vmatprep.subr.mxu0 0.0
    %1757 = vmatpush1.msra.mxu0 0.0
    %1758 = vmatprep.subr.mxu0 0.0
    %1759 = vmatpush1.msra.mxu0 0.0
    %1760 = vmatprep.subr.mxu0 0.0
    %1761 = vmatpush1.msra.mxu0 0.0
    %1762 = vmatprep.subr.mxu0 0.0
    %1763 = vmatpush1.msra.mxu0 0.0
    %1764 = vmatprep.subr.mxu0 0.0
    %1765 = vmatpush1.msra.mxu0 0.0
    %1766 = vmatprep.subr.mxu0 0.0
    %1767 = vmatpush1.msra.mxu0 0.0
    %1768 = vmatprep.subr.mxu0 0.0
    %1769 = vmatpush1.msra.mxu0 0.0
    %1770 = vmatprep.subr.mxu0 0.0
    %1771 = vmatpush1.msra.mxu0 0.0
    %1772 = vmatprep.subr.mxu0 0.0
    %1773 = vmatpush1.msra.mxu0 0.0
    %1774 = vmatprep.subr.mxu0 0.0
    %1775 = vmatpush1.msra.mxu0 0.0
    %1776 = vmatprep.subr.mxu0 0.0
    %1777 = vmatpush1.msra.mxu0 0.0
    %1778 = vmatprep.mubr.f32.mxu0 0.0
    %1779 = vmatmul.mubr.f32.gmra.mrb[0].mxu0 %v1709
    %v1780 = vpop.f32.mrb[0].mxu0
    %v1781 = vadd.f32 0.0, %v1780
    %v1782 = vpop.f32.mrb[0].mxu0
    %1783 = vmatprep.mubr.f32.mxu0 0.0
    %1784 = vmatmul.mubr.f32.gmra.mrb[0].mxu0 %v1712
    %v1785 = vpop.f32.mrb[0].mxu0
    %v1786 = vadd.f32 0.0, %v1785
    %v1787 = vpop.f32.mrb[0].mxu0
    %1788 = vdwg.mxu0
    %v1789 = vadd.f32 %v1502, %v1781
    %v1790 = vadd.f32 %v1503, %v1786
    %v1791 = vadd.f32 %v330, %v1789
    %v1792 = vadd.f32 %v335, %v1790
    %v1793 = vld [vmem:[#allocation13] sm:$0x1]
    %v1795 = vlaneseq
    %v1796 = vshrl.u32 %v1795, 7
    %v1797 = vsub.s32 0, %v1796
    %v1798 = vrot.slane %v1793, %v1797
    %v1800 = vadd.f32 %v1791, %v1798
    %v1801 = vadd.f32 %v1792, %v1798
    %v1802 = vld [vmem:[#allocation17] sm:$0x1]
    %v1803 = vld [vmem:[#allocation19] sm:$0x1]
    %v1804 = vsel %vm256, %v1800, 0.0
    %1805 = vadd.xlane.f32.xlu0 %v1804
    %v1806 = vpop.xlane.xlu0 %1805
    %v1807 = vsel %vm256, %v1801, 0.0
    %1808 = vadd.xlane.f32.xlu0 %v1807
    %v1809 = vpop.xlane.xlu0 %1808
    %v1810 = vmul.f32 %v1806, %v348
    %v1811 = vmul.f32 %v1809, %v348
    %v1812 = vsub.f32 %v1800, %v1810
    %v1813 = vsub.f32 %v1801, %v1811
    %v1814 = vmul.f32 %v1812, %v1812
    %v1815 = vmul.f32 %v1813, %v1813
    %v1816 = vsel %vm256, %v1814, 0.0
    %1817 = vadd.xlane.f32.xlu0 %v1816
    %v1818 = vpop.xlane.xlu0 %1817
    %v1819 = vsel %vm256, %v1815, 0.0
    %1820 = vadd.xlane.f32.xlu0 %v1819
    %v1821 = vpop.xlane.xlu0 %1820
    %v1822 = vmul.f32 %v1818, %v348
    %v1823 = vmul.f32 %v1821, %v348
    %v1824 = vadd.f32 %v1822, 1e-06
    %v1825 = vadd.f32 %v1823, 1e-06
    %v1826 = vrsqrt.pop %v1824
    %v1827 = vrsqrt.pop %v1825
    %v1828 = vmul.f32 %v1812, %v1826
    %v1829 = vmul.f32 %v1813, %v1827
    %v1831 = vlaneseq
    %v1832 = vshrl.u32 %v1831, 7
    %v1833 = vsub.s32 0, %v1832
    %v1834 = vrot.slane %v1802, %v1833
    %v1836 = vmul.f32 %v1828, %v1834
    %v1837 = vmul.f32 %v1829, %v1834
    %v1839 = vlaneseq
    %v1840 = vshrl.u32 %v1839, 7
    %v1841 = vsub.s32 0, %v1840
    %v1842 = vrot.slane %v1803, %v1841
    %v1844 = vadd.f32 %v1836, %v1842
    %v1845 = vadd.f32 %v1837, %v1842
    %v1846 = vld [vmem:[#allocation20] sm:$0xff]
    %v1847 = vld [vmem:[#allocation20 + $0x8] sm:$0xff]
    %v1848 = vld [vmem:[#allocation20 + $0x10] sm:$0xff]
    %v1849 = vld [vmem:[#allocation20 + $0x18] sm:$0xff]
    %v1850 = vld [vmem:[#allocation22] sm:$0x1]
    %v1852 = vlaneseq
    %v1853 = vshrl.u32 %v1852, 7
    %v1854 = vsub.s32 0, %v1853
    %v1855 = vrot.slane %v1850, %v1854
    %v1858 = vsel %vm256, %v1844, 0
    %v1861 = vsel %vm256, %v1845, 0
    %1863 = vmatprep.subr.mxu0 0.0
    %1864 = vmatpush1.msra.mxu0 %v1846
    %1865 = vmatprep.subr.mxu0 0.0
    %1866 = vmatpush1.msra.mxu0 %v1847
    %1867 = vmatprep.subr.mxu0 0.0
    %1868 = vmatpush1.msra.mxu0 %v1848
    %1869 = vmatprep.subr.mxu0 0.0
    %1870 = vmatpush1.msra.mxu0 %v1849
    %1871 = vmatprep.subr.mxu0 0.0
    %1872 = vmatpush1.msra.mxu0 0.0
    %1873 = vmatprep.subr.mxu0 0.0
    %1874 = vmatpush1.msra.mxu0 0.0
    %1875 = vmatprep.subr.mxu0 0.0
    %1876 = vmatpush1.msra.mxu0 0.0
    %1877 = vmatprep.subr.mxu0 0.0
    %1878 = vmatpush1.msra.mxu0 0.0
    %1879 = vmatprep.subr.mxu0 0.0
    %1880 = vmatpush1.msra.mxu0 0.0
    %1881 = vmatprep.subr.mxu0 0.0
    %1882 = vmatpush1.msra.mxu0 0.0
    %1883 = vmatprep.subr.mxu0 0.0
    %1884 = vmatpush1.msra.mxu0 0.0
    %1885 = vmatprep.subr.mxu0 0.0
    %1886 = vmatpush1.msra.mxu0 0.0
    %1887 = vmatprep.subr.mxu0 0.0
    %1888 = vmatpush1.msra.mxu0 0.0
    %1889 = vmatprep.subr.mxu0 0.0
    %1890 = vmatpush1.msra.mxu0 0.0
    %1891 = vmatprep.subr.mxu0 0.0
    %1892 = vmatpush1.msra.mxu0 0.0
    %1893 = vmatprep.subr.mxu0 0.0
    %1894 = vmatpush1.msra.mxu0 0.0
    %1895 = vmatprep.subr.mxu0 0.0
    %1896 = vmatpush1.msra.mxu0 0.0
    %1897 = vmatprep.subr.mxu0 0.0
    %1898 = vmatpush1.msra.mxu0 0.0
    %1899 = vmatprep.subr.mxu0 0.0
    %1900 = vmatpush1.msra.mxu0 0.0
    %1901 = vmatprep.subr.mxu0 0.0
    %1902 = vmatpush1.msra.mxu0 0.0
    %1903 = vmatprep.subr.mxu0 0.0
    %1904 = vmatpush1.msra.mxu0 0.0
    %1905 = vmatprep.subr.mxu0 0.0
    %1906 = vmatpush1.msra.mxu0 0.0
    %1907 = vmatprep.subr.mxu0 0.0
    %1908 = vmatpush1.msra.mxu0 0.0
    %1909 = vmatprep.subr.mxu0 0.0
    %1910 = vmatpush1.msra.mxu0 0.0
    %1911 = vmatprep.subr.mxu0 0.0
    %1912 = vmatpush1.msra.mxu0 0.0
    %1913 = vmatprep.subr.mxu0 0.0
    %1914 = vmatpush1.msra.mxu0 0.0
    %1915 = vmatprep.subr.mxu0 0.0
    %1916 = vmatpush1.msra.mxu0 0.0
    %1917 = vmatprep.subr.mxu0 0.0
    %1918 = vmatpush1.msra.mxu0 0.0
    %1919 = vmatprep.subr.mxu0 0.0
    %1920 = vmatpush1.msra.mxu0 0.0
    %1921 = vmatprep.subr.mxu0 0.0
    %1922 = vmatpush1.msra.mxu0 0.0
    %1923 = vmatprep.subr.mxu0 0.0
    %1924 = vmatpush1.msra.mxu0 0.0
    %1925 = vmatprep.subr.mxu0 0.0
    %1926 = vmatpush1.msra.mxu0 0.0
    %1927 = vmatprep.mubr.f32.mxu0 0.0
    %1928 = vmatmul.mubr.f32.gmra.mrb[0].mxu0 %v1858
    %v1929 = vpop.f32.mrb[0].mxu0
    %v1930 = vadd.f32 %v1855, %v1929
    %v1931 = vpop.f32.mrb[0].mxu0
    %1932 = vmatprep.mubr.f32.mxu0 0.0
    %1933 = vmatmul.mubr.f32.gmra.mrb[0].mxu0 %v1861
    %v1934 = vpop.f32.mrb[0].mxu0
    %v1935 = vadd.f32 %v1855, %v1934
    %v1936 = vpop.f32.mrb[0].mxu0
    %1937 = vdwg.mxu0
    %v1938 = vmax.f32 %v1930, 0.0
    %v1939 = vmax.f32 %v1935, 0.0
    %v1940 = vld [vmem:[%s18] sm:$0xff]
    %v1941 = vld [vmem:[%s18 + $0x8] sm:$0xff]
    %v1942 = vld [vmem:[%s18 + $0x10] sm:$0xff]
    %v1943 = vld [vmem:[%s18 + $0x18] sm:$0xff]
    %v1944 = vld [vmem:[%s18 + $0x20] sm:$0xff]
    %v1945 = vld [vmem:[%s18 + $0x28] sm:$0xff]
    %v1946 = vld [vmem:[%s18 + $0x30] sm:$0xff]
    %v1947 = vld [vmem:[%s18 + $0x38] sm:$0xff]
    %vm1948 = vcmask 523264
    %v1950 = vsel %vm1948, %v1938, 0
    %v1953 = vsel %vm1948, %v1939, 0
    %1955 = vmatprep.subr.mxu0 0.0
    %1956 = vmatpush1.msra.mxu0 %v1940
    %1957 = vmatprep.subr.mxu0 0.0
    %1958 = vmatpush1.msra.mxu0 %v1941
    %1959 = vmatprep.subr.mxu0 0.0
    %1960 = vmatpush1.msra.mxu0 %v1942
    %1961 = vmatprep.subr.mxu0 0.0
    %1962 = vmatpush1.msra.mxu0 %v1943
    %1963 = vmatprep.subr.mxu0 0.0
    %1964 = vmatpush1.msra.mxu0 %v1944
    %1965 = vmatprep.subr.mxu0 0.0
    %1966 = vmatpush1.msra.mxu0 %v1945
    %1967 = vmatprep.subr.mxu0 0.0
    %1968 = vmatpush1.msra.mxu0 %v1946
    %1969 = vmatprep.subr.mxu0 0.0
    %1970 = vmatpush1.msra.mxu0 %v1947
    %1971 = vmatprep.subr.mxu0 0.0
    %1972 = vmatpush1.msra.mxu0 0.0
    %1973 = vmatprep.subr.mxu0 0.0
    %1974 = vmatpush1.msra.mxu0 0.0
    %1975 = vmatprep.subr.mxu0 0.0
    %1976 = vmatpush1.msra.mxu0 0.0
    %1977 = vmatprep.subr.mxu0 0.0
    %1978 = vmatpush1.msra.mxu0 0.0
    %1979 = vmatprep.subr.mxu0 0.0
    %1980 = vmatpush1.msra.mxu0 0.0
    %1981 = vmatprep.subr.mxu0 0.0
    %1982 = vmatpush1.msra.mxu0 0.0
    %1983 = vmatprep.subr.mxu0 0.0
    %1984 = vmatpush1.msra.mxu0 0.0
    %1985 = vmatprep.subr.mxu0 0.0
    %1986 = vmatpush1.msra.mxu0 0.0
    %1987 = vmatprep.subr.mxu0 0.0
    %1988 = vmatpush1.msra.mxu0 0.0
    %1989 = vmatprep.subr.mxu0 0.0
    %1990 = vmatpush1.msra.mxu0 0.0
    %1991 = vmatprep.subr.mxu0 0.0
    %1992 = vmatpush1.msra.mxu0 0.0
    %1993 = vmatprep.subr.mxu0 0.0
    %1994 = vmatpush1.msra.mxu0 0.0
    %1995 = vmatprep.subr.mxu0 0.0
    %1996 = vmatpush1.msra.mxu0 0.0
    %1997 = vmatprep.subr.mxu0 0.0
    %1998 = vmatpush1.msra.mxu0 0.0
    %1999 = vmatprep.subr.mxu0 0.0
    %2000 = vmatpush1.msra.mxu0 0.0
    %2001 = vmatprep.subr.mxu0 0.0
    %2002 = vmatpush1.msra.mxu0 0.0
    %2003 = vmatprep.subr.mxu0 0.0
    %2004 = vmatpush1.msra.mxu0 0.0
    %2005 = vmatprep.subr.mxu0 0.0
    %2006 = vmatpush1.msra.mxu0 0.0
    %2007 = vmatprep.subr.mxu0 0.0
    %2008 = vmatpush1.msra.mxu0 0.0
    %2009 = vmatprep.subr.mxu0 0.0
    %2010 = vmatpush1.msra.mxu0 0.0
    %2011 = vmatprep.subr.mxu0 0.0
    %2012 = vmatpush1.msra.mxu0 0.0
    %2013 = vmatprep.subr.mxu0 0.0
    %2014 = vmatpush1.msra.mxu0 0.0
    %2015 = vmatprep.subr.mxu0 0.0
    %2016 = vmatpush1.msra.mxu0 0.0
    %2017 = vmatprep.subr.mxu0 0.0
    %2018 = vmatpush1.msra.mxu0 0.0
    %2019 = vmatprep.mubr.f32.mxu0 0.0
    %2020 = vmatmul.mubr.f32.gmra.mrb[0].mxu0 %v1950
    %v2021 = vpop.f32.mrb[0].mxu0
    %v2022 = vadd.f32 0.0, %v2021
    %v2023 = vpop.f32.mrb[0].mxu0
    %2024 = vmatprep.mubr.f32.mxu0 0.0
    %2025 = vmatmul.mubr.f32.gmra.mrb[0].mxu0 %v1953
    %v2026 = vpop.f32.mrb[0].mxu0
    %v2027 = vadd.f32 0.0, %v2026
    %v2028 = vpop.f32.mrb[0].mxu0
    %2029 = vdwg.mxu0
    %v2030 = vadd.f32 %v1800, %v2022
    %v2031 = vadd.f32 %v1801, %v2027
    %v2032 = vld [vmem:[%s19] sm:$0x1]
    %v2034 = vlaneseq
    %v2035 = vshrl.u32 %v2034, 7
    %v2036 = vsub.s32 0, %v2035
    %v2037 = vrot.slane %v2032, %v2036
    %v2039 = vadd.f32 %v2030, %v2037
    %v2040 = vadd.f32 %v2031, %v2037
    %s2041 = scalar_lea.vmem [#allocation14], 1
    %v2042 = vld [vmem:[%s2041] sm:$0x1]
    %s2043 = scalar_lea.vmem [#allocation16], 1
    %v2044 = vld [vmem:[%s2043] sm:$0x1]
    %v2045 = vsel %vm256, %v2039, 0.0
    %2046 = vadd.xlane.f32.xlu0 %v2045
    %v2047 = vpop.xlane.xlu0 %2046
    %v2048 = vsel %vm256, %v2040, 0.0
    %2049 = vadd.xlane.f32.xlu0 %v2048
    %v2050 = vpop.xlane.xlu0 %2049
    %v2051 = vmul.f32 %v2047, %v348
    %v2052 = vmul.f32 %v2050, %v348
    %v2053 = vsub.f32 %v2039, %v2051
    %v2054 = vsub.f32 %v2040, %v2052
    %v2055 = vmul.f32 %v2053, %v2053
    %v2056 = vmul.f32 %v2054, %v2054
    %v2057 = vsel %vm256, %v2055, 0.0
    %2058 = vadd.xlane.f32.xlu0 %v2057
    %v2059 = vpop.xlane.xlu0 %2058
    %v2060 = vsel %vm256, %v2056, 0.0
    %2061 = vadd.xlane.f32.xlu0 %v2060
    %v2062 = vpop.xlane.xlu0 %2061
    %v2063 = vmul.f32 %v2059, %v348
    %v2064 = vmul.f32 %v2062, %v348
    %v2065 = vadd.f32 %v2063, 1e-06
    %v2066 = vadd.f32 %v2064, 1e-06
    %v2067 = vrsqrt.pop %v2065
    %v2068 = vrsqrt.pop %v2066
    %v2069 = vmul.f32 %v2053, %v2067
    %v2070 = vmul.f32 %v2054, %v2068
    %v2072 = vlaneseq
    %v2073 = vshrl.u32 %v2072, 7
    %v2074 = vsub.s32 0, %v2073
    %v2075 = vrot.slane %v2042, %v2074
    %v2077 = vmul.f32 %v2069, %v2075
    %v2078 = vmul.f32 %v2070, %v2075
    %v2080 = vlaneseq
    %v2081 = vshrl.u32 %v2080, 7
    %v2082 = vsub.s32 0, %v2081
    %v2083 = vrot.slane %v2044, %v2082
    %v2085 = vadd.f32 %v2077, %v2083
    %v2086 = vadd.f32 %v2078, %v2083
    %s2087 = scalar_lea.vmem %s4, 32
    %v2088 = vld [vmem:[%s2087] sm:$0xff]
    %v2089 = vld [vmem:[%s2087 + $0x8] sm:$0xff]
    %v2090 = vld [vmem:[%s2087 + $0x10] sm:$0xff]
    %v2091 = vld [vmem:[%s2087 + $0x18] sm:$0xff]
    %s2092 = scalar_lea.vmem %s5, 1
    %v2093 = vld [vmem:[%s2092] sm:$0x1]
    %v2095 = vlaneseq
    %v2096 = vshrl.u32 %v2095, 7
    %v2097 = vsub.s32 0, %v2096
    %v2098 = vrot.slane %v2093, %v2097
    %v2101 = vsel %vm256, %v2085, 0
    %v2104 = vsel %vm256, %v2086, 0
    %2106 = vmatprep.subr.mxu0 0.0
    %2107 = vmatpush1.msra.mxu0 %v2088
    %2108 = vmatprep.subr.mxu0 0.0
    %2109 = vmatpush1.msra.mxu0 %v2089
    %2110 = vmatprep.subr.mxu0 0.0
    %2111 = vmatpush1.msra.mxu0 %v2090
    %2112 = vmatprep.subr.mxu0 0.0
    %2113 = vmatpush1.msra.mxu0 %v2091
    %2114 = vmatprep.subr.mxu0 0.0
    %2115 = vmatpush1.msra.mxu0 0.0
    %2116 = vmatprep.subr.mxu0 0.0
    %2117 = vmatpush1.msra.mxu0 0.0
    %2118 = vmatprep.subr.mxu0 0.0
    %2119 = vmatpush1.msra.mxu0 0.0
    %2120 = vmatprep.subr.mxu0 0.0
    %2121 = vmatpush1.msra.mxu0 0.0
    %2122 = vmatprep.subr.mxu0 0.0
    %2123 = vmatpush1.msra.mxu0 0.0
    %2124 = vmatprep.subr.mxu0 0.0
    %2125 = vmatpush1.msra.mxu0 0.0
    %2126 = vmatprep.subr.mxu0 0.0
    %2127 = vmatpush1.msra.mxu0 0.0
    %2128 = vmatprep.subr.mxu0 0.0
    %2129 = vmatpush1.msra.mxu0 0.0
    %2130 = vmatprep.subr.mxu0 0.0
    %2131 = vmatpush1.msra.mxu0 0.0
    %2132 = vmatprep.subr.mxu0 0.0
    %2133 = vmatpush1.msra.mxu0 0.0
    %2134 = vmatprep.subr.mxu0 0.0
    %2135 = vmatpush1.msra.mxu0 0.0
    %2136 = vmatprep.subr.mxu0 0.0
    %2137 = vmatpush1.msra.mxu0 0.0
    %2138 = vmatprep.subr.mxu0 0.0
    %2139 = vmatpush1.msra.mxu0 0.0
    %2140 = vmatprep.subr.mxu0 0.0
    %2141 = vmatpush1.msra.mxu0 0.0
    %2142 = vmatprep.subr.mxu0 0.0
    %2143 = vmatpush1.msra.mxu0 0.0
    %2144 = vmatprep.subr.mxu0 0.0
    %2145 = vmatpush1.msra.mxu0 0.0
    %2146 = vmatprep.subr.mxu0 0.0
    %2147 = vmatpush1.msra.mxu0 0.0
    %2148 = vmatprep.subr.mxu0 0.0
    %2149 = vmatpush1.msra.mxu0 0.0
    %2150 = vmatprep.subr.mxu0 0.0
    %2151 = vmatpush1.msra.mxu0 0.0
    %2152 = vmatprep.subr.mxu0 0.0
    %2153 = vmatpush1.msra.mxu0 0.0
    %2154 = vmatprep.subr.mxu0 0.0
    %2155 = vmatpush1.msra.mxu0 0.0
    %2156 = vmatprep.subr.mxu0 0.0
    %2157 = vmatpush1.msra.mxu0 0.0
    %2158 = vmatprep.subr.mxu0 0.0
    %2159 = vmatpush1.msra.mxu0 0.0
    %2160 = vmatprep.subr.mxu0 0.0
    %2161 = vmatpush1.msra.mxu0 0.0
    %2162 = vmatprep.subr.mxu0 0.0
    %2163 = vmatpush1.msra.mxu0 0.0
    %2164 = vmatprep.subr.mxu0 0.0
    %2165 = vmatpush1.msra.mxu0 0.0
    %2166 = vmatprep.subr.mxu0 0.0
    %2167 = vmatpush1.msra.mxu0 0.0
    %2168 = vmatprep.subr.mxu0 0.0
    %2169 = vmatpush1.msra.mxu0 0.0
    %2170 = vmatprep.mubr.f32.mxu0 0.0
    %2171 = vmatmul.mubr.f32.gmra.mrb[0].mxu0 %v2101
    %v2172 = vpop.f32.mrb[0].mxu0
    %v2173 = vadd.f32 %v2098, %v2172
    %v2174 = vpop.f32.mrb[0].mxu0
    %2175 = vmatprep.mubr.f32.mxu0 0.0
    %2176 = vmatmul.mubr.f32.gmra.mrb[0].mxu0 %v2104
    %v2177 = vpop.f32.mrb[0].mxu0
    %v2178 = vadd.f32 %v2098, %v2177
    %v2179 = vpop.f32.mrb[0].mxu0
    %2180 = vdwg.mxu0
    %s2181 = scalar_lea.vmem %s6, 32
    %v2182 = vld [vmem:[%s2181] sm:$0xff]
    %v2183 = vld [vmem:[%s2181 + $0x8] sm:$0xff]
    %v2184 = vld [vmem:[%s2181 + $0x10] sm:$0xff]
    %v2185 = vld [vmem:[%s2181 + $0x18] sm:$0xff]
    %s2186 = scalar_lea.vmem %s7, 1
    %v2187 = vld [vmem:[%s2186] sm:$0x1]
    %v2189 = vlaneseq
    %v2190 = vshrl.u32 %v2189, 7
    %v2191 = vsub.s32 0, %v2190
    %v2192 = vrot.slane %v2187, %v2191
    %2194 = vmatprep.subr.mxu0 0.0
    %2195 = vmatpush1.msra.mxu0 %v2182
    %2196 = vmatprep.subr.mxu0 0.0
    %2197 = vmatpush1.msra.mxu0 %v2183
    %2198 = vmatprep.subr.mxu0 0.0
    %2199 = vmatpush1.msra.mxu0 %v2184
    %2200 = vmatprep.subr.mxu0 0.0
    %2201 = vmatpush1.msra.mxu0 %v2185
    %2202 = vmatprep.subr.mxu0 0.0
    %2203 = vmatpush1.msra.mxu0 0.0
    %2204 = vmatprep.subr.mxu0 0.0
    %2205 = vmatpush1.msra.mxu0 0.0
    %2206 = vmatprep.subr.mxu0 0.0
    %2207 = vmatpush1.msra.mxu0 0.0
    %2208 = vmatprep.subr.mxu0 0.0
    %2209 = vmatpush1.msra.mxu0 0.0
    %2210 = vmatprep.subr.mxu0 0.0
    %2211 = vmatpush1.msra.mxu0 0.0
    %2212 = vmatprep.subr.mxu0 0.0
    %2213 = vmatpush1.msra.mxu0 0.0
    %2214 = vmatprep.subr.mxu0 0.0
    %2215 = vmatpush1.msra.mxu0 0.0
    %2216 = vmatprep.subr.mxu0 0.0
    %2217 = vmatpush1.msra.mxu0 0.0
    %2218 = vmatprep.subr.mxu0 0.0
    %2219 = vmatpush1.msra.mxu0 0.0
    %2220 = vmatprep.subr.mxu0 0.0
    %2221 = vmatpush1.msra.mxu0 0.0
    %2222 = vmatprep.subr.mxu0 0.0
    %2223 = vmatpush1.msra.mxu0 0.0
    %2224 = vmatprep.subr.mxu0 0.0
    %2225 = vmatpush1.msra.mxu0 0.0
    %2226 = vmatprep.subr.mxu0 0.0
    %2227 = vmatpush1.msra.mxu0 0.0
    %2228 = vmatprep.subr.mxu0 0.0
    %2229 = vmatpush1.msra.mxu0 0.0
    %2230 = vmatprep.subr.mxu0 0.0
    %2231 = vmatpush1.msra.mxu0 0.0
    %2232 = vmatprep.subr.mxu0 0.0
    %2233 = vmatpush1.msra.mxu0 0.0
    %2234 = vmatprep.subr.mxu0 0.0
    %2235 = vmatpush1.msra.mxu0 0.0
    %2236 = vmatprep.subr.mxu0 0.0
    %2237 = vmatpush1.msra.mxu0 0.0
    %2238 = vmatprep.subr.mxu0 0.0
    %2239 = vmatpush1.msra.mxu0 0.0
    %2240 = vmatprep.subr.mxu0 0.0
    %2241 = vmatpush1.msra.mxu0 0.0
    %2242 = vmatprep.subr.mxu0 0.0
    %2243 = vmatpush1.msra.mxu0 0.0
    %2244 = vmatprep.subr.mxu0 0.0
    %2245 = vmatpush1.msra.mxu0 0.0
    %2246 = vmatprep.subr.mxu0 0.0
    %2247 = vmatpush1.msra.mxu0 0.0
    %2248 = vmatprep.subr.mxu0 0.0
    %2249 = vmatpush1.msra.mxu0 0.0
    %2250 = vmatprep.subr.mxu0 0.0
    %2251 = vmatpush1.msra.mxu0 0.0
    %2252 = vmatprep.subr.mxu0 0.0
    %2253 = vmatpush1.msra.mxu0 0.0
    %2254 = vmatprep.subr.mxu0 0.0
    %2255 = vmatpush1.msra.mxu0 0.0
    %2256 = vmatprep.subr.mxu0 0.0
    %2257 = vmatpush1.msra.mxu0 0.0
    %2258 = vmatprep.mubr.f32.mxu0 0.0
    %2259 = vmatmul.mubr.f32.gmra.mrb[0].mxu0 %v2101
    %v2260 = vpop.f32.mrb[0].mxu0
    %v2261 = vadd.f32 %v2192, %v2260
    %v2262 = vpop.f32.mrb[0].mxu0
    %2263 = vmatprep.mubr.f32.mxu0 0.0
    %2264 = vmatmul.mubr.f32.gmra.mrb[0].mxu0 %v2104
    %v2265 = vpop.f32.mrb[0].mxu0
    %v2266 = vadd.f32 %v2192, %v2265
    %v2267 = vpop.f32.mrb[0].mxu0
    %2268 = vdwg.mxu0
    %s2269 = scalar_lea.vmem %s8, 32
    %v2270 = vld [vmem:[%s2269] sm:$0xff]
    %v2271 = vld [vmem:[%s2269 + $0x8] sm:$0xff]
    %v2272 = vld [vmem:[%s2269 + $0x10] sm:$0xff]
    %v2273 = vld [vmem:[%s2269 + $0x18] sm:$0xff]
    %s2274 = scalar_lea.vmem [#allocation10], 1
    %v2275 = vld [vmem:[%s2274] sm:$0x1]
    %v2277 = vlaneseq
    %v2278 = vshrl.u32 %v2277, 7
    %v2279 = vsub.s32 0, %v2278
    %v2280 = vrot.slane %v2275, %v2279
    %2282 = vmatprep.subr.mxu0 0.0
    %2283 = vmatpush1.msra.mxu0 %v2270
    %2284 = vmatprep.subr.mxu0 0.0
    %2285 = vmatpush1.msra.mxu0 %v2271
    %2286 = vmatprep.subr.mxu0 0.0
    %2287 = vmatpush1.msra.mxu0 %v2272
    %2288 = vmatprep.subr.mxu0 0.0
    %2289 = vmatpush1.msra.mxu0 %v2273
    %2290 = vmatprep.subr.mxu0 0.0
    %2291 = vmatpush1.msra.mxu0 0.0
    %2292 = vmatprep.subr.mxu0 0.0
    %2293 = vmatpush1.msra.mxu0 0.0
    %2294 = vmatprep.subr.mxu0 0.0
    %2295 = vmatpush1.msra.mxu0 0.0
    %2296 = vmatprep.subr.mxu0 0.0
    %2297 = vmatpush1.msra.mxu0 0.0
    %2298 = vmatprep.subr.mxu0 0.0
    %2299 = vmatpush1.msra.mxu0 0.0
    %2300 = vmatprep.subr.mxu0 0.0
    %2301 = vmatpush1.msra.mxu0 0.0
    %2302 = vmatprep.subr.mxu0 0.0
    %2303 = vmatpush1.msra.mxu0 0.0
    %2304 = vmatprep.subr.mxu0 0.0
    %2305 = vmatpush1.msra.mxu0 0.0
    %2306 = vmatprep.subr.mxu0 0.0
    %2307 = vmatpush1.msra.mxu0 0.0
    %2308 = vmatprep.subr.mxu0 0.0
    %2309 = vmatpush1.msra.mxu0 0.0
    %2310 = vmatprep.subr.mxu0 0.0
    %2311 = vmatpush1.msra.mxu0 0.0
    %2312 = vmatprep.subr.mxu0 0.0
    %2313 = vmatpush1.msra.mxu0 0.0
    %2314 = vmatprep.subr.mxu0 0.0
    %2315 = vmatpush1.msra.mxu0 0.0
    %2316 = vmatprep.subr.mxu0 0.0
    %2317 = vmatpush1.msra.mxu0 0.0
    %2318 = vmatprep.subr.mxu0 0.0
    %2319 = vmatpush1.msra.mxu0 0.0
    %2320 = vmatprep.subr.mxu0 0.0
    %2321 = vmatpush1.msra.mxu0 0.0
    %2322 = vmatprep.subr.mxu0 0.0
    %2323 = vmatpush1.msra.mxu0 0.0
    %2324 = vmatprep.subr.mxu0 0.0
    %2325 = vmatpush1.msra.mxu0 0.0
    %2326 = vmatprep.subr.mxu0 0.0
    %2327 = vmatpush1.msra.mxu0 0.0
    %2328 = vmatprep.subr.mxu0 0.0
    %2329 = vmatpush1.msra.mxu0 0.0
    %2330 = vmatprep.subr.mxu0 0.0
    %2331 = vmatpush1.msra.mxu0 0.0
    %2332 = vmatprep.subr.mxu0 0.0
    %2333 = vmatpush1.msra.mxu0 0.0
    %2334 = vmatprep.subr.mxu0 0.0
    %2335 = vmatpush1.msra.mxu0 0.0
    %2336 = vmatprep.subr.mxu0 0.0
    %2337 = vmatpush1.msra.mxu0 0.0
    %2338 = vmatprep.subr.mxu0 0.0
    %2339 = vmatpush1.msra.mxu0 0.0
    %2340 = vmatprep.subr.mxu0 0.0
    %2341 = vmatpush1.msra.mxu0 0.0
    %2342 = vmatprep.subr.mxu0 0.0
    %2343 = vmatpush1.msra.mxu0 0.0
    %2344 = vmatprep.subr.mxu0 0.0
    %2345 = vmatpush1.msra.mxu0 0.0
    %2346 = vmatprep.mubr.f32.mxu0 0.0
    %2347 = vmatmul.mubr.f32.gmra.mrb[0].mxu0 %v2101
    %v2348 = vpop.f32.mrb[0].mxu0
    %v2349 = vadd.f32 %v2280, %v2348
    %v2350 = vpop.f32.mrb[0].mxu0
    %2351 = vmatprep.mubr.f32.mxu0 0.0
    %2352 = vmatmul.mubr.f32.gmra.mrb[0].mxu0 %v2104
    %v2353 = vpop.f32.mrb[0].mxu0
    %v2354 = vadd.f32 %v2280, %v2353
    %v2355 = vpop.f32.mrb[0].mxu0
    %2356 = vdwg.mxu0
    %s2357 = scalar_lea.vmem [#allocation11], 32
    %v2358 = vld [vmem:[%s2357] sm:$0xff]
    %v2359 = vld [vmem:[%s2357 + $0x8] sm:$0xff]
    %v2360 = vld [vmem:[%s2357 + $0x10] sm:$0xff]
    %v2361 = vld [vmem:[%s2357 + $0x18] sm:$0xff]
    %v2363 = vsel %vm653, %v2173, 0
    %v2366 = vsel %vm653, %v2178, 0
    %v2369 = vsel %vm653, %v2261, 0
    %v2372 = vsel %vm653, %v2266, 0
    %2374 = vmatprep.subr.mxu0 0.0
    %2375 = vmatpush1.xpose.msra.mxu0 %v2369
    %2376 = vmatprep.subr.mxu0 0.0
    %2377 = vmatpush1.xpose.msra.mxu0 %v2372
    %2378 = vmatprep.subr.mxu0 0.0
    %2379 = vmatpush1.xpose.msra.mxu0 0.0
    %2380 = vmatprep.subr.mxu0 0.0
    %2381 = vmatpush1.xpose.msra.mxu0 0.0
    %2382 = vmatprep.subr.mxu0 0.0
    %2383 = vmatpush1.xpose.msra.mxu0 0.0
    %2384 = vmatprep.subr.mxu0 0.0
    %2385 = vmatpush1.xpose.msra.mxu0 0.0
    %2386 = vmatprep.subr.mxu0 0.0
    %2387 = vmatpush1.xpose.msra.mxu0 0.0
    %2388 = vmatprep.subr.mxu0 0.0
    %2389 = vmatpush1.xpose.msra.mxu0 0.0
    %2390 = vmatprep.subr.mxu0 0.0
    %2391 = vmatpush1.xpose.msra.mxu0 0.0
    %2392 = vmatprep.subr.mxu0 0.0
    %2393 = vmatpush1.xpose.msra.mxu0 0.0
    %2394 = vmatprep.subr.mxu0 0.0
    %2395 = vmatpush1.xpose.msra.mxu0 0.0
    %2396 = vmatprep.subr.mxu0 0.0
    %2397 = vmatpush1.xpose.msra.mxu0 0.0
    %2398 = vmatprep.subr.mxu0 0.0
    %2399 = vmatpush1.xpose.msra.mxu0 0.0
    %2400 = vmatprep.subr.mxu0 0.0
    %2401 = vmatpush1.xpose.msra.mxu0 0.0
    %2402 = vmatprep.subr.mxu0 0.0
    %2403 = vmatpush1.xpose.msra.mxu0 0.0
    %2404 = vmatprep.subr.mxu0 0.0
    %2405 = vmatpush1.xpose.msra.mxu0 0.0
    %2406 = vmatprep.subr.mxu0 0.0
    %2407 = vmatpush1.xpose.msra.mxu0 0.0
    %2408 = vmatprep.subr.mxu0 0.0
    %2409 = vmatpush1.xpose.msra.mxu0 0.0
    %2410 = vmatprep.subr.mxu0 0.0
    %2411 = vmatpush1.xpose.msra.mxu0 0.0
    %2412 = vmatprep.subr.mxu0 0.0
    %2413 = vmatpush1.xpose.msra.mxu0 0.0
    %2414 = vmatprep.subr.mxu0 0.0
    %2415 = vmatpush1.xpose.msra.mxu0 0.0
    %2416 = vmatprep.subr.mxu0 0.0
    %2417 = vmatpush1.xpose.msra.mxu0 0.0
    %2418 = vmatprep.subr.mxu0 0.0
    %2419 = vmatpush1.xpose.msra.mxu0 0.0
    %2420 = vmatprep.subr.mxu0 0.0
    %2421 = vmatpush1.xpose.msra.mxu0 0.0
    %2422 = vmatprep.subr.mxu0 0.0
    %2423 = vmatpush1.xpose.msra.mxu0 0.0
    %2424 = vmatprep.subr.mxu0 0.0
    %2425 = vmatpush1.xpose.msra.mxu0 0.0
    %2426 = vmatprep.subr.mxu0 0.0
    %2427 = vmatpush1.xpose.msra.mxu0 0.0
    %2428 = vmatprep.subr.mxu0 0.0
    %2429 = vmatpush1.xpose.msra.mxu0 0.0
    %2430 = vmatprep.subr.mxu0 0.0
    %2431 = vmatpush1.xpose.msra.mxu0 0.0
    %2432 = vmatprep.subr.mxu0 0.0
    %2433 = vmatpush1.xpose.msra.mxu0 0.0
    %2434 = vmatprep.subr.mxu0 0.0
    %2435 = vmatpush1.xpose.msra.mxu0 0.0
    %2436 = vmatprep.subr.mxu0 0.0
    %2437 = vmatpush1.xpose.msra.mxu0 0.0
    %2438 = vmatprep.mubr.f32.mxu0 0.0
    %2439 = vmatmul.mubr.f32.gmra.mrb[0].mxu0 %v2363
    %v2440 = vpop.f32.mrb[0].mxu0
    %v2441 = vadd.f32 0.0, %v2440
    %v2442 = vpop.f32.mrb[0].mxu0
    %2443 = vmatprep.mubr.f32.mxu0 0.0
    %2444 = vmatmul.mubr.f32.gmra.mrb[0].mxu0 %v2366
    %v2445 = vpop.f32.mrb[0].mxu0
    %v2446 = vadd.f32 0.0, %v2445
    %v2447 = vpop.f32.mrb[0].mxu0
    %2448 = vdwg.mxu0
    %v2449 = vmul.f32 %v2441, 0.35355338
    %v2450 = vmul.f32 %v2446, 0.35355338
    %v2451 = vadd.f32 %v2449, %v338
    %v2452 = vadd.f32 %v2450, %v339
    %v2453 = vsel %vm745, %v2451, -inf
    %2454 = vmax.xlane.f32.xlu0 %v2453
    %v2455 = vpop.xlane.xlu0 %2454
    %v2456 = vsel %vm745, %v2452, -inf
    %2457 = vmax.xlane.f32.xlu0 %v2456
    %v2458 = vpop.xlane.xlu0 %2457
    %v2459 = vsub.f32 %v2451, %v2455
    %v2460 = vsub.f32 %v2452, %v2458
    %v2461 = vmul.f32 %v2459, 1.442695
    %v2462 = vpow.pop %v2461
    %v2463 = vmul.f32 %v2460, 1.442695
    %v2464 = vpow.pop %v2463
    %v2465 = vsel %vm745, %v2462, 0.0
    %2466 = vadd.xlane.f32.xlu0 %v2465
    %v2467 = vpop.xlane.xlu0 %2466
    %v2468 = vsel %vm745, %v2464, 0.0
    %2469 = vadd.xlane.f32.xlu0 %v2468
    %v2470 = vpop.xlane.xlu0 %2469
    %v2471 = vrcp.pop %v2467
    %v2472 = vrcp.pop %v2470
    %v2473 = vmul.f32 %v2462, %v2471
    %v2474 = vmul.f32 %v2464, %v2472
    %v2476 = vsel %vm745, %v2473, 0
    %v2479 = vsel %vm745, %v2474, 0
    %2481 = vmatprep.subr.mxu0 0.0
    %2482 = vmatpush1.msra.mxu0 %v2349
    %2483 = vmatprep.subr.mxu0 0.0
    %2484 = vmatpush1.msra.mxu0 %v2354
    %2485 = vmatprep.subr.mxu0 0.0
    %2486 = vmatpush1.msra.mxu0 0.0
    %2487 = vmatprep.subr.mxu0 0.0
    %2488 = vmatpush1.msra.mxu0 0.0
    %2489 = vmatprep.subr.mxu0 0.0
    %2490 = vmatpush1.msra.mxu0 0.0
    %2491 = vmatprep.subr.mxu0 0.0
    %2492 = vmatpush1.msra.mxu0 0.0
    %2493 = vmatprep.subr.mxu0 0.0
    %2494 = vmatpush1.msra.mxu0 0.0
    %2495 = vmatprep.subr.mxu0 0.0
    %2496 = vmatpush1.msra.mxu0 0.0
    %2497 = vmatprep.subr.mxu0 0.0
    %2498 = vmatpush1.msra.mxu0 0.0
    %2499 = vmatprep.subr.mxu0 0.0
    %2500 = vmatpush1.msra.mxu0 0.0
    %2501 = vmatprep.subr.mxu0 0.0
    %2502 = vmatpush1.msra.mxu0 0.0
    %2503 = vmatprep.subr.mxu0 0.0
    %2504 = vmatpush1.msra.mxu0 0.0
    %2505 = vmatprep.subr.mxu0 0.0
    %2506 = vmatpush1.msra.mxu0 0.0
    %2507 = vmatprep.subr.mxu0 0.0
    %2508 = vmatpush1.msra.mxu0 0.0
    %2509 = vmatprep.subr.mxu0 0.0
    %2510 = vmatpush1.msra.mxu0 0.0
    %2511 = vmatprep.subr.mxu0 0.0
    %2512 = vmatpush1.msra.mxu0 0.0
    %2513 = vmatprep.subr.mxu0 0.0
    %2514 = vmatpush1.msra.mxu0 0.0
    %2515 = vmatprep.subr.mxu0 0.0
    %2516 = vmatpush1.msra.mxu0 0.0
    %2517 = vmatprep.subr.mxu0 0.0
    %2518 = vmatpush1.msra.mxu0 0.0
    %2519 = vmatprep.subr.mxu0 0.0
    %2520 = vmatpush1.msra.mxu0 0.0
    %2521 = vmatprep.subr.mxu0 0.0
    %2522 = vmatpush1.msra.mxu0 0.0
    %2523 = vmatprep.subr.mxu0 0.0
    %2524 = vmatpush1.msra.mxu0 0.0
    %2525 = vmatprep.subr.mxu0 0.0
    %2526 = vmatpush1.msra.mxu0 0.0
    %2527 = vmatprep.subr.mxu0 0.0
    %2528 = vmatpush1.msra.mxu0 0.0
    %2529 = vmatprep.subr.mxu0 0.0
    %2530 = vmatpush1.msra.mxu0 0.0
    %2531 = vmatprep.subr.mxu0 0.0
    %2532 = vmatpush1.msra.mxu0 0.0
    %2533 = vmatprep.subr.mxu0 0.0
    %2534 = vmatpush1.msra.mxu0 0.0
    %2535 = vmatprep.subr.mxu0 0.0
    %2536 = vmatpush1.msra.mxu0 0.0
    %2537 = vmatprep.subr.mxu0 0.0
    %2538 = vmatpush1.msra.mxu0 0.0
    %2539 = vmatprep.subr.mxu0 0.0
    %2540 = vmatpush1.msra.mxu0 0.0
    %2541 = vmatprep.subr.mxu0 0.0
    %2542 = vmatpush1.msra.mxu0 0.0
    %2543 = vmatprep.subr.mxu0 0.0
    %2544 = vmatpush1.msra.mxu0 0.0
    %2545 = vmatprep.mubr.f32.mxu0 0.0
    %2546 = vmatmul.mubr.f32.gmra.mrb[0].mxu0 %v2476
    %v2547 = vpop.f32.mrb[0].mxu0
    %v2548 = vadd.f32 0.0, %v2547
    %v2549 = vpop.f32.mrb[0].mxu0
    %2550 = vmatprep.mubr.f32.mxu0 0.0
    %2551 = vmatmul.mubr.f32.gmra.mrb[0].mxu0 %v2479
    %v2552 = vpop.f32.mrb[0].mxu0
    %v2553 = vadd.f32 0.0, %v2552
    %v2554 = vpop.f32.mrb[0].mxu0
    %2555 = vdwg.mxu0
    %2556 = vrot.lane.b32.xlu0 %v2173, 120
    %v2557 = vpop.permute.xlu0 %2556
    %2558 = vrot.lane.b32.xlu0 %v2178, 120
    %v2559 = vpop.permute.xlu0 %2558
    %2560 = vrot.lane.b32.xlu0 %v2261, 120
    %v2561 = vpop.permute.xlu0 %2560
    %2562 = vrot.lane.b32.xlu0 %v2266, 120
    %v2563 = vpop.permute.xlu0 %2562
    %v2564 = vsel %vm653, %v2557, 0
    %v2566 = vsel %vm653, %v2559, 0
    %v2568 = vsel %vm653, %v2561, 0
    %v2570 = vsel %vm653, %v2563, 0
    %2572 = vmatprep.subr.mxu0 0.0
    %2573 = vmatpush1.xpose.msra.mxu0 %v2568
    %2574 = vmatprep.subr.mxu0 0.0
    %2575 = vmatpush1.xpose.msra.mxu0 %v2570
    %2576 = vmatprep.subr.mxu0 0.0
    %2577 = vmatpush1.xpose.msra.mxu0 0.0
    %2578 = vmatprep.subr.mxu0 0.0
    %2579 = vmatpush1.xpose.msra.mxu0 0.0
    %2580 = vmatprep.subr.mxu0 0.0
    %2581 = vmatpush1.xpose.msra.mxu0 0.0
    %2582 = vmatprep.subr.mxu0 0.0
    %2583 = vmatpush1.xpose.msra.mxu0 0.0
    %2584 = vmatprep.subr.mxu0 0.0
    %2585 = vmatpush1.xpose.msra.mxu0 0.0
    %2586 = vmatprep.subr.mxu0 0.0
    %2587 = vmatpush1.xpose.msra.mxu0 0.0
    %2588 = vmatprep.subr.mxu0 0.0
    %2589 = vmatpush1.xpose.msra.mxu0 0.0
    %2590 = vmatprep.subr.mxu0 0.0
    %2591 = vmatpush1.xpose.msra.mxu0 0.0
    %2592 = vmatprep.subr.mxu0 0.0
    %2593 = vmatpush1.xpose.msra.mxu0 0.0
    %2594 = vmatprep.subr.mxu0 0.0
    %2595 = vmatpush1.xpose.msra.mxu0 0.0
    %2596 = vmatprep.subr.mxu0 0.0
    %2597 = vmatpush1.xpose.msra.mxu0 0.0
    %2598 = vmatprep.subr.mxu0 0.0
    %2599 = vmatpush1.xpose.msra.mxu0 0.0
    %2600 = vmatprep.subr.mxu0 0.0
    %2601 = vmatpush1.xpose.msra.mxu0 0.0
    %2602 = vmatprep.subr.mxu0 0.0
    %2603 = vmatpush1.xpose.msra.mxu0 0.0
    %2604 = vmatprep.subr.mxu0 0.0
    %2605 = vmatpush1.xpose.msra.mxu0 0.0
    %2606 = vmatprep.subr.mxu0 0.0
    %2607 = vmatpush1.xpose.msra.mxu0 0.0
    %2608 = vmatprep.subr.mxu0 0.0
    %2609 = vmatpush1.xpose.msra.mxu0 0.0
    %2610 = vmatprep.subr.mxu0 0.0
    %2611 = vmatpush1.xpose.msra.mxu0 0.0
    %2612 = vmatprep.subr.mxu0 0.0
    %2613 = vmatpush1.xpose.msra.mxu0 0.0
    %2614 = vmatprep.subr.mxu0 0.0
    %2615 = vmatpush1.xpose.msra.mxu0 0.0
    %2616 = vmatprep.subr.mxu0 0.0
    %2617 = vmatpush1.xpose.msra.mxu0 0.0
    %2618 = vmatprep.subr.mxu0 0.0
    %2619 = vmatpush1.xpose.msra.mxu0 0.0
    %2620 = vmatprep.subr.mxu0 0.0
    %2621 = vmatpush1.xpose.msra.mxu0 0.0
    %2622 = vmatprep.subr.mxu0 0.0
    %2623 = vmatpush1.xpose.msra.mxu0 0.0
    %2624 = vmatprep.subr.mxu0 0.0
    %2625 = vmatpush1.xpose.msra.mxu0 0.0
    %2626 = vmatprep.subr.mxu0 0.0
    %2627 = vmatpush1.xpose.msra.mxu0 0.0
    %2628 = vmatprep.subr.mxu0 0.0
    %2629 = vmatpush1.xpose.msra.mxu0 0.0
    %2630 = vmatprep.subr.mxu0 0.0
    %2631 = vmatpush1.xpose.msra.mxu0 0.0
    %2632 = vmatprep.subr.mxu0 0.0
    %2633 = vmatpush1.xpose.msra.mxu0 0.0
    %2634 = vmatprep.subr.mxu0 0.0
    %2635 = vmatpush1.xpose.msra.mxu0 0.0
    %2636 = vmatprep.mubr.f32.mxu0 0.0
    %2637 = vmatmul.mubr.f32.gmra.mrb[0].mxu0 %v2564
    %v2638 = vpop.f32.mrb[0].mxu0
    %v2639 = vadd.f32 0.0, %v2638
    %v2640 = vpop.f32.mrb[0].mxu0
    %2641 = vmatprep.mubr.f32.mxu0 0.0
    %2642 = vmatmul.mubr.f32.gmra.mrb[0].mxu0 %v2566
    %v2643 = vpop.f32.mrb[0].mxu0
    %v2644 = vadd.f32 0.0, %v2643
    %v2645 = vpop.f32.mrb[0].mxu0
    %2646 = vdwg.mxu0
    %v2647 = vmul.f32 %v2639, 0.35355338
    %v2648 = vmul.f32 %v2644, 0.35355338
    %v2649 = vadd.f32 %v2647, %v338
    %v2650 = vadd.f32 %v2648, %v339
    %v2651 = vsel %vm745, %v2649, -inf
    %2652 = vmax.xlane.f32.xlu0 %v2651
    %v2653 = vpop.xlane.xlu0 %2652
    %v2654 = vsel %vm745, %v2650, -inf
    %2655 = vmax.xlane.f32.xlu0 %v2654
    %v2656 = vpop.xlane.xlu0 %2655
    %v2657 = vsub.f32 %v2649, %v2653
    %v2658 = vsub.f32 %v2650, %v2656
    %v2659 = vmul.f32 %v2657, 1.442695
    %v2660 = vpow.pop %v2659
    %v2661 = vmul.f32 %v2658, 1.442695
    %v2662 = vpow.pop %v2661
    %v2663 = vsel %vm745, %v2660, 0.0
    %2664 = vadd.xlane.f32.xlu0 %v2663
    %v2665 = vpop.xlane.xlu0 %2664
    %v2666 = vsel %vm745, %v2662, 0.0
    %2667 = vadd.xlane.f32.xlu0 %v2666
    %v2668 = vpop.xlane.xlu0 %2667
    %v2669 = vrcp.pop %v2665
    %v2670 = vrcp.pop %v2668
    %v2671 = vmul.f32 %v2660, %v2669
    %v2672 = vmul.f32 %v2662, %v2670
    %2675 = vrot.lane.b32.xlu0 %v2349, 120
    %v2676 = vpop.permute.xlu0 %2675
    %2677 = vrot.lane.b32.xlu0 %v2354, 120
    %v2678 = vpop.permute.xlu0 %2677
    %v2682 = vsel %vm745, %v2671, 0
    %v2685 = vsel %vm745, %v2672, 0
    %2687 = vmatprep.subr.mxu0 0.0
    %2688 = vmatpush1.msra.mxu0 %v2676
    %2689 = vmatprep.subr.mxu0 0.0
    %2690 = vmatpush1.msra.mxu0 %v2678
    %2691 = vmatprep.subr.mxu0 0.0
    %2692 = vmatpush1.msra.mxu0 0.0
    %2693 = vmatprep.subr.mxu0 0.0
    %2694 = vmatpush1.msra.mxu0 0.0
    %2695 = vmatprep.subr.mxu0 0.0
    %2696 = vmatpush1.msra.mxu0 0.0
    %2697 = vmatprep.subr.mxu0 0.0
    %2698 = vmatpush1.msra.mxu0 0.0
    %2699 = vmatprep.subr.mxu0 0.0
    %2700 = vmatpush1.msra.mxu0 0.0
    %2701 = vmatprep.subr.mxu0 0.0
    %2702 = vmatpush1.msra.mxu0 0.0
    %2703 = vmatprep.subr.mxu0 0.0
    %2704 = vmatpush1.msra.mxu0 0.0
    %2705 = vmatprep.subr.mxu0 0.0
    %2706 = vmatpush1.msra.mxu0 0.0
    %2707 = vmatprep.subr.mxu0 0.0
    %2708 = vmatpush1.msra.mxu0 0.0
    %2709 = vmatprep.subr.mxu0 0.0
    %2710 = vmatpush1.msra.mxu0 0.0
    %2711 = vmatprep.subr.mxu0 0.0
    %2712 = vmatpush1.msra.mxu0 0.0
    %2713 = vmatprep.subr.mxu0 0.0
    %2714 = vmatpush1.msra.mxu0 0.0
    %2715 = vmatprep.subr.mxu0 0.0
    %2716 = vmatpush1.msra.mxu0 0.0
    %2717 = vmatprep.subr.mxu0 0.0
    %2718 = vmatpush1.msra.mxu0 0.0
    %2719 = vmatprep.subr.mxu0 0.0
    %2720 = vmatpush1.msra.mxu0 0.0
    %2721 = vmatprep.subr.mxu0 0.0
    %2722 = vmatpush1.msra.mxu0 0.0
    %2723 = vmatprep.subr.mxu0 0.0
    %2724 = vmatpush1.msra.mxu0 0.0
    %2725 = vmatprep.subr.mxu0 0.0
    %2726 = vmatpush1.msra.mxu0 0.0
    %2727 = vmatprep.subr.mxu0 0.0
    %2728 = vmatpush1.msra.mxu0 0.0
    %2729 = vmatprep.subr.mxu0 0.0
    %2730 = vmatpush1.msra.mxu0 0.0
    %2731 = vmatprep.subr.mxu0 0.0
    %2732 = vmatpush1.msra.mxu0 0.0
    %2733 = vmatprep.subr.mxu0 0.0
    %2734 = vmatpush1.msra.mxu0 0.0
    %2735 = vmatprep.subr.mxu0 0.0
    %2736 = vmatpush1.msra.mxu0 0.0
    %2737 = vmatprep.subr.mxu0 0.0
    %2738 = vmatpush1.msra.mxu0 0.0
    %2739 = vmatprep.subr.mxu0 0.0
    %2740 = vmatpush1.msra.mxu0 0.0
    %2741 = vmatprep.subr.mxu0 0.0
    %2742 = vmatpush1.msra.mxu0 0.0
    %2743 = vmatprep.subr.mxu0 0.0
    %2744 = vmatpush1.msra.mxu0 0.0
    %2745 = vmatprep.subr.mxu0 0.0
    %2746 = vmatpush1.msra.mxu0 0.0
    %2747 = vmatprep.subr.mxu0 0.0
    %2748 = vmatpush1.msra.mxu0 0.0
    %2749 = vmatprep.subr.mxu0 0.0
    %2750 = vmatpush1.msra.mxu0 0.0
    %2751 = vmatprep.mubr.f32.mxu0 0.0
    %2752 = vmatmul.mubr.f32.gmra.mrb[0].mxu0 %v2682
    %v2753 = vpop.f32.mrb[0].mxu0
    %v2754 = vadd.f32 0.0, %v2753
    %v2755 = vpop.f32.mrb[0].mxu0
    %2756 = vmatprep.mubr.f32.mxu0 0.0
    %2757 = vmatmul.mubr.f32.gmra.mrb[0].mxu0 %v2685
    %v2758 = vpop.f32.mrb[0].mxu0
    %v2759 = vadd.f32 0.0, %v2758
    %v2760 = vpop.f32.mrb[0].mxu0
    %2761 = vdwg.mxu0
    %v2763 = vsel %vm653, %v2754, 0
    %v2766 = vsel %vm653, %v2759, 0
    %2768 = vmatprep.subr.mxu0 0.0
    %2769 = vmatpush1.msra.mxu0 %v2359
    %2770 = vmatprep.subr.mxu0 0.0
    %2771 = vmatpush1.msra.mxu0 0.0
    %2772 = vmatprep.subr.mxu0 0.0
    %2773 = vmatpush1.msra.mxu0 0.0
    %2774 = vmatprep.subr.mxu0 0.0
    %2775 = vmatpush1.msra.mxu0 0.0
    %2776 = vmatprep.subr.mxu0 0.0
    %2777 = vmatpush1.msra.mxu0 0.0
    %2778 = vmatprep.subr.mxu0 0.0
    %2779 = vmatpush1.msra.mxu0 0.0
    %2780 = vmatprep.subr.mxu0 0.0
    %2781 = vmatpush1.msra.mxu0 0.0
    %2782 = vmatprep.subr.mxu0 0.0
    %2783 = vmatpush1.msra.mxu0 0.0
    %2784 = vmatprep.subr.mxu0 0.0
    %2785 = vmatpush1.msra.mxu0 0.0
    %2786 = vmatprep.subr.mxu0 0.0
    %2787 = vmatpush1.msra.mxu0 0.0
    %2788 = vmatprep.subr.mxu0 0.0
    %2789 = vmatpush1.msra.mxu0 0.0
    %2790 = vmatprep.subr.mxu0 0.0
    %2791 = vmatpush1.msra.mxu0 0.0
    %2792 = vmatprep.subr.mxu0 0.0
    %2793 = vmatpush1.msra.mxu0 0.0
    %2794 = vmatprep.subr.mxu0 0.0
    %2795 = vmatpush1.msra.mxu0 0.0
    %2796 = vmatprep.subr.mxu0 0.0
    %2797 = vmatpush1.msra.mxu0 0.0
    %2798 = vmatprep.subr.mxu0 0.0
    %2799 = vmatpush1.msra.mxu0 0.0
    %2800 = vmatprep.subr.mxu0 0.0
    %2801 = vmatpush1.msra.mxu0 0.0
    %2802 = vmatprep.subr.mxu0 0.0
    %2803 = vmatpush1.msra.mxu0 0.0
    %2804 = vmatprep.subr.mxu0 0.0
    %2805 = vmatpush1.msra.mxu0 0.0
    %2806 = vmatprep.subr.mxu0 0.0
    %2807 = vmatpush1.msra.mxu0 0.0
    %2808 = vmatprep.subr.mxu0 0.0
    %2809 = vmatpush1.msra.mxu0 0.0
    %2810 = vmatprep.subr.mxu0 0.0
    %2811 = vmatpush1.msra.mxu0 0.0
    %2812 = vmatprep.subr.mxu0 0.0
    %2813 = vmatpush1.msra.mxu0 0.0
    %2814 = vmatprep.subr.mxu0 0.0
    %2815 = vmatpush1.msra.mxu0 0.0
    %2816 = vmatprep.subr.mxu0 0.0
    %2817 = vmatpush1.msra.mxu0 0.0
    %2818 = vmatprep.subr.mxu0 0.0
    %2819 = vmatpush1.msra.mxu0 0.0
    %2820 = vmatprep.subr.mxu0 0.0
    %2821 = vmatpush1.msra.mxu0 0.0
    %2822 = vmatprep.subr.mxu0 0.0
    %2823 = vmatpush1.msra.mxu0 0.0
    %2824 = vmatprep.subr.mxu0 0.0
    %2825 = vmatpush1.msra.mxu0 0.0
    %2826 = vmatprep.subr.mxu0 0.0
    %2827 = vmatpush1.msra.mxu0 0.0
    %2828 = vmatprep.subr.mxu0 0.0
    %2829 = vmatpush1.msra.mxu0 0.0
    %2830 = vmatprep.subr.mxu0 0.0
    %2831 = vmatpush1.msra.mxu0 0.0
    %2832 = vmatprep.mubr.f32.mxu0 0.0
    %2833 = vmatmul.mubr.f32.gmra.mrb[0].mxu0 %v2763
    %v2834 = vpop.f32.mrb[0].mxu0
    %v2835 = vadd.f32 0.0, %v2834
    %v2836 = vpop.f32.mrb[0].mxu0
    %2837 = vmatprep.mubr.f32.mxu0 0.0
    %2838 = vmatmul.mubr.f32.gmra.mrb[0].mxu0 %v2766
    %v2839 = vpop.f32.mrb[0].mxu0
    %v2840 = vadd.f32 0.0, %v2839
    %v2841 = vpop.f32.mrb[0].mxu0
    %2842 = vdwg.mxu0
    %v2844 = vsel %vm653, %v2548, 0
    %v2847 = vsel %vm653, %v2553, 0
    %2849 = vmatprep.subr.mxu0 0.0
    %2850 = vmatpush1.msra.mxu0 %v2358
    %2851 = vmatprep.subr.mxu0 0.0
    %2852 = vmatpush1.msra.mxu0 0.0
    %2853 = vmatprep.subr.mxu0 0.0
    %2854 = vmatpush1.msra.mxu0 0.0
    %2855 = vmatprep.subr.mxu0 0.0
    %2856 = vmatpush1.msra.mxu0 0.0
    %2857 = vmatprep.subr.mxu0 0.0
    %2858 = vmatpush1.msra.mxu0 0.0
    %2859 = vmatprep.subr.mxu0 0.0
    %2860 = vmatpush1.msra.mxu0 0.0
    %2861 = vmatprep.subr.mxu0 0.0
    %2862 = vmatpush1.msra.mxu0 0.0
    %2863 = vmatprep.subr.mxu0 0.0
    %2864 = vmatpush1.msra.mxu0 0.0
    %2865 = vmatprep.subr.mxu0 0.0
    %2866 = vmatpush1.msra.mxu0 0.0
    %2867 = vmatprep.subr.mxu0 0.0
    %2868 = vmatpush1.msra.mxu0 0.0
    %2869 = vmatprep.subr.mxu0 0.0
    %2870 = vmatpush1.msra.mxu0 0.0
    %2871 = vmatprep.subr.mxu0 0.0
    %2872 = vmatpush1.msra.mxu0 0.0
    %2873 = vmatprep.subr.mxu0 0.0
    %2874 = vmatpush1.msra.mxu0 0.0
    %2875 = vmatprep.subr.mxu0 0.0
    %2876 = vmatpush1.msra.mxu0 0.0
    %2877 = vmatprep.subr.mxu0 0.0
    %2878 = vmatpush1.msra.mxu0 0.0
    %2879 = vmatprep.subr.mxu0 0.0
    %2880 = vmatpush1.msra.mxu0 0.0
    %2881 = vmatprep.subr.mxu0 0.0
    %2882 = vmatpush1.msra.mxu0 0.0
    %2883 = vmatprep.subr.mxu0 0.0
    %2884 = vmatpush1.msra.mxu0 0.0
    %2885 = vmatprep.subr.mxu0 0.0
    %2886 = vmatpush1.msra.mxu0 0.0
    %2887 = vmatprep.subr.mxu0 0.0
    %2888 = vmatpush1.msra.mxu0 0.0
    %2889 = vmatprep.subr.mxu0 0.0
    %2890 = vmatpush1.msra.mxu0 0.0
    %2891 = vmatprep.subr.mxu0 0.0
    %2892 = vmatpush1.msra.mxu0 0.0
    %2893 = vmatprep.subr.mxu0 0.0
    %2894 = vmatpush1.msra.mxu0 0.0
    %2895 = vmatprep.subr.mxu0 0.0
    %2896 = vmatpush1.msra.mxu0 0.0
    %2897 = vmatprep.subr.mxu0 0.0
    %2898 = vmatpush1.msra.mxu0 0.0
    %2899 = vmatprep.subr.mxu0 0.0
    %2900 = vmatpush1.msra.mxu0 0.0
    %2901 = vmatprep.subr.mxu0 0.0
    %2902 = vmatpush1.msra.mxu0 0.0
    %2903 = vmatprep.subr.mxu0 0.0
    %2904 = vmatpush1.msra.mxu0 0.0
    %2905 = vmatprep.subr.mxu0 0.0
    %2906 = vmatpush1.msra.mxu0 0.0
    %2907 = vmatprep.subr.mxu0 0.0
    %2908 = vmatpush1.msra.mxu0 0.0
    %2909 = vmatprep.subr.mxu0 0.0
    %2910 = vmatpush1.msra.mxu0 0.0
    %2911 = vmatprep.subr.mxu0 0.0
    %2912 = vmatpush1.msra.mxu0 0.0
    %2913 = vmatprep.mubr.f32.mxu0 0.0
    %2914 = vmatmul.mubr.f32.gmra.mrb[0].mxu0 %v2844
    %v2915 = vpop.f32.mrb[0].mxu0
    %v2916 = vadd.f32 %v2835, %v2915
    %v2917 = vpop.f32.mrb[0].mxu0
    %2918 = vmatprep.mubr.f32.mxu0 0.0
    %2919 = vmatmul.mubr.f32.gmra.mrb[0].mxu0 %v2847
    %v2920 = vpop.f32.mrb[0].mxu0
    %v2921 = vadd.f32 %v2840, %v2920
    %v2922 = vpop.f32.mrb[0].mxu0
    %2923 = vdwg.mxu0
    %2924 = vrot.lane.b32.xlu0 %v2173, 112
    %v2925 = vpop.permute.xlu0 %2924
    %2926 = vrot.lane.b32.xlu0 %v2178, 112
    %v2927 = vpop.permute.xlu0 %2926
    %2928 = vrot.lane.b32.xlu0 %v2261, 112
    %v2929 = vpop.permute.xlu0 %2928
    %2930 = vrot.lane.b32.xlu0 %v2266, 112
    %v2931 = vpop.permute.xlu0 %2930
    %v2932 = vsel %vm653, %v2925, 0
    %v2934 = vsel %vm653, %v2927, 0
    %v2936 = vsel %vm653, %v2929, 0
    %v2938 = vsel %vm653, %v2931, 0
    %2940 = vmatprep.subr.mxu0 0.0
    %2941 = vmatpush1.xpose.msra.mxu0 %v2936
    %2942 = vmatprep.subr.mxu0 0.0
    %2943 = vmatpush1.xpose.msra.mxu0 %v2938
    %2944 = vmatprep.subr.mxu0 0.0
    %2945 = vmatpush1.xpose.msra.mxu0 0.0
    %2946 = vmatprep.subr.mxu0 0.0
    %2947 = vmatpush1.xpose.msra.mxu0 0.0
    %2948 = vmatprep.subr.mxu0 0.0
    %2949 = vmatpush1.xpose.msra.mxu0 0.0
    %2950 = vmatprep.subr.mxu0 0.0
    %2951 = vmatpush1.xpose.msra.mxu0 0.0
    %2952 = vmatprep.subr.mxu0 0.0
    %2953 = vmatpush1.xpose.msra.mxu0 0.0
    %2954 = vmatprep.subr.mxu0 0.0
    %2955 = vmatpush1.xpose.msra.mxu0 0.0
    %2956 = vmatprep.subr.mxu0 0.0
    %2957 = vmatpush1.xpose.msra.mxu0 0.0
    %2958 = vmatprep.subr.mxu0 0.0
    %2959 = vmatpush1.xpose.msra.mxu0 0.0
    %2960 = vmatprep.subr.mxu0 0.0
    %2961 = vmatpush1.xpose.msra.mxu0 0.0
    %2962 = vmatprep.subr.mxu0 0.0
    %2963 = vmatpush1.xpose.msra.mxu0 0.0
    %2964 = vmatprep.subr.mxu0 0.0
    %2965 = vmatpush1.xpose.msra.mxu0 0.0
    %2966 = vmatprep.subr.mxu0 0.0
    %2967 = vmatpush1.xpose.msra.mxu0 0.0
    %2968 = vmatprep.subr.mxu0 0.0
    %2969 = vmatpush1.xpose.msra.mxu0 0.0
    %2970 = vmatprep.subr.mxu0 0.0
    %2971 = vmatpush1.xpose.msra.mxu0 0.0
    %2972 = vmatprep.subr.mxu0 0.0
    %2973 = vmatpush1.xpose.msra.mxu0 0.0
    %2974 = vmatprep.subr.mxu0 0.0
    %2975 = vmatpush1.xpose.msra.mxu0 0.0
    %2976 = vmatprep.subr.mxu0 0.0
    %2977 = vmatpush1.xpose.msra.mxu0 0.0
    %2978 = vmatprep.subr.mxu0 0.0
    %2979 = vmatpush1.xpose.msra.mxu0 0.0
    %2980 = vmatprep.subr.mxu0 0.0
    %2981 = vmatpush1.xpose.msra.mxu0 0.0
    %2982 = vmatprep.subr.mxu0 0.0
    %2983 = vmatpush1.xpose.msra.mxu0 0.0
    %2984 = vmatprep.subr.mxu0 0.0
    %2985 = vmatpush1.xpose.msra.mxu0 0.0
    %2986 = vmatprep.subr.mxu0 0.0
    %2987 = vmatpush1.xpose.msra.mxu0 0.0
    %2988 = vmatprep.subr.mxu0 0.0
    %2989 = vmatpush1.xpose.msra.mxu0 0.0
    %2990 = vmatprep.subr.mxu0 0.0
    %2991 = vmatpush1.xpose.msra.mxu0 0.0
    %2992 = vmatprep.subr.mxu0 0.0
    %2993 = vmatpush1.xpose.msra.mxu0 0.0
    %2994 = vmatprep.subr.mxu0 0.0
    %2995 = vmatpush1.xpose.msra.mxu0 0.0
    %2996 = vmatprep.subr.mxu0 0.0
    %2997 = vmatpush1.xpose.msra.mxu0 0.0
    %2998 = vmatprep.subr.mxu0 0.0
    %2999 = vmatpush1.xpose.msra.mxu0 0.0
    %3000 = vmatprep.subr.mxu0 0.0
    %3001 = vmatpush1.xpose.msra.mxu0 0.0
    %3002 = vmatprep.subr.mxu0 0.0
    %3003 = vmatpush1.xpose.msra.mxu0 0.0
    %3004 = vmatprep.mubr.f32.mxu0 0.0
    %3005 = vmatmul.mubr.f32.gmra.mrb[0].mxu0 %v2932
    %v3006 = vpop.f32.mrb[0].mxu0
    %v3007 = vadd.f32 0.0, %v3006
    %v3008 = vpop.f32.mrb[0].mxu0
    %3009 = vmatprep.mubr.f32.mxu0 0.0
    %3010 = vmatmul.mubr.f32.gmra.mrb[0].mxu0 %v2934
    %v3011 = vpop.f32.mrb[0].mxu0
    %v3012 = vadd.f32 0.0, %v3011
    %v3013 = vpop.f32.mrb[0].mxu0
    %3014 = vdwg.mxu0
    %v3015 = vmul.f32 %v3007, 0.35355338
    %v3016 = vmul.f32 %v3012, 0.35355338
    %v3017 = vadd.f32 %v3015, %v338
    %v3018 = vadd.f32 %v3016, %v339
    %v3019 = vsel %vm745, %v3017, -inf
    %3020 = vmax.xlane.f32.xlu0 %v3019
    %v3021 = vpop.xlane.xlu0 %3020
    %v3022 = vsel %vm745, %v3018, -inf
    %3023 = vmax.xlane.f32.xlu0 %v3022
    %v3024 = vpop.xlane.xlu0 %3023
    %v3025 = vsub.f32 %v3017, %v3021
    %v3026 = vsub.f32 %v3018, %v3024
    %v3027 = vmul.f32 %v3025, 1.442695
    %v3028 = vpow.pop %v3027
    %v3029 = vmul.f32 %v3026, 1.442695
    %v3030 = vpow.pop %v3029
    %v3031 = vsel %vm745, %v3028, 0.0
    %3032 = vadd.xlane.f32.xlu0 %v3031
    %v3033 = vpop.xlane.xlu0 %3032
    %v3034 = vsel %vm745, %v3030, 0.0
    %3035 = vadd.xlane.f32.xlu0 %v3034
    %v3036 = vpop.xlane.xlu0 %3035
    %v3037 = vrcp.pop %v3033
    %v3038 = vrcp.pop %v3036
    %v3039 = vmul.f32 %v3028, %v3037
    %v3040 = vmul.f32 %v3030, %v3038
    %3041 = vrot.lane.b32.xlu0 %v2349, 112
    %v3042 = vpop.permute.xlu0 %3041
    %3043 = vrot.lane.b32.xlu0 %v2354, 112
    %v3044 = vpop.permute.xlu0 %3043
    %v3048 = vsel %vm745, %v3039, 0
    %v3051 = vsel %vm745, %v3040, 0
    %3053 = vmatprep.subr.mxu0 0.0
    %3054 = vmatpush1.msra.mxu0 %v3042
    %3055 = vmatprep.subr.mxu0 0.0
    %3056 = vmatpush1.msra.mxu0 %v3044
    %3057 = vmatprep.subr.mxu0 0.0
    %3058 = vmatpush1.msra.mxu0 0.0
    %3059 = vmatprep.subr.mxu0 0.0
    %3060 = vmatpush1.msra.mxu0 0.0
    %3061 = vmatprep.subr.mxu0 0.0
    %3062 = vmatpush1.msra.mxu0 0.0
    %3063 = vmatprep.subr.mxu0 0.0
    %3064 = vmatpush1.msra.mxu0 0.0
    %3065 = vmatprep.subr.mxu0 0.0
    %3066 = vmatpush1.msra.mxu0 0.0
    %3067 = vmatprep.subr.mxu0 0.0
    %3068 = vmatpush1.msra.mxu0 0.0
    %3069 = vmatprep.subr.mxu0 0.0
    %3070 = vmatpush1.msra.mxu0 0.0
    %3071 = vmatprep.subr.mxu0 0.0
    %3072 = vmatpush1.msra.mxu0 0.0
    %3073 = vmatprep.subr.mxu0 0.0
    %3074 = vmatpush1.msra.mxu0 0.0
    %3075 = vmatprep.subr.mxu0 0.0
    %3076 = vmatpush1.msra.mxu0 0.0
    %3077 = vmatprep.subr.mxu0 0.0
    %3078 = vmatpush1.msra.mxu0 0.0
    %3079 = vmatprep.subr.mxu0 0.0
    %3080 = vmatpush1.msra.mxu0 0.0
    %3081 = vmatprep.subr.mxu0 0.0
    %3082 = vmatpush1.msra.mxu0 0.0
    %3083 = vmatprep.subr.mxu0 0.0
    %3084 = vmatpush1.msra.mxu0 0.0
    %3085 = vmatprep.subr.mxu0 0.0
    %3086 = vmatpush1.msra.mxu0 0.0
    %3087 = vmatprep.subr.mxu0 0.0
    %3088 = vmatpush1.msra.mxu0 0.0
    %3089 = vmatprep.subr.mxu0 0.0
    %3090 = vmatpush1.msra.mxu0 0.0
    %3091 = vmatprep.subr.mxu0 0.0
    %3092 = vmatpush1.msra.mxu0 0.0
    %3093 = vmatprep.subr.mxu0 0.0
    %3094 = vmatpush1.msra.mxu0 0.0
    %3095 = vmatprep.subr.mxu0 0.0
    %3096 = vmatpush1.msra.mxu0 0.0
    %3097 = vmatprep.subr.mxu0 0.0
    %3098 = vmatpush1.msra.mxu0 0.0
    %3099 = vmatprep.subr.mxu0 0.0
    %3100 = vmatpush1.msra.mxu0 0.0
    %3101 = vmatprep.subr.mxu0 0.0
    %3102 = vmatpush1.msra.mxu0 0.0
    %3103 = vmatprep.subr.mxu0 0.0
    %3104 = vmatpush1.msra.mxu0 0.0
    %3105 = vmatprep.subr.mxu0 0.0
    %3106 = vmatpush1.msra.mxu0 0.0
    %3107 = vmatprep.subr.mxu0 0.0
    %3108 = vmatpush1.msra.mxu0 0.0
    %3109 = vmatprep.subr.mxu0 0.0
    %3110 = vmatpush1.msra.mxu0 0.0
    %3111 = vmatprep.subr.mxu0 0.0
    %3112 = vmatpush1.msra.mxu0 0.0
    %3113 = vmatprep.subr.mxu0 0.0
    %3114 = vmatpush1.msra.mxu0 0.0
    %3115 = vmatprep.subr.mxu0 0.0
    %3116 = vmatpush1.msra.mxu0 0.0
    %3117 = vmatprep.mubr.f32.mxu0 0.0
    %3118 = vmatmul.mubr.f32.gmra.mrb[0].mxu0 %v3048
    %v3119 = vpop.f32.mrb[0].mxu0
    %v3120 = vadd.f32 0.0, %v3119
    %v3121 = vpop.f32.mrb[0].mxu0
    %3122 = vmatprep.mubr.f32.mxu0 0.0
    %3123 = vmatmul.mubr.f32.gmra.mrb[0].mxu0 %v3051
    %v3124 = vpop.f32.mrb[0].mxu0
    %v3125 = vadd.f32 0.0, %v3124
    %v3126 = vpop.f32.mrb[0].mxu0
    %3127 = vdwg.mxu0
    %v3129 = vsel %vm653, %v3120, 0
    %v3132 = vsel %vm653, %v3125, 0
    %3134 = vmatprep.subr.mxu0 0.0
    %3135 = vmatpush1.msra.mxu0 %v2360
    %3136 = vmatprep.subr.mxu0 0.0
    %3137 = vmatpush1.msra.mxu0 0.0
    %3138 = vmatprep.subr.mxu0 0.0
    %3139 = vmatpush1.msra.mxu0 0.0
    %3140 = vmatprep.subr.mxu0 0.0
    %3141 = vmatpush1.msra.mxu0 0.0
    %3142 = vmatprep.subr.mxu0 0.0
    %3143 = vmatpush1.msra.mxu0 0.0
    %3144 = vmatprep.subr.mxu0 0.0
    %3145 = vmatpush1.msra.mxu0 0.0
    %3146 = vmatprep.subr.mxu0 0.0
    %3147 = vmatpush1.msra.mxu0 0.0
    %3148 = vmatprep.subr.mxu0 0.0
    %3149 = vmatpush1.msra.mxu0 0.0
    %3150 = vmatprep.subr.mxu0 0.0
    %3151 = vmatpush1.msra.mxu0 0.0
    %3152 = vmatprep.subr.mxu0 0.0
    %3153 = vmatpush1.msra.mxu0 0.0
    %3154 = vmatprep.subr.mxu0 0.0
    %3155 = vmatpush1.msra.mxu0 0.0
    %3156 = vmatprep.subr.mxu0 0.0
    %3157 = vmatpush1.msra.mxu0 0.0
    %3158 = vmatprep.subr.mxu0 0.0
    %3159 = vmatpush1.msra.mxu0 0.0
    %3160 = vmatprep.subr.mxu0 0.0
    %3161 = vmatpush1.msra.mxu0 0.0
    %3162 = vmatprep.subr.mxu0 0.0
    %3163 = vmatpush1.msra.mxu0 0.0
    %3164 = vmatprep.subr.mxu0 0.0
    %3165 = vmatpush1.msra.mxu0 0.0
    %3166 = vmatprep.subr.mxu0 0.0
    %3167 = vmatpush1.msra.mxu0 0.0
    %3168 = vmatprep.subr.mxu0 0.0
    %3169 = vmatpush1.msra.mxu0 0.0
    %3170 = vmatprep.subr.mxu0 0.0
    %3171 = vmatpush1.msra.mxu0 0.0
    %3172 = vmatprep.subr.mxu0 0.0
    %3173 = vmatpush1.msra.mxu0 0.0
    %3174 = vmatprep.subr.mxu0 0.0
    %3175 = vmatpush1.msra.mxu0 0.0
    %3176 = vmatprep.subr.mxu0 0.0
    %3177 = vmatpush1.msra.mxu0 0.0
    %3178 = vmatprep.subr.mxu0 0.0
    %3179 = vmatpush1.msra.mxu0 0.0
    %3180 = vmatprep.subr.mxu0 0.0
    %3181 = vmatpush1.msra.mxu0 0.0
    %3182 = vmatprep.subr.mxu0 0.0
    %3183 = vmatpush1.msra.mxu0 0.0
    %3184 = vmatprep.subr.mxu0 0.0
    %3185 = vmatpush1.msra.mxu0 0.0
    %3186 = vmatprep.subr.mxu0 0.0
    %3187 = vmatpush1.msra.mxu0 0.0
    %3188 = vmatprep.subr.mxu0 0.0
    %3189 = vmatpush1.msra.mxu0 0.0
    %3190 = vmatprep.subr.mxu0 0.0
    %3191 = vmatpush1.msra.mxu0 0.0
    %3192 = vmatprep.subr.mxu0 0.0
    %3193 = vmatpush1.msra.mxu0 0.0
    %3194 = vmatprep.subr.mxu0 0.0
    %3195 = vmatpush1.msra.mxu0 0.0
    %3196 = vmatprep.subr.mxu0 0.0
    %3197 = vmatpush1.msra.mxu0 0.0
    %3198 = vmatprep.mubr.f32.mxu0 0.0
    %3199 = vmatmul.mubr.f32.gmra.mrb[0].mxu0 %v3129
    %v3200 = vpop.f32.mrb[0].mxu0
    %v3201 = vadd.f32 0.0, %v3200
    %v3202 = vpop.f32.mrb[0].mxu0
    %3203 = vmatprep.mubr.f32.mxu0 0.0
    %3204 = vmatmul.mubr.f32.gmra.mrb[0].mxu0 %v3132
    %v3205 = vpop.f32.mrb[0].mxu0
    %v3206 = vadd.f32 0.0, %v3205
    %v3207 = vpop.f32.mrb[0].mxu0
    %3208 = vdwg.mxu0
    %v3209 = vadd.f32 %v2916, %v3201
    %v3210 = vadd.f32 %v2921, %v3206
    %3211 = vrot.lane.b32.xlu0 %v2173, 104
    %v3212 = vpop.permute.xlu0 %3211
    %3213 = vrot.lane.b32.xlu0 %v2178, 104
    %v3214 = vpop.permute.xlu0 %3213
    %3215 = vrot.lane.b32.xlu0 %v2261, 104
    %v3216 = vpop.permute.xlu0 %3215
    %3217 = vrot.lane.b32.xlu0 %v2266, 104
    %v3218 = vpop.permute.xlu0 %3217
    %v3219 = vsel %vm653, %v3212, 0
    %v3221 = vsel %vm653, %v3214, 0
    %v3223 = vsel %vm653, %v3216, 0
    %v3225 = vsel %vm653, %v3218, 0
    %3227 = vmatprep.subr.mxu0 0.0
    %3228 = vmatpush1.xpose.msra.mxu0 %v3223
    %3229 = vmatprep.subr.mxu0 0.0
    %3230 = vmatpush1.xpose.msra.mxu0 %v3225
    %3231 = vmatprep.subr.mxu0 0.0
    %3232 = vmatpush1.xpose.msra.mxu0 0.0
    %3233 = vmatprep.subr.mxu0 0.0
    %3234 = vmatpush1.xpose.msra.mxu0 0.0
    %3235 = vmatprep.subr.mxu0 0.0
    %3236 = vmatpush1.xpose.msra.mxu0 0.0
    %3237 = vmatprep.subr.mxu0 0.0
    %3238 = vmatpush1.xpose.msra.mxu0 0.0
    %3239 = vmatprep.subr.mxu0 0.0
    %3240 = vmatpush1.xpose.msra.mxu0 0.0
    %3241 = vmatprep.subr.mxu0 0.0
    %3242 = vmatpush1.xpose.msra.mxu0 0.0
    %3243 = vmatprep.subr.mxu0 0.0
    %3244 = vmatpush1.xpose.msra.mxu0 0.0
    %3245 = vmatprep.subr.mxu0 0.0
    %3246 = vmatpush1.xpose.msra.mxu0 0.0
    %3247 = vmatprep.subr.mxu0 0.0
    %3248 = vmatpush1.xpose.msra.mxu0 0.0
    %3249 = vmatprep.subr.mxu0 0.0
    %3250 = vmatpush1.xpose.msra.mxu0 0.0
    %3251 = vmatprep.subr.mxu0 0.0
    %3252 = vmatpush1.xpose.msra.mxu0 0.0
    %3253 = vmatprep.subr.mxu0 0.0
    %3254 = vmatpush1.xpose.msra.mxu0 0.0
    %3255 = vmatprep.subr.mxu0 0.0
    %3256 = vmatpush1.xpose.msra.mxu0 0.0
    %3257 = vmatprep.subr.mxu0 0.0
    %3258 = vmatpush1.xpose.msra.mxu0 0.0
    %3259 = vmatprep.subr.mxu0 0.0
    %3260 = vmatpush1.xpose.msra.mxu0 0.0
    %3261 = vmatprep.subr.mxu0 0.0
    %3262 = vmatpush1.xpose.msra.mxu0 0.0
    %3263 = vmatprep.subr.mxu0 0.0
    %3264 = vmatpush1.xpose.msra.mxu0 0.0
    %3265 = vmatprep.subr.mxu0 0.0
    %3266 = vmatpush1.xpose.msra.mxu0 0.0
    %3267 = vmatprep.subr.mxu0 0.0
    %3268 = vmatpush1.xpose.msra.mxu0 0.0
    %3269 = vmatprep.subr.mxu0 0.0
    %3270 = vmatpush1.xpose.msra.mxu0 0.0
    %3271 = vmatprep.subr.mxu0 0.0
    %3272 = vmatpush1.xpose.msra.mxu0 0.0
    %3273 = vmatprep.subr.mxu0 0.0
    %3274 = vmatpush1.xpose.msra.mxu0 0.0
    %3275 = vmatprep.subr.mxu0 0.0
    %3276 = vmatpush1.xpose.msra.mxu0 0.0
    %3277 = vmatprep.subr.mxu0 0.0
    %3278 = vmatpush1.xpose.msra.mxu0 0.0
    %3279 = vmatprep.subr.mxu0 0.0
    %3280 = vmatpush1.xpose.msra.mxu0 0.0
    %3281 = vmatprep.subr.mxu0 0.0
    %3282 = vmatpush1.xpose.msra.mxu0 0.0
    %3283 = vmatprep.subr.mxu0 0.0
    %3284 = vmatpush1.xpose.msra.mxu0 0.0
    %3285 = vmatprep.subr.mxu0 0.0
    %3286 = vmatpush1.xpose.msra.mxu0 0.0
    %3287 = vmatprep.subr.mxu0 0.0
    %3288 = vmatpush1.xpose.msra.mxu0 0.0
    %3289 = vmatprep.subr.mxu0 0.0
    %3290 = vmatpush1.xpose.msra.mxu0 0.0
    %3291 = vmatprep.mubr.f32.mxu0 0.0
    %3292 = vmatmul.mubr.f32.gmra.mrb[0].mxu0 %v3219
    %v3293 = vpop.f32.mrb[0].mxu0
    %v3294 = vadd.f32 0.0, %v3293
    %v3295 = vpop.f32.mrb[0].mxu0
    %3296 = vmatprep.mubr.f32.mxu0 0.0
    %3297 = vmatmul.mubr.f32.gmra.mrb[0].mxu0 %v3221
    %v3298 = vpop.f32.mrb[0].mxu0
    %v3299 = vadd.f32 0.0, %v3298
    %v3300 = vpop.f32.mrb[0].mxu0
    %3301 = vdwg.mxu0
    %v3302 = vmul.f32 %v3294, 0.35355338
    %v3303 = vmul.f32 %v3299, 0.35355338
    %v3304 = vadd.f32 %v3302, %v338
    %v3305 = vadd.f32 %v3303, %v339
    %v3306 = vsel %vm745, %v3304, -inf
    %3307 = vmax.xlane.f32.xlu0 %v3306
    %v3308 = vpop.xlane.xlu0 %3307
    %v3309 = vsel %vm745, %v3305, -inf
    %3310 = vmax.xlane.f32.xlu0 %v3309
    %v3311 = vpop.xlane.xlu0 %3310
    %v3312 = vsub.f32 %v3304, %v3308
    %v3313 = vsub.f32 %v3305, %v3311
    %v3314 = vmul.f32 %v3312, 1.442695
    %v3315 = vpow.pop %v3314
    %v3316 = vmul.f32 %v3313, 1.442695
    %v3317 = vpow.pop %v3316
    %v3318 = vsel %vm745, %v3315, 0.0
    %3319 = vadd.xlane.f32.xlu0 %v3318
    %v3320 = vpop.xlane.xlu0 %3319
    %v3321 = vsel %vm745, %v3317, 0.0
    %3322 = vadd.xlane.f32.xlu0 %v3321
    %v3323 = vpop.xlane.xlu0 %3322
    %v3324 = vrcp.pop %v3320
    %v3325 = vrcp.pop %v3323
    %v3326 = vmul.f32 %v3315, %v3324
    %v3327 = vmul.f32 %v3317, %v3325
    %3328 = vrot.lane.b32.xlu0 %v2349, 104
    %v3329 = vpop.permute.xlu0 %3328
    %3330 = vrot.lane.b32.xlu0 %v2354, 104
    %v3331 = vpop.permute.xlu0 %3330
    %v3335 = vsel %vm745, %v3326, 0
    %v3338 = vsel %vm745, %v3327, 0
    %3340 = vmatprep.subr.mxu0 0.0
    %3341 = vmatpush1.msra.mxu0 %v3329
    %3342 = vmatprep.subr.mxu0 0.0
    %3343 = vmatpush1.msra.mxu0 %v3331
    %3344 = vmatprep.subr.mxu0 0.0
    %3345 = vmatpush1.msra.mxu0 0.0
    %3346 = vmatprep.subr.mxu0 0.0
    %3347 = vmatpush1.msra.mxu0 0.0
    %3348 = vmatprep.subr.mxu0 0.0
    %3349 = vmatpush1.msra.mxu0 0.0
    %3350 = vmatprep.subr.mxu0 0.0
    %3351 = vmatpush1.msra.mxu0 0.0
    %3352 = vmatprep.subr.mxu0 0.0
    %3353 = vmatpush1.msra.mxu0 0.0
    %3354 = vmatprep.subr.mxu0 0.0
    %3355 = vmatpush1.msra.mxu0 0.0
    %3356 = vmatprep.subr.mxu0 0.0
    %3357 = vmatpush1.msra.mxu0 0.0
    %3358 = vmatprep.subr.mxu0 0.0
    %3359 = vmatpush1.msra.mxu0 0.0
    %3360 = vmatprep.subr.mxu0 0.0
    %3361 = vmatpush1.msra.mxu0 0.0
    %3362 = vmatprep.subr.mxu0 0.0
    %3363 = vmatpush1.msra.mxu0 0.0
    %3364 = vmatprep.subr.mxu0 0.0
    %3365 = vmatpush1.msra.mxu0 0.0
    %3366 = vmatprep.subr.mxu0 0.0
    %3367 = vmatpush1.msra.mxu0 0.0
    %3368 = vmatprep.subr.mxu0 0.0
    %3369 = vmatpush1.msra.mxu0 0.0
    %3370 = vmatprep.subr.mxu0 0.0
    %3371 = vmatpush1.msra.mxu0 0.0
    %3372 = vmatprep.subr.mxu0 0.0
    %3373 = vmatpush1.msra.mxu0 0.0
    %3374 = vmatprep.subr.mxu0 0.0
    %3375 = vmatpush1.msra.mxu0 0.0
    %3376 = vmatprep.subr.mxu0 0.0
    %3377 = vmatpush1.msra.mxu0 0.0
    %3378 = vmatprep.subr.mxu0 0.0
    %3379 = vmatpush1.msra.mxu0 0.0
    %3380 = vmatprep.subr.mxu0 0.0
    %3381 = vmatpush1.msra.mxu0 0.0
    %3382 = vmatprep.subr.mxu0 0.0
    %3383 = vmatpush1.msra.mxu0 0.0
    %3384 = vmatprep.subr.mxu0 0.0
    %3385 = vmatpush1.msra.mxu0 0.0
    %3386 = vmatprep.subr.mxu0 0.0
    %3387 = vmatpush1.msra.mxu0 0.0
    %3388 = vmatprep.subr.mxu0 0.0
    %3389 = vmatpush1.msra.mxu0 0.0
    %3390 = vmatprep.subr.mxu0 0.0
    %3391 = vmatpush1.msra.mxu0 0.0
    %3392 = vmatprep.subr.mxu0 0.0
    %3393 = vmatpush1.msra.mxu0 0.0
    %3394 = vmatprep.subr.mxu0 0.0
    %3395 = vmatpush1.msra.mxu0 0.0
    %3396 = vmatprep.subr.mxu0 0.0
    %3397 = vmatpush1.msra.mxu0 0.0
    %3398 = vmatprep.subr.mxu0 0.0
    %3399 = vmatpush1.msra.mxu0 0.0
    %3400 = vmatprep.subr.mxu0 0.0
    %3401 = vmatpush1.msra.mxu0 0.0
    %3402 = vmatprep.subr.mxu0 0.0
    %3403 = vmatpush1.msra.mxu0 0.0
    %3404 = vmatprep.mubr.f32.mxu0 0.0
    %3405 = vmatmul.mubr.f32.gmra.mrb[0].mxu0 %v3335
    %v3406 = vpop.f32.mrb[0].mxu0
    %v3407 = vadd.f32 0.0, %v3406
    %v3408 = vpop.f32.mrb[0].mxu0
    %3409 = vmatprep.mubr.f32.mxu0 0.0
    %3410 = vmatmul.mubr.f32.gmra.mrb[0].mxu0 %v3338
    %v3411 = vpop.f32.mrb[0].mxu0
    %v3412 = vadd.f32 0.0, %v3411
    %v3413 = vpop.f32.mrb[0].mxu0
    %3414 = vdwg.mxu0
    %v3416 = vsel %vm653, %v3407, 0
    %v3419 = vsel %vm653, %v3412, 0
    %3421 = vmatprep.subr.mxu0 0.0
    %3422 = vmatpush1.msra.mxu0 %v2361
    %3423 = vmatprep.subr.mxu0 0.0
    %3424 = vmatpush1.msra.mxu0 0.0
    %3425 = vmatprep.subr.mxu0 0.0
    %3426 = vmatpush1.msra.mxu0 0.0
    %3427 = vmatprep.subr.mxu0 0.0
    %3428 = vmatpush1.msra.mxu0 0.0
    %3429 = vmatprep.subr.mxu0 0.0
    %3430 = vmatpush1.msra.mxu0 0.0
    %3431 = vmatprep.subr.mxu0 0.0
    %3432 = vmatpush1.msra.mxu0 0.0
    %3433 = vmatprep.subr.mxu0 0.0
    %3434 = vmatpush1.msra.mxu0 0.0
    %3435 = vmatprep.subr.mxu0 0.0
    %3436 = vmatpush1.msra.mxu0 0.0
    %3437 = vmatprep.subr.mxu0 0.0
    %3438 = vmatpush1.msra.mxu0 0.0
    %3439 = vmatprep.subr.mxu0 0.0
    %3440 = vmatpush1.msra.mxu0 0.0
    %3441 = vmatprep.subr.mxu0 0.0
    %3442 = vmatpush1.msra.mxu0 0.0
    %3443 = vmatprep.subr.mxu0 0.0
    %3444 = vmatpush1.msra.mxu0 0.0
    %3445 = vmatprep.subr.mxu0 0.0
    %3446 = vmatpush1.msra.mxu0 0.0
    %3447 = vmatprep.subr.mxu0 0.0
    %3448 = vmatpush1.msra.mxu0 0.0
    %3449 = vmatprep.subr.mxu0 0.0
    %3450 = vmatpush1.msra.mxu0 0.0
    %3451 = vmatprep.subr.mxu0 0.0
    %3452 = vmatpush1.msra.mxu0 0.0
    %3453 = vmatprep.subr.mxu0 0.0
    %3454 = vmatpush1.msra.mxu0 0.0
    %3455 = vmatprep.subr.mxu0 0.0
    %3456 = vmatpush1.msra.mxu0 0.0
    %3457 = vmatprep.subr.mxu0 0.0
    %3458 = vmatpush1.msra.mxu0 0.0
    %3459 = vmatprep.subr.mxu0 0.0
    %3460 = vmatpush1.msra.mxu0 0.0
    %3461 = vmatprep.subr.mxu0 0.0
    %3462 = vmatpush1.msra.mxu0 0.0
    %3463 = vmatprep.subr.mxu0 0.0
    %3464 = vmatpush1.msra.mxu0 0.0
    %3465 = vmatprep.subr.mxu0 0.0
    %3466 = vmatpush1.msra.mxu0 0.0
    %3467 = vmatprep.subr.mxu0 0.0
    %3468 = vmatpush1.msra.mxu0 0.0
    %3469 = vmatprep.subr.mxu0 0.0
    %3470 = vmatpush1.msra.mxu0 0.0
    %3471 = vmatprep.subr.mxu0 0.0
    %3472 = vmatpush1.msra.mxu0 0.0
    %3473 = vmatprep.subr.mxu0 0.0
    %3474 = vmatpush1.msra.mxu0 0.0
    %3475 = vmatprep.subr.mxu0 0.0
    %3476 = vmatpush1.msra.mxu0 0.0
    %3477 = vmatprep.subr.mxu0 0.0
    %3478 = vmatpush1.msra.mxu0 0.0
    %3479 = vmatprep.subr.mxu0 0.0
    %3480 = vmatpush1.msra.mxu0 0.0
    %3481 = vmatprep.subr.mxu0 0.0
    %3482 = vmatpush1.msra.mxu0 0.0
    %3483 = vmatprep.subr.mxu0 0.0
    %3484 = vmatpush1.msra.mxu0 0.0
    %3485 = vmatprep.mubr.f32.mxu0 0.0
    %3486 = vmatmul.mubr.f32.gmra.mrb[0].mxu0 %v3416
    %v3487 = vpop.f32.mrb[0].mxu0
    %v3488 = vadd.f32 0.0, %v3487
    %v3489 = vpop.f32.mrb[0].mxu0
    %3490 = vmatprep.mubr.f32.mxu0 0.0
    %3491 = vmatmul.mubr.f32.gmra.mrb[0].mxu0 %v3419
    %v3492 = vpop.f32.mrb[0].mxu0
    %v3493 = vadd.f32 0.0, %v3492
    %v3494 = vpop.f32.mrb[0].mxu0
    %3495 = vdwg.mxu0
    %v3496 = vadd.f32 %v3209, %v3488
    %v3497 = vadd.f32 %v3210, %v3493
    %v3498 = vadd.f32 %v2039, %v3496
    %v3499 = vadd.f32 %v2040, %v3497
    %s3500 = scalar_lea.vmem [#allocation13], 1
    %v3501 = vld [vmem:[%s3500] sm:$0x1]
    %v3503 = vlaneseq
    %v3504 = vshrl.u32 %v3503, 7
    %v3505 = vsub.s32 0, %v3504
    %v3506 = vrot.slane %v3501, %v3505
    %v3508 = vadd.f32 %v3498, %v3506
    %v3509 = vadd.f32 %v3499, %v3506
    %s3510 = scalar_lea.vmem [#allocation17], 1
    %v3511 = vld [vmem:[%s3510] sm:$0x1]
    %s3512 = scalar_lea.vmem [#allocation19], 1
    %v3513 = vld [vmem:[%s3512] sm:$0x1]
    %v3514 = vsel %vm256, %v3508, 0.0
    %3515 = vadd.xlane.f32.xlu0 %v3514
    %v3516 = vpop.xlane.xlu0 %3515
    %v3517 = vsel %vm256, %v3509, 0.0
    %3518 = vadd.xlane.f32.xlu0 %v3517
    %v3519 = vpop.xlane.xlu0 %3518
    %v3520 = vmul.f32 %v3516, %v348
    %v3521 = vmul.f32 %v3519, %v348
    %v3522 = vsub.f32 %v3508, %v3520
    %v3523 = vsub.f32 %v3509, %v3521
    %v3524 = vmul.f32 %v3522, %v3522
    %v3525 = vmul.f32 %v3523, %v3523
    %v3526 = vsel %vm256, %v3524, 0.0
    %3527 = vadd.xlane.f32.xlu0 %v3526
    %v3528 = vpop.xlane.xlu0 %3527
    %v3529 = vsel %vm256, %v3525, 0.0
    %3530 = vadd.xlane.f32.xlu0 %v3529
    %v3531 = vpop.xlane.xlu0 %3530
    %v3532 = vmul.f32 %v3528, %v348
    %v3533 = vmul.f32 %v3531, %v348
    %v3534 = vadd.f32 %v3532, 1e-06
    %v3535 = vadd.f32 %v3533, 1e-06
    %v3536 = vrsqrt.pop %v3534
    %v3537 = vrsqrt.pop %v3535
    %v3538 = vmul.f32 %v3522, %v3536
    %v3539 = vmul.f32 %v3523, %v3537
    %v3541 = vlaneseq
    %v3542 = vshrl.u32 %v3541, 7
    %v3543 = vsub.s32 0, %v3542
    %v3544 = vrot.slane %v3511, %v3543
    %v3546 = vmul.f32 %v3538, %v3544
    %v3547 = vmul.f32 %v3539, %v3544
    %v3549 = vlaneseq
    %v3550 = vshrl.u32 %v3549, 7
    %v3551 = vsub.s32 0, %v3550
    %v3552 = vrot.slane %v3513, %v3551
    %v3554 = vadd.f32 %v3546, %v3552
    %v3555 = vadd.f32 %v3547, %v3552
    %s3556 = scalar_lea.vmem [#allocation20], 32
    %v3557 = vld [vmem:[%s3556] sm:$0xff]
    %v3558 = vld [vmem:[%s3556 + $0x8] sm:$0xff]
    %v3559 = vld [vmem:[%s3556 + $0x10] sm:$0xff]
    %v3560 = vld [vmem:[%s3556 + $0x18] sm:$0xff]
    %s3561 = scalar_lea.vmem [#allocation22], 1
    %v3562 = vld [vmem:[%s3561] sm:$0x1]
    %v3564 = vlaneseq
    %v3565 = vshrl.u32 %v3564, 7
    %v3566 = vsub.s32 0, %v3565
    %v3567 = vrot.slane %v3562, %v3566
    %v3570 = vsel %vm256, %v3554, 0
    %v3573 = vsel %vm256, %v3555, 0
    %3575 = vmatprep.subr.mxu0 0.0
    %3576 = vmatpush1.msra.mxu0 %v3557
    %3577 = vmatprep.subr.mxu0 0.0
    %3578 = vmatpush1.msra.mxu0 %v3558
    %3579 = vmatprep.subr.mxu0 0.0
    %3580 = vmatpush1.msra.mxu0 %v3559
    %3581 = vmatprep.subr.mxu0 0.0
    %3582 = vmatpush1.msra.mxu0 %v3560
    %3583 = vmatprep.subr.mxu0 0.0
    %3584 = vmatpush1.msra.mxu0 0.0
    %3585 = vmatprep.subr.mxu0 0.0
    %3586 = vmatpush1.msra.mxu0 0.0
    %3587 = vmatprep.subr.mxu0 0.0
    %3588 = vmatpush1.msra.mxu0 0.0
    %3589 = vmatprep.subr.mxu0 0.0
    %3590 = vmatpush1.msra.mxu0 0.0
    %3591 = vmatprep.subr.mxu0 0.0
    %3592 = vmatpush1.msra.mxu0 0.0
    %3593 = vmatprep.subr.mxu0 0.0
    %3594 = vmatpush1.msra.mxu0 0.0
    %3595 = vmatprep.subr.mxu0 0.0
    %3596 = vmatpush1.msra.mxu0 0.0
    %3597 = vmatprep.subr.mxu0 0.0
    %3598 = vmatpush1.msra.mxu0 0.0
    %3599 = vmatprep.subr.mxu0 0.0
    %3600 = vmatpush1.msra.mxu0 0.0
    %3601 = vmatprep.subr.mxu0 0.0
    %3602 = vmatpush1.msra.mxu0 0.0
    %3603 = vmatprep.subr.mxu0 0.0
    %3604 = vmatpush1.msra.mxu0 0.0
    %3605 = vmatprep.subr.mxu0 0.0
    %3606 = vmatpush1.msra.mxu0 0.0
    %3607 = vmatprep.subr.mxu0 0.0
    %3608 = vmatpush1.msra.mxu0 0.0
    %3609 = vmatprep.subr.mxu0 0.0
    %3610 = vmatpush1.msra.mxu0 0.0
    %3611 = vmatprep.subr.mxu0 0.0
    %3612 = vmatpush1.msra.mxu0 0.0
    %3613 = vmatprep.subr.mxu0 0.0
    %3614 = vmatpush1.msra.mxu0 0.0
    %3615 = vmatprep.subr.mxu0 0.0
    %3616 = vmatpush1.msra.mxu0 0.0
    %3617 = vmatprep.subr.mxu0 0.0
    %3618 = vmatpush1.msra.mxu0 0.0
    %3619 = vmatprep.subr.mxu0 0.0
    %3620 = vmatpush1.msra.mxu0 0.0
    %3621 = vmatprep.subr.mxu0 0.0
    %3622 = vmatpush1.msra.mxu0 0.0
    %3623 = vmatprep.subr.mxu0 0.0
    %3624 = vmatpush1.msra.mxu0 0.0
    %3625 = vmatprep.subr.mxu0 0.0
    %3626 = vmatpush1.msra.mxu0 0.0
    %3627 = vmatprep.subr.mxu0 0.0
    %3628 = vmatpush1.msra.mxu0 0.0
    %3629 = vmatprep.subr.mxu0 0.0
    %3630 = vmatpush1.msra.mxu0 0.0
    %3631 = vmatprep.subr.mxu0 0.0
    %3632 = vmatpush1.msra.mxu0 0.0
    %3633 = vmatprep.subr.mxu0 0.0
    %3634 = vmatpush1.msra.mxu0 0.0
    %3635 = vmatprep.subr.mxu0 0.0
    %3636 = vmatpush1.msra.mxu0 0.0
    %3637 = vmatprep.subr.mxu0 0.0
    %3638 = vmatpush1.msra.mxu0 0.0
    %3639 = vmatprep.mubr.f32.mxu0 0.0
    %3640 = vmatmul.mubr.f32.gmra.mrb[0].mxu0 %v3570
    %v3641 = vpop.f32.mrb[0].mxu0
    %v3642 = vadd.f32 %v3567, %v3641
    %v3643 = vpop.f32.mrb[0].mxu0
    %3644 = vmatprep.mubr.f32.mxu0 0.0
    %3645 = vmatmul.mubr.f32.gmra.mrb[0].mxu0 %v3573
    %v3646 = vpop.f32.mrb[0].mxu0
    %v3647 = vadd.f32 %v3567, %v3646
    %v3648 = vpop.f32.mrb[0].mxu0
    %3649 = vdwg.mxu0
    %v3650 = vmax.f32 %v3642, 0.0
    %v3651 = vmax.f32 %v3647, 0.0
    %s3652 = scalar_lea.vmem %s18, 64
    %v3653 = vld [vmem:[%s3652] sm:$0xff]
    %v3654 = vld [vmem:[%s3652 + $0x8] sm:$0xff]
    %v3655 = vld [vmem:[%s3652 + $0x10] sm:$0xff]
    %v3656 = vld [vmem:[%s3652 + $0x18] sm:$0xff]
    %v3657 = vld [vmem:[%s3652 + $0x20] sm:$0xff]
    %v3658 = vld [vmem:[%s3652 + $0x28] sm:$0xff]
    %v3659 = vld [vmem:[%s3652 + $0x30] sm:$0xff]
    %v3660 = vld [vmem:[%s3652 + $0x38] sm:$0xff]
    %v3662 = vsel %vm1948, %v3650, 0
    %v3665 = vsel %vm1948, %v3651, 0
    %3667 = vmatprep.subr.mxu0 0.0
    %3668 = vmatpush1.msra.mxu0 %v3653
    %3669 = vmatprep.subr.mxu0 0.0
    %3670 = vmatpush1.msra.mxu0 %v3654
    %3671 = vmatprep.subr.mxu0 0.0
    %3672 = vmatpush1.msra.mxu0 %v3655
    %3673 = vmatprep.subr.mxu0 0.0
    %3674 = vmatpush1.msra.mxu0 %v3656
    %3675 = vmatprep.subr.mxu0 0.0
    %3676 = vmatpush1.msra.mxu0 %v3657
    %3677 = vmatprep.subr.mxu0 0.0
    %3678 = vmatpush1.msra.mxu0 %v3658
    %3679 = vmatprep.subr.mxu0 0.0
    %3680 = vmatpush1.msra.mxu0 %v3659
    %3681 = vmatprep.subr.mxu0 0.0
    %3682 = vmatpush1.msra.mxu0 %v3660
    %3683 = vmatprep.subr.mxu0 0.0
    %3684 = vmatpush1.msra.mxu0 0.0
    %3685 = vmatprep.subr.mxu0 0.0
    %3686 = vmatpush1.msra.mxu0 0.0
    %3687 = vmatprep.subr.mxu0 0.0
    %3688 = vmatpush1.msra.mxu0 0.0
    %3689 = vmatprep.subr.mxu0 0.0
    %3690 = vmatpush1.msra.mxu0 0.0
    %3691 = vmatprep.subr.mxu0 0.0
    %3692 = vmatpush1.msra.mxu0 0.0
    %3693 = vmatprep.subr.mxu0 0.0
    %3694 = vmatpush1.msra.mxu0 0.0
    %3695 = vmatprep.subr.mxu0 0.0
    %3696 = vmatpush1.msra.mxu0 0.0
    %3697 = vmatprep.subr.mxu0 0.0
    %3698 = vmatpush1.msra.mxu0 0.0
    %3699 = vmatprep.subr.mxu0 0.0
    %3700 = vmatpush1.msra.mxu0 0.0
    %3701 = vmatprep.subr.mxu0 0.0
    %3702 = vmatpush1.msra.mxu0 0.0
    %3703 = vmatprep.subr.mxu0 0.0
    %3704 = vmatpush1.msra.mxu0 0.0
    %3705 = vmatprep.subr.mxu0 0.0
    %3706 = vmatpush1.msra.mxu0 0.0
    %3707 = vmatprep.subr.mxu0 0.0
    %3708 = vmatpush1.msra.mxu0 0.0
    %3709 = vmatprep.subr.mxu0 0.0
    %3710 = vmatpush1.msra.mxu0 0.0
    %3711 = vmatprep.subr.mxu0 0.0
    %3712 = vmatpush1.msra.mxu0 0.0
    %3713 = vmatprep.subr.mxu0 0.0
    %3714 = vmatpush1.msra.mxu0 0.0
    %3715 = vmatprep.subr.mxu0 0.0
    %3716 = vmatpush1.msra.mxu0 0.0
    %3717 = vmatprep.subr.mxu0 0.0
    %3718 = vmatpush1.msra.mxu0 0.0
    %3719 = vmatprep.subr.mxu0 0.0
    %3720 = vmatpush1.msra.mxu0 0.0
    %3721 = vmatprep.subr.mxu0 0.0
    %3722 = vmatpush1.msra.mxu0 0.0
    %3723 = vmatprep.subr.mxu0 0.0
    %3724 = vmatpush1.msra.mxu0 0.0
    %3725 = vmatprep.subr.mxu0 0.0
    %3726 = vmatpush1.msra.mxu0 0.0
    %3727 = vmatprep.subr.mxu0 0.0
    %3728 = vmatpush1.msra.mxu0 0.0
    %3729 = vmatprep.subr.mxu0 0.0
    %3730 = vmatpush1.msra.mxu0 0.0
    %3731 = vmatprep.mubr.f32.mxu0 0.0
    %3732 = vmatmul.mubr.f32.gmra.mrb[0].mxu0 %v3662
    %v3733 = vpop.f32.mrb[0].mxu0
    %v3734 = vadd.f32 0.0, %v3733
    %v3735 = vpop.f32.mrb[0].mxu0
    %3736 = vmatprep.mubr.f32.mxu0 0.0
    %3737 = vmatmul.mubr.f32.gmra.mrb[0].mxu0 %v3665
    %v3738 = vpop.f32.mrb[0].mxu0
    %v3739 = vadd.f32 0.0, %v3738
    %v3740 = vpop.f32.mrb[0].mxu0
    %3741 = vdwg.mxu0
    %v3742 = vadd.f32 %v3508, %v3734
    %v3743 = vadd.f32 %v3509, %v3739
    %s3744 = scalar_lea.vmem %s19, 1
    %v3745 = vld [vmem:[%s3744] sm:$0x1]
    %v3747 = vlaneseq
    %v3748 = vshrl.u32 %v3747, 7
    %v3749 = vsub.s32 0, %v3748
    %v3750 = vrot.slane %v3745, %v3749
    %v3752 = vadd.f32 %v3742, %v3750
    %v3753 = vadd.f32 %v3743, %v3750
    %v3754 = vld [vmem:[%s20] sm:$0x1]
    %v3755 = vld [vmem:[%s21] sm:$0x1]
    %v3756 = vsel %vm256, %v3752, 0.0
    %3757 = vadd.xlane.f32.xlu0 %v3756
    %v3758 = vpop.xlane.xlu0 %3757
    %v3759 = vsel %vm256, %v3753, 0.0
    %3760 = vadd.xlane.f32.xlu0 %v3759
    %v3761 = vpop.xlane.xlu0 %3760
    %v3762 = vmul.f32 %v3758, %v348
    %v3763 = vmul.f32 %v3761, %v348
    %v3764 = vsub.f32 %v3752, %v3762
    %v3765 = vsub.f32 %v3753, %v3763
    %v3766 = vmul.f32 %v3764, %v3764
    %v3767 = vmul.f32 %v3765, %v3765
    %v3768 = vsel %vm256, %v3766, 0.0
    %3769 = vadd.xlane.f32.xlu0 %v3768
    %v3770 = vpop.xlane.xlu0 %3769
    %v3771 = vsel %vm256, %v3767, 0.0
    %3772 = vadd.xlane.f32.xlu0 %v3771
    %v3773 = vpop.xlane.xlu0 %3772
    %v3774 = vmul.f32 %v3770, %v348
    %v3775 = vmul.f32 %v3773, %v348
    %v3776 = vadd.f32 %v3774, 1e-06
    %v3777 = vadd.f32 %v3775, 1e-06
    %v3778 = vrsqrt.pop %v3776
    %v3779 = vrsqrt.pop %v3777
    %v3780 = vmul.f32 %v3764, %v3778
    %v3781 = vmul.f32 %v3765, %v3779
    %v3783 = vlaneseq
    %v3784 = vshrl.u32 %v3783, 7
    %v3785 = vsub.s32 0, %v3784
    %v3786 = vrot.slane %v3754, %v3785
    %v3788 = vmul.f32 %v3780, %v3786
    %v3789 = vmul.f32 %v3781, %v3786
    %v3791 = vlaneseq
    %v3792 = vshrl.u32 %v3791, 7
    %v3793 = vsub.s32 0, %v3792
    %v3794 = vrot.slane %v3755, %v3793
    %v3796 = vadd.f32 %v3788, %v3794
    %v3797 = vadd.f32 %v3789, %v3794
    %3798 = vst.msk [vmem:[#allocation23] sm:$0xff] %vm256, %v3796
    %3799 = vst.msk [vmem:[#allocation23 + $0x8] sm:$0xff] %vm256, %v3797
    // Predicated region
    $region142: #{tpu_custom_call.1} parent=1 // pred_check
      _
    $region143: #{tpu_custom_call.1} parent=1 // pred_check_branch
      %3801 = sbr.rel (0) target = $region145
    $region144: #{tpu_custom_call.1} parent=1 // pred_region
      %s3803 = ssub.s32 256, 256
      %3804 = vsyncadd [#allocation4], %s3803
      %s3805 = sshll.u32 [#allocation23], 4
      %s3806 = int_to_ptr.vmem [resolvable:$true] %s3805
      %3811 = dma.vmem_to_hbm [thread:$0]  %s3806, 256, %s22, [#allocation4], 128, 128, 8
    $region145: #{tpu_custom_call.1} parent=1 // pred_fallthru
      _
    // Predicated region
    $region146: #{tpu_custom_call.1} parent=1 // pred_check
      _
    $region147: #{tpu_custom_call.1} parent=1 // pred_check_branch
      %3813 = sbr.rel (0) target = $region149
    $region148: #{tpu_custom_call.1} parent=1 // pred_region
      %3814 = dma.done [#allocation4], 256
    $region149: #{tpu_custom_call.1} parent=1 // pred_fallthru
      _
    %3815 = vsyncpa [#allocation3], 1
    %3816 = vsyncpa [#allocation6], 1
    %3817 = vsyncpa [#allocation9], 1
    %3818 = vsyncpa [#allocation12], 1
    %3819 = vsyncpa [#allocation15], 1
    %3820 = vsyncpa [#allocation18], 1
    %3821 = vsyncpa [#allocation21], 1
    %3822 = vsyncpa [#allocation4], 1

</llo_original>
